<compile_context>
chip_gen: v7x
topology: tpu7x:2x2x1
jax: 0.10.0
libtpu: 0.0.40
codegen_flags: <defaults>
</compile_context>

<pallas_src>
import functools

import jax
import jax.numpy as jnp
from jax.experimental import pallas as pl
from jax.experimental.pallas import tpu as pltpu


def mlp_kernel(xt_ref,
               w1_ref, b1_ref,
               w2_ref, b2_ref,
               w3_ref, b3_ref,
               w4_ref, b4_ref,
               w5_ref, b5_ref,
               o_ref):
    """Fused 5-layer MLP forward for one batch tile (feature-major layout).

    xt_ref: (D, block_b) bf16          -- batch on lanes
    wN_ref: (out_N, in_N) bf16         -- PyTorch (out, in) layout, so y = W @ h
    bN_ref: (out_N, 1) f32
    w5_ref: (64, 1) bf16 column, b5_ref: (1, 1) f32
    o_ref : (1, block_b) f32           -- lane-dense output slab
    """
    x = xt_ref[...]                                           # (D, tb) bf16

    # fc1 + ReLU   (dropout0 / dropout1 are identity at inference)
    h = jnp.dot(w1_ref[...], x, preferred_element_type=jnp.float32) + b1_ref[...]
    h = jnp.maximum(h, 0.0)

    # fc2 + ReLU   (dropout2 identity at inference)
    h = jnp.dot(w2_ref[...], h.astype(jnp.bfloat16),
                preferred_element_type=jnp.float32) + b2_ref[...]
    h = jnp.maximum(h, 0.0)

    # fc3 + ReLU
    h = jnp.dot(w3_ref[...], h.astype(jnp.bfloat16),
                preferred_element_type=jnp.float32) + b3_ref[...]
    h = jnp.maximum(h, 0.0)

    # fc4 + ReLU
    h = jnp.dot(w4_ref[...], h.astype(jnp.bfloat16),
                preferred_element_type=jnp.float32) + b4_ref[...]
    h = jnp.maximum(h, 0.0)                                   # (64, tb) f32

    # fc5 (64 -> 1): Mx64x1 matmul wastes the MXU; do it on VPU (mul) + XLU
    # (sublane reduce).  Result lands directly in the lane-dense output row.
    out = jnp.sum(h * w5_ref[...].astype(jnp.float32), axis=0, keepdims=True)
    o_ref[...] = (out + b5_ref[...]).astype(o_ref.dtype)      # (1, tb)


def choose_block_b(batch):
    """Lane-dense output requires block_b % 128 == 0.  Pick the largest tile
    (512/256/128) that still leaves >= 2 grid points (megacore sharding on
    v7x); tiny batches fall back to a single 128-wide tile."""
    for cand in (512, 256, 128):
        if pl.cdiv(batch, cand) >= 2:
            return cand
    return 128


@functools.partial(jax.jit, static_argnames=("block_b",))
def ann_forward(x, packed_params, *, block_b=128):
    """Fused ANNModel inference forward.  x: (B, input_size) f32 -> (B, 1) f32."""
    (w1, b1), (w2, b2), (w3, b3), (w4, b4), (w5, b5) = packed_params
    B, D = x.shape

    # Pad the batch up to a multiple of block_b and lay it out feature-major
    # (D, B_pad) so batch rides on lanes inside the kernel.
    n_tiles = pl.cdiv(B, block_b)
    B_pad = n_tiles * block_b
    xt = jnp.zeros((D, B_pad), jnp.bfloat16).at[:, :B].set(x.T.astype(jnp.bfloat16))

    def const_spec(shape):
        # Whole-array block, same block at every grid step -> fetched once and
        # kept resident in VMEM for the whole call.
        return pl.BlockSpec(shape, lambda i: (0,) * len(shape))

    out = pl.pallas_call(
        mlp_kernel,
        out_shape=jax.ShapeDtypeStruct((1, B_pad), jnp.float32),
        grid_spec=pltpu.PrefetchScalarGridSpec(
            num_scalar_prefetch=0,
            grid=(n_tiles,),
            in_specs=[
                pl.BlockSpec((D, block_b), lambda i: (0, i)),
                const_spec(w1.shape), const_spec(b1.shape),
                const_spec(w2.shape), const_spec(b2.shape),
                const_spec(w3.shape), const_spec(b3.shape),
                const_spec(w4.shape), const_spec(b4.shape),
                const_spec(w5.shape), const_spec(b5.shape),
            ],
            out_specs=pl.BlockSpec((1, block_b), lambda i: (0, i)),
        ),
        compiler_params=pltpu.CompilerParams(
            dimension_semantics=("parallel",),
        ),
    )(xt, w1, b1, w2, b2, w3, b3, w4, b4, w5, b5)

    return out[0, :B][:, None]                                # (B, 1)


def init_params(key, input_size):
    """PyTorch nn.Linear default init, in PyTorch layout: W (out, in), b (out,)."""
    dims = [(input_size, 1024), (1024, 512), (512, 256), (256, 64), (64, 1)]
    params = []
    for fan_in, fan_out in dims:
        key, kw, kb = jax.random.split(key, 3)
        bound = 1.0 / jnp.sqrt(float(fan_in))
        w = jax.random.uniform(kw, (fan_out, fan_in), jnp.float32, -bound, bound)
        b = jax.random.uniform(kb, (fan_out,), jnp.float32, -bound, bound)
        params.append((w, b))
    return params


def pack_params(params):
    """Kernel layout: W in bf16 (out, in); last-layer W as a (64, 1) column;
    biases as f32 (out, 1) columns for lane-broadcast adds."""
    packed = []
    last = len(params) - 1
    for i, (w, b) in enumerate(params):
        w_k = (w.T if i == last else w).astype(jnp.bfloat16)
        packed.append((w_k, b.reshape(-1, 1).astype(jnp.float32)))
    return packed


def ann_reference(x, params, *, mixed=True):
    """Plain-JAX reference (batch-major).  mixed=True mimics the kernel's
    bf16-operand / f32-accumulate precision; mixed=False is pure f32."""
    cast = (lambda a: a.astype(jnp.bfloat16)) if mixed else (lambda a: a)
    h = x.astype(jnp.float32)
    for w, b in params[:-1]:
        h = jnp.dot(cast(h), cast(w).T, preferred_element_type=jnp.float32) + b[None, :]
        h = jnp.maximum(h, 0.0)
    w5, b5 = params[-1]
    w5f = cast(w5).astype(jnp.float32) if mixed else w5
    return jnp.dot(h, w5f.T, preferred_element_type=jnp.float32) + b5[None, :]


if __name__ == "__main__":
    key = jax.random.PRNGKey(0)
    input_size = 32
    batch = 200        # deliberately NOT a multiple of block_b: exercises padding

    k_x, k_p = jax.random.split(key)
    x = jax.random.normal(k_x, (batch, input_size), jnp.float32)
    params = init_params(k_p, input_size)

    block_b = choose_block_b(batch)           # 128 here (2 grid points)
    out = ann_forward(x, pack_params(params), block_b=block_b)
    out = jax.block_until_ready(out)
    assert out.shape == (batch, 1)

    # Precision-matched reference (bf16 matmul operands, f32 accumulation)...
    ref_mixed = ann_reference(x, params, mixed=True)
    assert jnp.allclose(out, ref_mixed, atol=1e-3, rtol=1e-3), "mismatch vs mixed-precision reference"
    # ...and a loose sanity check against the pure-f32 reference.
    ref_f32 = ann_reference(x, params, mixed=False)
    assert jnp.allclose(out, ref_f32, atol=5e-2, rtol=5e-2), "mismatch vs f32 reference"

    print("KERNEL_OK")
</pallas_src>

<mosaic_0001>
module attributes {stable_mosaic.version = 11 : i64} {
  func.func @mlp_kernel(%arg0: i32, %arg1: memref<32x128xbf16, #tpu.memory_space<vmem>>, %arg2: memref<1024x32xbf16, #tpu.memory_space<vmem>>, %arg3: memref<1024x1xf32, #tpu.memory_space<vmem>>, %arg4: memref<512x1024xbf16, #tpu.memory_space<vmem>>, %arg5: memref<512x1xf32, #tpu.memory_space<vmem>>, %arg6: memref<256x512xbf16, #tpu.memory_space<vmem>>, %arg7: memref<256x1xf32, #tpu.memory_space<vmem>>, %arg8: memref<64x256xbf16, #tpu.memory_space<vmem>>, %arg9: memref<64x1xf32, #tpu.memory_space<vmem>>, %arg10: memref<64x1xbf16, #tpu.memory_space<vmem>>, %arg11: memref<1x1xf32, #tpu.memory_space<vmem>>, %arg12: memref<1x128xf32, #tpu.memory_space<vmem>>) attributes {dimension_semantics = [#tpu.dimension_semantics<parallel>], iteration_bounds = array<i64: 2>, scalar_prefetch = 0 : i64, scratch_operands = 0 : i64, tpu.core_type = #tpu.core_type<tc>, window_params = [{transform_indices = @transform_0, window_bounds = array<i64: 32, 128>}, {pipeline_mode = #tpu.pipeline_mode<synchronous>, transform_indices = @transform_1, window_bounds = array<i64: 1024, 32>}, {pipeline_mode = #tpu.pipeline_mode<synchronous>, transform_indices = @transform_2, window_bounds = array<i64: 1024, 1>}, {pipeline_mode = #tpu.pipeline_mode<synchronous>, transform_indices = @transform_3, window_bounds = array<i64: 512, 1024>}, {pipeline_mode = #tpu.pipeline_mode<synchronous>, transform_indices = @transform_4, window_bounds = array<i64: 512, 1>}, {pipeline_mode = #tpu.pipeline_mode<synchronous>, transform_indices = @transform_5, window_bounds = array<i64: 256, 512>}, {pipeline_mode = #tpu.pipeline_mode<synchronous>, transform_indices = @transform_6, window_bounds = array<i64: 256, 1>}, {pipeline_mode = #tpu.pipeline_mode<synchronous>, transform_indices = @transform_7, window_bounds = array<i64: 64, 256>}, {pipeline_mode = #tpu.pipeline_mode<synchronous>, transform_indices = @transform_8, window_bounds = array<i64: 64, 1>}, {pipeline_mode = #tpu.pipeline_mode<synchronous>, transform_indices = @transform_9, window_bounds = array<i64: 64, 1>}, {pipeline_mode = #tpu.pipeline_mode<synchronous>, transform_indices = @transform_10, window_bounds = array<i64: 1, 1>}, {transform_indices = @transform_11, window_bounds = array<i64: 1, 128>}]} {
    %c0 = arith.constant 0 : index
    %c0_0 = arith.constant 0 : index
    %0 = vector.load %arg1[%c0, %c0_0] : memref<32x128xbf16, #tpu.memory_space<vmem>>, vector<32x128xbf16>
    %c0_1 = arith.constant 0 : index
    %c0_2 = arith.constant 0 : index
    %1 = vector.load %arg2[%c0_1, %c0_2] : memref<1024x32xbf16, #tpu.memory_space<vmem>>, vector<1024x32xbf16>
    %cst = arith.constant dense<0.000000e+00> : vector<1024x128xf32>
    %2 = tpu.matmul %1, %0, %cst {dimension_numbers = #tpu.dot_dimension_numbers<[1], [0], [0], [1], [0, 0, 1, 1], [], []>} : vector<1024x32xbf16>, vector<32x128xbf16>, vector<1024x128xf32> -> vector<1024x128xf32>
    %c0_3 = arith.constant 0 : index
    %c0_4 = arith.constant 0 : index
    %3 = vector.load %arg3[%c0_3, %c0_4] : memref<1024x1xf32, #tpu.memory_space<vmem>>, vector<1024x1xf32>
    %4 = vector.broadcast %3 : vector<1024x1xf32> to vector<1024x128xf32>
    %5 = arith.addf %2, %4 : vector<1024x128xf32>
    %cst_5 = arith.constant 0.000000e+00 : f32
    %6 = vector.broadcast %cst_5 : f32 to vector<1024x128xf32>
    %7 = arith.maximumf %5, %6 : vector<1024x128xf32>
    %c0_6 = arith.constant 0 : index
    %c0_7 = arith.constant 0 : index
    %8 = vector.load %arg4[%c0_6, %c0_7] : memref<512x1024xbf16, #tpu.memory_space<vmem>>, vector<512x1024xbf16>
    %9 = arith.truncf %7 : vector<1024x128xf32> to vector<1024x128xbf16>
    %cst_8 = arith.constant dense<0.000000e+00> : vector<512x128xf32>
    %10 = tpu.matmul %8, %9, %cst_8 {dimension_numbers = #tpu.dot_dimension_numbers<[1], [0], [0], [1], [0, 0, 1, 1], [], []>} : vector<512x1024xbf16>, vector<1024x128xbf16>, vector<512x128xf32> -> vector<512x128xf32>
    %c0_9 = arith.constant 0 : index
    %c0_10 = arith.constant 0 : index
    %11 = vector.load %arg5[%c0_9, %c0_10] : memref<512x1xf32, #tpu.memory_space<vmem>>, vector<512x1xf32>
    %12 = vector.broadcast %11 : vector<512x1xf32> to vector<512x128xf32>
    %13 = arith.addf %10, %12 : vector<512x128xf32>
    %cst_11 = arith.constant 0.000000e+00 : f32
    %14 = vector.broadcast %cst_11 : f32 to vector<512x128xf32>
    %15 = arith.maximumf %13, %14 : vector<512x128xf32>
    %c0_12 = arith.constant 0 : index
    %c0_13 = arith.constant 0 : index
    %16 = vector.load %arg6[%c0_12, %c0_13] : memref<256x512xbf16, #tpu.memory_space<vmem>>, vector<256x512xbf16>
    %17 = arith.truncf %15 : vector<512x128xf32> to vector<512x128xbf16>
    %cst_14 = arith.constant dense<0.000000e+00> : vector<256x128xf32>
    %18 = tpu.matmul %16, %17, %cst_14 {dimension_numbers = #tpu.dot_dimension_numbers<[1], [0], [0], [1], [0, 0, 1, 1], [], []>} : vector<256x512xbf16>, vector<512x128xbf16>, vector<256x128xf32> -> vector<256x128xf32>
    %c0_15 = arith.constant 0 : index
    %c0_16 = arith.constant 0 : index
    %19 = vector.load %arg7[%c0_15, %c0_16] : memref<256x1xf32, #tpu.memory_space<vmem>>, vector<256x1xf32>
    %20 = vector.broadcast %19 : vector<256x1xf32> to vector<256x128xf32>
    %21 = arith.addf %18, %20 : vector<256x128xf32>
    %cst_17 = arith.constant 0.000000e+00 : f32
    %22 = vector.broadcast %cst_17 : f32 to vector<256x128xf32>
    %23 = arith.maximumf %21, %22 : vector<256x128xf32>
    %c0_18 = arith.constant 0 : index
    %c0_19 = arith.constant 0 : index
    %24 = vector.load %arg8[%c0_18, %c0_19] : memref<64x256xbf16, #tpu.memory_space<vmem>>, vector<64x256xbf16>
    %25 = arith.truncf %23 : vector<256x128xf32> to vector<256x128xbf16>
    %cst_20 = arith.constant dense<0.000000e+00> : vector<64x128xf32>
    %26 = tpu.matmul %24, %25, %cst_20 {dimension_numbers = #tpu.dot_dimension_numbers<[1], [0], [0], [1], [0, 0, 1, 1], [], []>} : vector<64x256xbf16>, vector<256x128xbf16>, vector<64x128xf32> -> vector<64x128xf32>
    %c0_21 = arith.constant 0 : index
    %c0_22 = arith.constant 0 : index
    %27 = vector.load %arg9[%c0_21, %c0_22] : memref<64x1xf32, #tpu.memory_space<vmem>>, vector<64x1xf32>
    %28 = vector.broadcast %27 : vector<64x1xf32> to vector<64x128xf32>
    %29 = arith.addf %26, %28 : vector<64x128xf32>
    %cst_23 = arith.constant 0.000000e+00 : f32
    %30 = vector.broadcast %cst_23 : f32 to vector<64x128xf32>
    %31 = arith.maximumf %29, %30 : vector<64x128xf32>
    %c0_24 = arith.constant 0 : index
    %c0_25 = arith.constant 0 : index
    %32 = vector.load %arg10[%c0_24, %c0_25] : memref<64x1xbf16, #tpu.memory_space<vmem>>, vector<64x1xbf16>
    %33 = arith.extf %32 : vector<64x1xbf16> to vector<64x1xf32>
    %34 = vector.broadcast %33 : vector<64x1xf32> to vector<64x128xf32>
    %35 = arith.mulf %31, %34 : vector<64x128xf32>
    %cst_26 = arith.constant dense<0.000000e+00> : vector<128xf32>
    %36 = vector.multi_reduction <add>, %35, %cst_26 [0] : vector<64x128xf32> to vector<128xf32>
    %37 = vector.shape_cast %36 : vector<128xf32> to vector<1x128xf32>
    %c0_27 = arith.constant 0 : index
    %c0_28 = arith.constant 0 : index
    %38 = vector.load %arg11[%c0_27, %c0_28] : memref<1x1xf32, #tpu.memory_space<vmem>>, vector<1x1xf32>
    %39 = vector.broadcast %38 : vector<1x1xf32> to vector<1x128xf32>
    %40 = arith.addf %37, %39 : vector<1x128xf32>
    %c0_29 = arith.constant 0 : index
    %c0_30 = arith.constant 0 : index
    %41 = vector.load %arg12[%c0_29, %c0_30] : memref<1x128xf32, #tpu.memory_space<vmem>>, vector<1x128xf32>
    tpu.vector_store %arg12[%c0_29, %c0_30], %40 {strides = array<i32>} : memref<1x128xf32, #tpu.memory_space<vmem>>, vector<1x128xf32>,
    return
  }
  func.func @transform_0(%arg0: i32) -> (i32, i32) {
    %c0_i32 = arith.constant 0 : i32
    %c0_i32_0 = arith.constant 0 : i32
    return %c0_i32, %arg0 : i32, i32
  }
  func.func @transform_1(%arg0: i32) -> (i32, i32) {
    %c0_i32 = arith.constant 0 : i32
    %c0_i32_0 = arith.constant 0 : i32
    %c0_i32_1 = arith.constant 0 : i32
    return %c0_i32, %c0_i32_0 : i32, i32
  }
  func.func @transform_2(%arg0: i32) -> (i32, i32) {
    %c0_i32 = arith.constant 0 : i32
    %c0_i32_0 = arith.constant 0 : i32
    %c0_i32_1 = arith.constant 0 : i32
    return %c0_i32, %c0_i32_0 : i32, i32
  }
  func.func @transform_3(%arg0: i32) -> (i32, i32) {
    %c0_i32 = arith.constant 0 : i32
    %c0_i32_0 = arith.constant 0 : i32
    %c0_i32_1 = arith.constant 0 : i32
    return %c0_i32, %c0_i32_0 : i32, i32
  }
  func.func @transform_4(%arg0: i32) -> (i32, i32) {
    %c0_i32 = arith.constant 0 : i32
    %c0_i32_0 = arith.constant 0 : i32
    %c0_i32_1 = arith.constant 0 : i32
    return %c0_i32, %c0_i32_0 : i32, i32
  }
  func.func @transform_5(%arg0: i32) -> (i32, i32) {
    %c0_i32 = arith.constant 0 : i32
    %c0_i32_0 = arith.constant 0 : i32
    %c0_i32_1 = arith.constant 0 : i32
    return %c0_i32, %c0_i32_0 : i32, i32
  }
  func.func @transform_6(%arg0: i32) -> (i32, i32) {
    %c0_i32 = arith.constant 0 : i32
    %c0_i32_0 = arith.constant 0 : i32
    %c0_i32_1 = arith.constant 0 : i32
    return %c0_i32, %c0_i32_0 : i32, i32
  }
  func.func @transform_7(%arg0: i32) -> (i32, i32) {
    %c0_i32 = arith.constant 0 : i32
    %c0_i32_0 = arith.constant 0 : i32
    %c0_i32_1 = arith.constant 0 : i32
    return %c0_i32, %c0_i32_0 : i32, i32
  }
  func.func @transform_8(%arg0: i32) -> (i32, i32) {
    %c0_i32 = arith.constant 0 : i32
    %c0_i32_0 = arith.constant 0 : i32
    %c0_i32_1 = arith.constant 0 : i32
    return %c0_i32, %c0_i32_0 : i32, i32
  }
  func.func @transform_9(%arg0: i32) -> (i32, i32) {
    %c0_i32 = arith.constant 0 : i32
    %c0_i32_0 = arith.constant 0 : i32
    %c0_i32_1 = arith.constant 0 : i32
    return %c0_i32, %c0_i32_0 : i32, i32
  }
  func.func @transform_10(%arg0: i32) -> (i32, i32) {
    %c0_i32 = arith.constant 0 : i32
    %c0_i32_0 = arith.constant 0 : i32
    %c0_i32_1 = arith.constant 0 : i32
    return %c0_i32, %c0_i32_0 : i32, i32
  }
  func.func @transform_11(%arg0: i32) -> (i32, i32) {
    %c0_i32 = arith.constant 0 : i32
    %c0_i32_0 = arith.constant 0 : i32
    return %c0_i32, %arg0 : i32, i32
  }
}

</mosaic_0001>

<llo_original>
// kernel: ann_forward.1
$region0: #{ann_forward.1}
  #allocation0 [shape = 'u32[]', space=smem, size = 0x4, offset = 0x4, fixed_abs, tag = 'smem constant byte address 0x4 - core index']
  #allocation1 [shape = 'u32[144,128]{1,0:T(1,128)}', space=vmem, size = 0x12000, scoped, tag = 'internal scratch']
  #allocation2 [shape = 'f32[1,1]{1,0:T(1,128)S(1)}', space=vmem, size = 0x200, scoped, tag = 'scoped memory for ann_forward.1']
  %s0 = inlined_call_operand.vmem [shape: bf16[32,256], index: 0, kind: input, shape index: {}]
  %s1 = inlined_call_operand.vmem [shape: bf16[1024,32], index: 1, kind: input, shape index: {}]
  %s2 = inlined_call_operand.vmem [shape: f32[1024,1], index: 2, kind: input, shape index: {}]
  %s3 = inlined_call_operand.vmem [shape: bf16[512,1024], index: 3, kind: input, shape index: {}]
  %s4 = inlined_call_operand.vmem [shape: f32[512,1], index: 4, kind: input, shape index: {}]
  %s5 = inlined_call_operand.vmem [shape: bf16[256,512], index: 5, kind: input, shape index: {}]
  %s6 = inlined_call_operand.vmem [shape: f32[256,1], index: 6, kind: input, shape index: {}]
  %s7 = inlined_call_operand.vmem [shape: bf16[64,256], index: 7, kind: input, shape index: {}]
  %s8 = inlined_call_operand.vmem [shape: f32[64,1], index: 8, kind: input, shape index: {}]
  %s9 = inlined_call_operand.vmem [shape: bf16[64,1], index: 9, kind: input, shape index: {}]
  %s10 = inlined_call_operand.<no memory space> [shape: f32[1,1], index: 10, kind: input, shape index: {}]
  %s11 = inlined_call_operand.vmem [shape: f32[1,256], index: 11, kind: output, shape index: {}]
  %s12 = sld [smem:[#allocation0]]
  $region118: #{ann_forward.1} parent=0
    _
  %s14 = ssub.s32 1, %s12
  %s15 = scalar_select 0, %s14, %s12
  %v16 = vstv %s10
  %17 = vst [vmem:[#allocation2] sm:$0x1] %v16
  $region1: #{ann_forward.1} parent=0
    #allocation3 [shape = 'u8[16384]{0}', space=vmem, size = 0x4000, scoped, tag = 'input window, operand 0']
    loop: start=0, step=1, limit=4
    $region2: #{ann_forward.1} parent=1 // loop_pre_header
      _
    $region3: #{ann_forward.1} parent=1 // loop_header
      %s19 = sphi 0, %s23
      %p20 = scmp.ge.s32.totalorder %s19, 4
      %s29 = sphi 0, %s31
      %s32 = sphi 0, %s29
      %s33 = sphi 0, %s32
      %s49 = sphi 0, %s33
      %s53 = sphi 0, %s53
      %s55 = sphi 0, %s53
      %s56 = sphi 0, %s55
      %s70 = sphi 0, %s56
      %s74 = sphi 0, %s74
      %s76 = sphi 0, %s74
      %s77 = sphi 0, %s76
      %s91 = sphi 0, %s77
      %s95 = sphi 0, %s95
      %s97 = sphi 0, %s95
      %s98 = sphi 0, %s97
      %s112 = sphi 0, %s98
      %s116 = sphi 0, %s116
      %s118 = sphi 0, %s116
      %s119 = sphi 0, %s118
      %s133 = sphi 0, %s119
      %s137 = sphi 0, %s137
      %s139 = sphi 0, %s137
      %s140 = sphi 0, %s139
      %s154 = sphi 0, %s140
      %s158 = sphi 0, %s158
      %s160 = sphi 0, %s158
      %s161 = sphi 0, %s160
      %s175 = sphi 0, %s161
      %s179 = sphi 0, %s179
      %s181 = sphi 0, %s179
      %s182 = sphi 0, %s181
      %s196 = sphi 0, %s182
      %s200 = sphi 0, %s200
      %s202 = sphi 0, %s200
      %s203 = sphi 0, %s202
      %s217 = sphi 0, %s203
      %s221 = sphi 0, %s221
      %s223 = sphi 0, %s221
      %s224 = sphi 0, %s223
      %s238 = sphi 0, %s224
      %s242 = sphi 0, %s242
      %s244 = sphi 0, %s242
      %s245 = sphi 0, %s244
      %s259 = sphi 0, %s245
      %s265 = sphi 0, %s267
      %s268 = sphi 0, %s265
      %s269 = sphi 0, %s268
      %s285 = sphi 0, %s269
    $region4: #{ann_forward.1} parent=1 // loop_header_branch
      %22 = sbr.rel (%p20) target = $region8
    $region5: #{ann_forward.1} parent=1 // loop_body
      %s24 = ssub.s32 %s19, 1
      %s25 = ssub.s32 %s19, 2
      %s26 = sadd.s32 %s19, 1
      %s27 = ssub.s32 %s19, %s26
      %p28 = scmp.eq.s32.totalorder %s27, 0
      %s30 = sadd.s32 %s29, 1
      %s31 = scalar_select %p28, %s29, %s30
      %p34 = pneg %p28
      %p35 = scmp.eq.s32.totalorder %s19, 1
      %p36 = por %p34, %p35
      %p37 = scmp.ne.s32.totalorder %s29, %s32
      %p38 = scmp.eq.s32.totalorder %s19, 0
      %p39 = por %p37, %p38
      %p40 = scmp.ne.s32.totalorder %s29, %s32
      %p41 = scmp.eq.s32.totalorder %s24, 1
      %p42 = por %p40, %p41
      %p43 = scmp.ne.s32.totalorder %s32, %s33
      %p44 = scmp.eq.s32.totalorder %s24, 0
      %p45 = por %p43, %p44
      %p46 = scmp.ne.s32.totalorder %s32, %s33
      %p47 = scmp.eq.s32.totalorder %s25, 1
      %p48 = por %p46, %p47
      %p50 = scmp.ne.s32.totalorder %s33, %s49
      %p51 = scmp.eq.s32.totalorder %s25, 0
      %p52 = por %p50, %p51
      %s54 = sadd.s32 %s53, 1
      %p57 = scmp.eq.s32.totalorder %s19, 1
      %p58 = scmp.ne.s32.totalorder %s53, %s55
      %p59 = scmp.eq.s32.totalorder %s19, 0
      %p60 = por %p58, %p59
      %p61 = scmp.ne.s32.totalorder %s53, %s55
      %p62 = scmp.eq.s32.totalorder %s24, 1
      %p63 = por %p61, %p62
      %p64 = scmp.ne.s32.totalorder %s55, %s56
      %p65 = scmp.eq.s32.totalorder %s24, 0
      %p66 = por %p64, %p65
      %p67 = scmp.ne.s32.totalorder %s55, %s56
      %p68 = scmp.eq.s32.totalorder %s25, 1
      %p69 = por %p67, %p68
      %p71 = scmp.ne.s32.totalorder %s56, %s70
      %p72 = scmp.eq.s32.totalorder %s25, 0
      %p73 = por %p71, %p72
      %s75 = sadd.s32 %s74, 1
      %p78 = scmp.eq.s32.totalorder %s19, 1
      %p79 = scmp.ne.s32.totalorder %s74, %s76
      %p80 = scmp.eq.s32.totalorder %s19, 0
      %p81 = por %p79, %p80
      %p82 = scmp.ne.s32.totalorder %s74, %s76
      %p83 = scmp.eq.s32.totalorder %s24, 1
      %p84 = por %p82, %p83
      %p85 = scmp.ne.s32.totalorder %s76, %s77
      %p86 = scmp.eq.s32.totalorder %s24, 0
      %p87 = por %p85, %p86
      %p88 = scmp.ne.s32.totalorder %s76, %s77
      %p89 = scmp.eq.s32.totalorder %s25, 1
      %p90 = por %p88, %p89
      %p92 = scmp.ne.s32.totalorder %s77, %s91
      %p93 = scmp.eq.s32.totalorder %s25, 0
      %p94 = por %p92, %p93
      %s96 = sadd.s32 %s95, 1
      %p99 = scmp.eq.s32.totalorder %s19, 1
      %p100 = scmp.ne.s32.totalorder %s95, %s97
      %p101 = scmp.eq.s32.totalorder %s19, 0
      %p102 = por %p100, %p101
      %p103 = scmp.ne.s32.totalorder %s95, %s97
      %p104 = scmp.eq.s32.totalorder %s24, 1
      %p105 = por %p103, %p104
      %p106 = scmp.ne.s32.totalorder %s97, %s98
      %p107 = scmp.eq.s32.totalorder %s24, 0
      %p108 = por %p106, %p107
      %p109 = scmp.ne.s32.totalorder %s97, %s98
      %p110 = scmp.eq.s32.totalorder %s25, 1
      %p111 = por %p109, %p110
      %p113 = scmp.ne.s32.totalorder %s98, %s112
      %p114 = scmp.eq.s32.totalorder %s25, 0
      %p115 = por %p113, %p114
      %s117 = sadd.s32 %s116, 1
      %p120 = scmp.eq.s32.totalorder %s19, 1
      %p121 = scmp.ne.s32.totalorder %s116, %s118
      %p122 = scmp.eq.s32.totalorder %s19, 0
      %p123 = por %p121, %p122
      %p124 = scmp.ne.s32.totalorder %s116, %s118
      %p125 = scmp.eq.s32.totalorder %s24, 1
      %p126 = por %p124, %p125
      %p127 = scmp.ne.s32.totalorder %s118, %s119
      %p128 = scmp.eq.s32.totalorder %s24, 0
      %p129 = por %p127, %p128
      %p130 = scmp.ne.s32.totalorder %s118, %s119
      %p131 = scmp.eq.s32.totalorder %s25, 1
      %p132 = por %p130, %p131
      %p134 = scmp.ne.s32.totalorder %s119, %s133
      %p135 = scmp.eq.s32.totalorder %s25, 0
      %p136 = por %p134, %p135
      %s138 = sadd.s32 %s137, 1
      %p141 = scmp.eq.s32.totalorder %s19, 1
      %p142 = scmp.ne.s32.totalorder %s137, %s139
      %p143 = scmp.eq.s32.totalorder %s19, 0
      %p144 = por %p142, %p143
      %p145 = scmp.ne.s32.totalorder %s137, %s139
      %p146 = scmp.eq.s32.totalorder %s24, 1
      %p147 = por %p145, %p146
      %p148 = scmp.ne.s32.totalorder %s139, %s140
      %p149 = scmp.eq.s32.totalorder %s24, 0
      %p150 = por %p148, %p149
      %p151 = scmp.ne.s32.totalorder %s139, %s140
      %p152 = scmp.eq.s32.totalorder %s25, 1
      %p153 = por %p151, %p152
      %p155 = scmp.ne.s32.totalorder %s140, %s154
      %p156 = scmp.eq.s32.totalorder %s25, 0
      %p157 = por %p155, %p156
      %s159 = sadd.s32 %s158, 1
      %p162 = scmp.eq.s32.totalorder %s19, 1
      %p163 = scmp.ne.s32.totalorder %s158, %s160
      %p164 = scmp.eq.s32.totalorder %s19, 0
      %p165 = por %p163, %p164
      %p166 = scmp.ne.s32.totalorder %s158, %s160
      %p167 = scmp.eq.s32.totalorder %s24, 1
      %p168 = por %p166, %p167
      %p169 = scmp.ne.s32.totalorder %s160, %s161
      %p170 = scmp.eq.s32.totalorder %s24, 0
      %p171 = por %p169, %p170
      %p172 = scmp.ne.s32.totalorder %s160, %s161
      %p173 = scmp.eq.s32.totalorder %s25, 1
      %p174 = por %p172, %p173
      %p176 = scmp.ne.s32.totalorder %s161, %s175
      %p177 = scmp.eq.s32.totalorder %s25, 0
      %p178 = por %p176, %p177
      %s180 = sadd.s32 %s179, 1
      %p183 = scmp.eq.s32.totalorder %s19, 1
      %p184 = scmp.ne.s32.totalorder %s179, %s181
      %p185 = scmp.eq.s32.totalorder %s19, 0
      %p186 = por %p184, %p185
      %p187 = scmp.ne.s32.totalorder %s179, %s181
      %p188 = scmp.eq.s32.totalorder %s24, 1
      %p189 = por %p187, %p188
      %p190 = scmp.ne.s32.totalorder %s181, %s182
      %p191 = scmp.eq.s32.totalorder %s24, 0
      %p192 = por %p190, %p191
      %p193 = scmp.ne.s32.totalorder %s181, %s182
      %p194 = scmp.eq.s32.totalorder %s25, 1
      %p195 = por %p193, %p194
      %p197 = scmp.ne.s32.totalorder %s182, %s196
      %p198 = scmp.eq.s32.totalorder %s25, 0
      %p199 = por %p197, %p198
      %s201 = sadd.s32 %s200, 1
      %p204 = scmp.eq.s32.totalorder %s19, 1
      %p205 = scmp.ne.s32.totalorder %s200, %s202
      %p206 = scmp.eq.s32.totalorder %s19, 0
      %p207 = por %p205, %p206
      %p208 = scmp.ne.s32.totalorder %s200, %s202
      %p209 = scmp.eq.s32.totalorder %s24, 1
      %p210 = por %p208, %p209
      %p211 = scmp.ne.s32.totalorder %s202, %s203
      %p212 = scmp.eq.s32.totalorder %s24, 0
      %p213 = por %p211, %p212
      %p214 = scmp.ne.s32.totalorder %s202, %s203
      %p215 = scmp.eq.s32.totalorder %s25, 1
      %p216 = por %p214, %p215
      %p218 = scmp.ne.s32.totalorder %s203, %s217
      %p219 = scmp.eq.s32.totalorder %s25, 0
      %p220 = por %p218, %p219
      %s222 = sadd.s32 %s221, 1
      %p225 = scmp.eq.s32.totalorder %s19, 1
      %p226 = scmp.ne.s32.totalorder %s221, %s223
      %p227 = scmp.eq.s32.totalorder %s19, 0
      %p228 = por %p226, %p227
      %p229 = scmp.ne.s32.totalorder %s221, %s223
      %p230 = scmp.eq.s32.totalorder %s24, 1
      %p231 = por %p229, %p230
      %p232 = scmp.ne.s32.totalorder %s223, %s224
      %p233 = scmp.eq.s32.totalorder %s24, 0
      %p234 = por %p232, %p233
      %p235 = scmp.ne.s32.totalorder %s223, %s224
      %p236 = scmp.eq.s32.totalorder %s25, 1
      %p237 = por %p235, %p236
      %p239 = scmp.ne.s32.totalorder %s224, %s238
      %p240 = scmp.eq.s32.totalorder %s25, 0
      %p241 = por %p239, %p240
      %s243 = sadd.s32 %s242, 1
      %p246 = scmp.eq.s32.totalorder %s19, 1
      %p247 = scmp.ne.s32.totalorder %s242, %s244
      %p248 = scmp.eq.s32.totalorder %s19, 0
      %p249 = por %p247, %p248
      %p250 = scmp.ne.s32.totalorder %s242, %s244
      %p251 = scmp.eq.s32.totalorder %s24, 1
      %p252 = por %p250, %p251
      %p253 = scmp.ne.s32.totalorder %s244, %s245
      %p254 = scmp.eq.s32.totalorder %s24, 0
      %p255 = por %p253, %p254
      %p256 = scmp.ne.s32.totalorder %s244, %s245
      %p257 = scmp.eq.s32.totalorder %s25, 1
      %p258 = por %p256, %p257
      %p260 = scmp.ne.s32.totalorder %s245, %s259
      %p261 = scmp.eq.s32.totalorder %s25, 0
      %p262 = por %p260, %p261
      %s263 = ssub.s32 %s19, %s26
      %p264 = scmp.eq.s32.totalorder %s263, 0
      %s266 = sadd.s32 %s265, 1
      %s267 = scalar_select %p264, %s265, %s266
      %p270 = pneg %p264
      %p271 = scmp.eq.s32.totalorder %s19, 1
      %p272 = por %p270, %p271
      %p273 = scmp.ne.s32.totalorder %s265, %s268
      %p274 = scmp.eq.s32.totalorder %s19, 0
      %p275 = por %p273, %p274
      %p276 = scmp.ne.s32.totalorder %s265, %s268
      %p277 = scmp.eq.s32.totalorder %s24, 1
      %p278 = por %p276, %p277
      %p279 = scmp.ne.s32.totalorder %s268, %s269
      %p280 = scmp.eq.s32.totalorder %s24, 0
      %p281 = por %p279, %p280
      %p282 = scmp.ne.s32.totalorder %s268, %s269
      %p283 = scmp.eq.s32.totalorder %s25, 1
      %p284 = por %p282, %p283
      %p286 = scmp.ne.s32.totalorder %s269, %s285
      %p287 = scmp.eq.s32.totalorder %s25, 0
      %p288 = por %p286, %p287
      %p289 = scmp.le.s32.totalorder 1, %s19
      %p290 = scmp.lt.s32.totalorder %s19, 3
      %p291 = pnand %p289, %p290
      %p292 = pneg %p291
      // Predicated region
      $region9: #{ann_forward.1} parent=5 // pred_check
        _
      $region10: #{ann_forward.1} parent=5 // pred_check_branch
        %294 = sbr.rel (%p291) target = $region12
      $region11: #{ann_forward.1} parent=5 // pred_region
        %s295 = ssub.s32 %s19, 1
        // Predicated region
        $region13: #{ann_forward.1} parent=11 // pred_check
          %p296 = pneg %p66
        $region14: #{ann_forward.1} parent=11 // pred_check_branch
          %298 = sbr.rel (%p296) target = $region16
        $region15: #{ann_forward.1} parent=11 // pred_region
          _
        $region16: #{ann_forward.1} parent=11 // pred_fallthru
          _
        // Predicated region
        $region17: #{ann_forward.1} parent=11 // pred_check
          %p299 = pneg %p87
        $region18: #{ann_forward.1} parent=11 // pred_check_branch
          %301 = sbr.rel (%p299) target = $region20
        $region19: #{ann_forward.1} parent=11 // pred_region
          _
        $region20: #{ann_forward.1} parent=11 // pred_fallthru
          _
        // Predicated region
        $region21: #{ann_forward.1} parent=11 // pred_check
          %p302 = pneg %p108
        $region22: #{ann_forward.1} parent=11 // pred_check_branch
          %304 = sbr.rel (%p302) target = $region24
        $region23: #{ann_forward.1} parent=11 // pred_region
          _
        $region24: #{ann_forward.1} parent=11 // pred_fallthru
          _
        // Predicated region
        $region25: #{ann_forward.1} parent=11 // pred_check
          %p305 = pneg %p129
        $region26: #{ann_forward.1} parent=11 // pred_check_branch
          %307 = sbr.rel (%p305) target = $region28
        $region27: #{ann_forward.1} parent=11 // pred_region
          _
        $region28: #{ann_forward.1} parent=11 // pred_fallthru
          _
        // Predicated region
        $region29: #{ann_forward.1} parent=11 // pred_check
          %p308 = pneg %p150
        $region30: #{ann_forward.1} parent=11 // pred_check_branch
          %310 = sbr.rel (%p308) target = $region32
        $region31: #{ann_forward.1} parent=11 // pred_region
          _
        $region32: #{ann_forward.1} parent=11 // pred_fallthru
          _
        // Predicated region
        $region33: #{ann_forward.1} parent=11 // pred_check
          %p311 = pneg %p171
        $region34: #{ann_forward.1} parent=11 // pred_check_branch
          %313 = sbr.rel (%p311) target = $region36
        $region35: #{ann_forward.1} parent=11 // pred_region
          _
        $region36: #{ann_forward.1} parent=11 // pred_fallthru
          _
        // Predicated region
        $region37: #{ann_forward.1} parent=11 // pred_check
          %p314 = pneg %p192
        $region38: #{ann_forward.1} parent=11 // pred_check_branch
          %316 = sbr.rel (%p314) target = $region40
        $region39: #{ann_forward.1} parent=11 // pred_region
          _
        $region40: #{ann_forward.1} parent=11 // pred_fallthru
          _
        // Predicated region
        $region41: #{ann_forward.1} parent=11 // pred_check
          %p317 = pneg %p213
        $region42: #{ann_forward.1} parent=11 // pred_check_branch
          %319 = sbr.rel (%p317) target = $region44
        $region43: #{ann_forward.1} parent=11 // pred_region
          _
        $region44: #{ann_forward.1} parent=11 // pred_fallthru
          _
        // Predicated region
        $region45: #{ann_forward.1} parent=11 // pred_check
          %p320 = pneg %p234
        $region46: #{ann_forward.1} parent=11 // pred_check_branch
          %322 = sbr.rel (%p320) target = $region48
        $region47: #{ann_forward.1} parent=11 // pred_region
          _
        $region48: #{ann_forward.1} parent=11 // pred_fallthru
          _
        // Predicated region
        $region49: #{ann_forward.1} parent=11 // pred_check
          %p323 = pneg %p255
        $region50: #{ann_forward.1} parent=11 // pred_check_branch
          %325 = sbr.rel (%p323) target = $region52
        $region51: #{ann_forward.1} parent=11 // pred_region
          _
        $region52: #{ann_forward.1} parent=11 // pred_fallthru
          _
      $region12: #{ann_forward.1} parent=5 // pred_fallthru
        _
      %p326 = scmp.lt.s32.totalorder %s19, 2
      // Predicated region
      $region53: #{ann_forward.1} parent=5 // pred_check
        %p327 = pneg %p326
      $region54: #{ann_forward.1} parent=5 // pred_check_branch
        %329 = sbr.rel (%p327) target = $region56
      $region55: #{ann_forward.1} parent=5 // pred_region
        // Predicated region
        $region57: #{ann_forward.1} parent=55 // pred_check
          %p330 = pneg %p39
        $region58: #{ann_forward.1} parent=55 // pred_check_branch
          %332 = sbr.rel (%p330) target = $region60
        $region59: #{ann_forward.1} parent=55 // pred_region
          %s333 = sand.u32 %s29, 1
          %s334 = sand.u32 %s29, 1
          %s335 = smul.addr %s334, 16
          %s336 = scalar_lea.vmem [#allocation3], %s335
          %s337 = smul.addr %s19, 4
          %s338 = scalar_lea.vmem %s0, %s337
          // Predicated region
          $region61: #{ann_forward.1} parent=59 // pred_check
            _
          $region62: #{ann_forward.1} parent=59 // pred_check_branch
            %340 = sbr.rel (0) target = $region64
          $region63: #{ann_forward.1} parent=59 // pred_region
            // Predicated region
            $region65: #{ann_forward.1} parent=63 // pred_check
              _
            $region66: #{ann_forward.1} parent=63 // pred_check_branch
              %342 = sbr.rel target = $region68
            $region67: #{ann_forward.1} parent=63 // pred_region
              // Predicated region
              $region80: #{ann_forward.1} parent=67 // pred_check
                _
              $region81: #{ann_forward.1} parent=67 // pred_check_branch
                %363 = sbr.rel (0) target = $region83
              $region82: #{ann_forward.1} parent=67 // pred_region
                loop: start=0, step=1, limit=1
                $region84: #{ann_forward.1} parent=82 // loop_pre_header
                  _
                $region85: #{ann_forward.1} parent=82 // loop_header
                  %s365 = sphi 0, %s369
                  %p366 = scmp.ge.s32.totalorder %s365, 1
                  %s370 = sphi %s338, %s338
                  %s371 = sphi %s336, %s336
                $region86: #{ann_forward.1} parent=82 // loop_header_branch
                  %368 = sbr.rel (%p366) target = $region90
                $region87: #{ann_forward.1} parent=82 // loop_body
                  _
                $region88: #{ann_forward.1} parent=82 // loop_footer
                  %s369 = sadd.s32 1, %s365
                $region89: #{ann_forward.1} parent=82 // loop_footer_branch
                  %364 = sbr.rel target = $region85
                $region90: #{ann_forward.1} parent=82 // loop_exit
                  _
                loop: start=0, step=1, limit=1
                $region91: #{ann_forward.1} parent=82 // loop_pre_header
                  _
                $region92: #{ann_forward.1} parent=82 // loop_header
                  %s374 = sphi 0, %s378
                  %p375 = scmp.ge.s32.totalorder %s374, 1
                  %s379 = sphi %s338, %s338
                  %s380 = sphi %s336, %s336
                $region93: #{ann_forward.1} parent=82 // loop_header_branch
                  %377 = sbr.rel (%p375) target = $region97
                $region94: #{ann_forward.1} parent=82 // loop_body
                  %v381 = vld [vmem:[%s379] sm:$0xf]
                  %382 = vst [vmem:[%s380] sm:$0xf] %v381
                  %v383 = vld [vmem:[%s379 + $0x8] sm:$0xf]
                  %384 = vst [vmem:[%s380 + $0x4] sm:$0xf] %v383
                  %v385 = vld [vmem:[%s379 + $0x10] sm:$0xf]
                  %386 = vst [vmem:[%s380 + $0x8] sm:$0xf] %v385
                  %v387 = vld [vmem:[%s379 + $0x18] sm:$0xf]
                  %388 = vst [vmem:[%s380 + $0xc] sm:$0xf] %v387
                $region95: #{ann_forward.1} parent=82 // loop_footer
                  %s378 = sadd.s32 1, %s374
                $region96: #{ann_forward.1} parent=82 // loop_footer_branch
                  %373 = sbr.rel target = $region92
                $region97: #{ann_forward.1} parent=82 // loop_exit
                  _
              $region83: #{ann_forward.1} parent=67 // pred_fallthru
                _
            $region68: #{ann_forward.1} parent=63 // pred_fallthru
              _
            // Predicated region
            $region69: #{ann_forward.1} parent=63 // pred_check
              _
            $region70: #{ann_forward.1} parent=63 // pred_check_branch
              %344 = sbr.rel (0) target = $region72
            $region71: #{ann_forward.1} parent=63 // pred_region
              loop: start=0, step=1, limit=1
              $region73: #{ann_forward.1} parent=71 // loop_pre_header
                _
              $region74: #{ann_forward.1} parent=71 // loop_header
                %s347 = sphi 0, %s351
                %p348 = scmp.ge.s32.totalorder %s347, 1
                %s352 = sphi %s338, %s338
                %s353 = sphi %s336, %s336
              $region75: #{ann_forward.1} parent=71 // loop_header_branch
                %350 = sbr.rel (%p348) target = $region79
              $region76: #{ann_forward.1} parent=71 // loop_body
                %v354 = vld [vmem:[%s352] sm:$0xf]
                %355 = vst [vmem:[%s353] sm:$0xf] %v354
                %v356 = vld [vmem:[%s352 + $0x8] sm:$0xf]
                %357 = vst [vmem:[%s353 + $0x4] sm:$0xf] %v356
                %v358 = vld [vmem:[%s352 + $0x10] sm:$0xf]
                %359 = vst [vmem:[%s353 + $0x8] sm:$0xf] %v358
                %v360 = vld [vmem:[%s352 + $0x18] sm:$0xf]
                %361 = vst [vmem:[%s353 + $0xc] sm:$0xf] %v360
              $region77: #{ann_forward.1} parent=71 // loop_footer
                %s351 = sadd.s32 1, %s347
              $region78: #{ann_forward.1} parent=71 // loop_footer_branch
                %346 = sbr.rel target = $region74
              $region79: #{ann_forward.1} parent=71 // loop_exit
                _
            $region72: #{ann_forward.1} parent=63 // pred_fallthru
              _
          $region64: #{ann_forward.1} parent=59 // pred_fallthru
            _
          %389 = vnop
        $region60: #{ann_forward.1} parent=55 // pred_fallthru
          _
      $region56: #{ann_forward.1} parent=5 // pred_fallthru
        _
      %p390 = scmp.le.s32.totalorder 1, %s19
      %p391 = scmp.lt.s32.totalorder %s19, 3
      %p392 = pnand %p390, %p391
      %p393 = pneg %p392
      // Predicated region
      $region98: #{ann_forward.1} parent=5 // pred_check
        _
      $region99: #{ann_forward.1} parent=5 // pred_check_branch
        %395 = sbr.rel (%p392) target = $region101
      $region100: #{ann_forward.1} parent=5 // pred_region
        %s396 = ssub.s32 %s19, 1
        %s397 = sand.u32 %s32, 1
        %s398 = sand.u32 %s32, 1
        %s399 = smul.addr %s398, 16
        %s400 = scalar_lea.vmem [#allocation3], %s399
        // Predicated region
        $region102: #{ann_forward.1} parent=100 // pred_check
          %p401 = pneg %p45
        $region103: #{ann_forward.1} parent=100 // pred_check_branch
          %403 = sbr.rel (%p401) target = $region105
        $region104: #{ann_forward.1} parent=100 // pred_region
          _
        $region105: #{ann_forward.1} parent=100 // pred_fallthru
          _
        %s404 = sand.u32 %s32, 1
        %s405 = sand.u32 %s32, 1
        %s406 = smul.addr %s405, 16
        %s407 = scalar_lea.vmem [#allocation3], %s406
        %p408 = pneg %p45
        %p409 = pneg %p42
        %p410 = pneg %p66
        %p411 = pneg %p63
        %p412 = pneg %p87
        %p413 = pneg %p84
        %p414 = pneg %p108
        %p415 = pneg %p105
        %p416 = pneg %p129
        %p417 = pneg %p126
        %p418 = pneg %p150
        %p419 = pneg %p147
        %p420 = pneg %p171
        %p421 = pneg %p168
        %p422 = pneg %p192
        %p423 = pneg %p189
        %p424 = pneg %p213
        %p425 = pneg %p210
        %p426 = pneg %p234
        %p427 = pneg %p231
        %p428 = pneg %p255
        %p429 = pneg %p252
        %p430 = pneg %p281
        %p431 = pneg %p278
        %p432 = scmp.lt.s32.totalorder %s24, 1
        %s433 = scalar_select %p432, %s24, 1
        %s434 = scalar_lea.vmem %s11, %s433
        %p435 = scmp.lt.s32.totalorder %s24, 1
        %s436 = scalar_select %p435, %s24, 1
        %s437 = scalar_lea.vmem %s11, %s436
        %v439 = vld [vmem:[%s400] sm:$0xf]
        %v440 = vld [vmem:[%s400 + $0x4] sm:$0xf]
        %v441 = vld [vmem:[%s400 + $0x8] sm:$0xf]
        %v442 = vld [vmem:[%s400 + $0xc] sm:$0xf]
        %v443 = vld [vmem:[%s1] sm:$0xf]
        %v444 = vld [vmem:[%s1 + $0x4] sm:$0xf]
        %v445 = vld [vmem:[%s1 + $0x8] sm:$0xf]
        %v446 = vld [vmem:[%s1 + $0xc] sm:$0xf]
        %v447 = vld [vmem:[%s1 + $0x10] sm:$0xf]
        %v448 = vld [vmem:[%s1 + $0x14] sm:$0xf]
        %v449 = vld [vmem:[%s1 + $0x18] sm:$0xf]
        %v450 = vld [vmem:[%s1 + $0x1c] sm:$0xf]
        %v451 = vld [vmem:[%s1 + $0x20] sm:$0xf]
        %v452 = vld [vmem:[%s1 + $0x24] sm:$0xf]
        %v453 = vld [vmem:[%s1 + $0x28] sm:$0xf]
        %v454 = vld [vmem:[%s1 + $0x2c] sm:$0xf]
        %v455 = vld [vmem:[%s1 + $0x30] sm:$0xf]
        %v456 = vld [vmem:[%s1 + $0x34] sm:$0xf]
        %v457 = vld [vmem:[%s1 + $0x38] sm:$0xf]
        %v458 = vld [vmem:[%s1 + $0x3c] sm:$0xf]
        %v459 = vld [vmem:[%s1 + $0x40] sm:$0xf]
        %v460 = vld [vmem:[%s1 + $0x44] sm:$0xf]
        %v461 = vld [vmem:[%s1 + $0x48] sm:$0xf]
        %v462 = vld [vmem:[%s1 + $0x4c] sm:$0xf]
        %v463 = vld [vmem:[%s1 + $0x50] sm:$0xf]
        %v464 = vld [vmem:[%s1 + $0x54] sm:$0xf]
        %v465 = vld [vmem:[%s1 + $0x58] sm:$0xf]
        %v466 = vld [vmem:[%s1 + $0x5c] sm:$0xf]
        %v467 = vld [vmem:[%s1 + $0x60] sm:$0xf]
        %v468 = vld [vmem:[%s1 + $0x64] sm:$0xf]
        %v469 = vld [vmem:[%s1 + $0x68] sm:$0xf]
        %v470 = vld [vmem:[%s1 + $0x6c] sm:$0xf]
        %v471 = vld [vmem:[%s1 + $0x70] sm:$0xf]
        %v472 = vld [vmem:[%s1 + $0x74] sm:$0xf]
        %v473 = vld [vmem:[%s1 + $0x78] sm:$0xf]
        %v474 = vld [vmem:[%s1 + $0x7c] sm:$0xf]
        %v475 = vld [vmem:[%s1 + $0x80] sm:$0xf]
        %v476 = vld [vmem:[%s1 + $0x84] sm:$0xf]
        %v477 = vld [vmem:[%s1 + $0x88] sm:$0xf]
        %v478 = vld [vmem:[%s1 + $0x8c] sm:$0xf]
        %v479 = vld [vmem:[%s1 + $0x90] sm:$0xf]
        %v480 = vld [vmem:[%s1 + $0x94] sm:$0xf]
        %v481 = vld [vmem:[%s1 + $0x98] sm:$0xf]
        %v482 = vld [vmem:[%s1 + $0x9c] sm:$0xf]
        %v483 = vld [vmem:[%s1 + $0xa0] sm:$0xf]
        %v484 = vld [vmem:[%s1 + $0xa4] sm:$0xf]
        %v485 = vld [vmem:[%s1 + $0xa8] sm:$0xf]
        %v486 = vld [vmem:[%s1 + $0xac] sm:$0xf]
        %v487 = vld [vmem:[%s1 + $0xb0] sm:$0xf]
        %v488 = vld [vmem:[%s1 + $0xb4] sm:$0xf]
        %v489 = vld [vmem:[%s1 + $0xb8] sm:$0xf]
        %v490 = vld [vmem:[%s1 + $0xbc] sm:$0xf]
        %v491 = vld [vmem:[%s1 + $0xc0] sm:$0xf]
        %v492 = vld [vmem:[%s1 + $0xc4] sm:$0xf]
        %v493 = vld [vmem:[%s1 + $0xc8] sm:$0xf]
        %v494 = vld [vmem:[%s1 + $0xcc] sm:$0xf]
        %v495 = vld [vmem:[%s1 + $0xd0] sm:$0xf]
        %v496 = vld [vmem:[%s1 + $0xd4] sm:$0xf]
        %v497 = vld [vmem:[%s1 + $0xd8] sm:$0xf]
        %v498 = vld [vmem:[%s1 + $0xdc] sm:$0xf]
        %v499 = vld [vmem:[%s1 + $0xe0] sm:$0xf]
        %v500 = vld [vmem:[%s1 + $0xe4] sm:$0xf]
        %v501 = vld [vmem:[%s1 + $0xe8] sm:$0xf]
        %v502 = vld [vmem:[%s1 + $0xec] sm:$0xf]
        %v503 = vld [vmem:[%s1 + $0xf0] sm:$0xf]
        %v504 = vld [vmem:[%s1 + $0xf4] sm:$0xf]
        %v505 = vld [vmem:[%s1 + $0xf8] sm:$0xf]
        %v506 = vld [vmem:[%s1 + $0xfc] sm:$0xf]
        %v507 = vld [vmem:[%s1 + $0x100] sm:$0xf]
        %v508 = vld [vmem:[%s1 + $0x104] sm:$0xf]
        %v509 = vld [vmem:[%s1 + $0x108] sm:$0xf]
        %v510 = vld [vmem:[%s1 + $0x10c] sm:$0xf]
        %v511 = vld [vmem:[%s1 + $0x110] sm:$0xf]
        %v512 = vld [vmem:[%s1 + $0x114] sm:$0xf]
        %v513 = vld [vmem:[%s1 + $0x118] sm:$0xf]
        %v514 = vld [vmem:[%s1 + $0x11c] sm:$0xf]
        %v515 = vld [vmem:[%s1 + $0x120] sm:$0xf]
        %v516 = vld [vmem:[%s1 + $0x124] sm:$0xf]
        %v517 = vld [vmem:[%s1 + $0x128] sm:$0xf]
        %v518 = vld [vmem:[%s1 + $0x12c] sm:$0xf]
        %v519 = vld [vmem:[%s1 + $0x130] sm:$0xf]
        %v520 = vld [vmem:[%s1 + $0x134] sm:$0xf]
        %v521 = vld [vmem:[%s1 + $0x138] sm:$0xf]
        %v522 = vld [vmem:[%s1 + $0x13c] sm:$0xf]
        %v523 = vld [vmem:[%s1 + $0x140] sm:$0xf]
        %v524 = vld [vmem:[%s1 + $0x144] sm:$0xf]
        %v525 = vld [vmem:[%s1 + $0x148] sm:$0xf]
        %v526 = vld [vmem:[%s1 + $0x14c] sm:$0xf]
        %v527 = vld [vmem:[%s1 + $0x150] sm:$0xf]
        %v528 = vld [vmem:[%s1 + $0x154] sm:$0xf]
        %v529 = vld [vmem:[%s1 + $0x158] sm:$0xf]
        %v530 = vld [vmem:[%s1 + $0x15c] sm:$0xf]
        %v531 = vld [vmem:[%s1 + $0x160] sm:$0xf]
        %v532 = vld [vmem:[%s1 + $0x164] sm:$0xf]
        %v533 = vld [vmem:[%s1 + $0x168] sm:$0xf]
        %v534 = vld [vmem:[%s1 + $0x16c] sm:$0xf]
        %v535 = vld [vmem:[%s1 + $0x170] sm:$0xf]
        %v536 = vld [vmem:[%s1 + $0x174] sm:$0xf]
        %v537 = vld [vmem:[%s1 + $0x178] sm:$0xf]
        %v538 = vld [vmem:[%s1 + $0x17c] sm:$0xf]
        %v539 = vld [vmem:[%s1 + $0x180] sm:$0xf]
        %v540 = vld [vmem:[%s1 + $0x184] sm:$0xf]
        %v541 = vld [vmem:[%s1 + $0x188] sm:$0xf]
        %v542 = vld [vmem:[%s1 + $0x18c] sm:$0xf]
        %v543 = vld [vmem:[%s1 + $0x190] sm:$0xf]
        %v544 = vld [vmem:[%s1 + $0x194] sm:$0xf]
        %v545 = vld [vmem:[%s1 + $0x198] sm:$0xf]
        %v546 = vld [vmem:[%s1 + $0x19c] sm:$0xf]
        %v547 = vld [vmem:[%s1 + $0x1a0] sm:$0xf]
        %v548 = vld [vmem:[%s1 + $0x1a4] sm:$0xf]
        %v549 = vld [vmem:[%s1 + $0x1a8] sm:$0xf]
        %v550 = vld [vmem:[%s1 + $0x1ac] sm:$0xf]
        %v551 = vld [vmem:[%s1 + $0x1b0] sm:$0xf]
        %v552 = vld [vmem:[%s1 + $0x1b4] sm:$0xf]
        %v553 = vld [vmem:[%s1 + $0x1b8] sm:$0xf]
        %v554 = vld [vmem:[%s1 + $0x1bc] sm:$0xf]
        %v555 = vld [vmem:[%s1 + $0x1c0] sm:$0xf]
        %v556 = vld [vmem:[%s1 + $0x1c4] sm:$0xf]
        %v557 = vld [vmem:[%s1 + $0x1c8] sm:$0xf]
        %v558 = vld [vmem:[%s1 + $0x1cc] sm:$0xf]
        %v559 = vld [vmem:[%s1 + $0x1d0] sm:$0xf]
        %v560 = vld [vmem:[%s1 + $0x1d4] sm:$0xf]
        %v561 = vld [vmem:[%s1 + $0x1d8] sm:$0xf]
        %v562 = vld [vmem:[%s1 + $0x1dc] sm:$0xf]
        %v563 = vld [vmem:[%s1 + $0x1e0] sm:$0xf]
        %v564 = vld [vmem:[%s1 + $0x1e4] sm:$0xf]
        %v565 = vld [vmem:[%s1 + $0x1e8] sm:$0xf]
        %v566 = vld [vmem:[%s1 + $0x1ec] sm:$0xf]
        %v567 = vld [vmem:[%s1 + $0x1f0] sm:$0xf]
        %v568 = vld [vmem:[%s1 + $0x1f4] sm:$0xf]
        %v569 = vld [vmem:[%s1 + $0x1f8] sm:$0xf]
        %v570 = vld [vmem:[%s1 + $0x1fc] sm:$0xf]
        %v571 = vld [vmem:[%s2] sm:$0xff]
        %v572 = vld [vmem:[%s2 + $0x8] sm:$0xff]
        %v573 = vld [vmem:[%s2 + $0x10] sm:$0xff]
        %v574 = vld [vmem:[%s2 + $0x18] sm:$0xff]
        %v575 = vld [vmem:[%s2 + $0x20] sm:$0xff]
        %v576 = vld [vmem:[%s2 + $0x28] sm:$0xff]
        %v577 = vld [vmem:[%s2 + $0x30] sm:$0xff]
        %v578 = vld [vmem:[%s2 + $0x38] sm:$0xff]
        %v579 = vld [vmem:[%s2 + $0x40] sm:$0xff]
        %v580 = vld [vmem:[%s2 + $0x48] sm:$0xff]
        %v581 = vld [vmem:[%s2 + $0x50] sm:$0xff]
        %v582 = vld [vmem:[%s2 + $0x58] sm:$0xff]
        %v583 = vld [vmem:[%s2 + $0x60] sm:$0xff]
        %v584 = vld [vmem:[%s2 + $0x68] sm:$0xff]
        %v585 = vld [vmem:[%s2 + $0x70] sm:$0xff]
        %v586 = vld [vmem:[%s2 + $0x78] sm:$0xff]
        %v587 = vld [vmem:[%s2 + $0x80] sm:$0xff]
        %v588 = vld [vmem:[%s2 + $0x88] sm:$0xff]
        %v589 = vld [vmem:[%s2 + $0x90] sm:$0xff]
        %v590 = vld [vmem:[%s2 + $0x98] sm:$0xff]
        %v591 = vld [vmem:[%s2 + $0xa0] sm:$0xff]
        %v592 = vld [vmem:[%s2 + $0xa8] sm:$0xff]
        %v593 = vld [vmem:[%s2 + $0xb0] sm:$0xff]
        %v594 = vld [vmem:[%s2 + $0xb8] sm:$0xff]
        %v595 = vld [vmem:[%s2 + $0xc0] sm:$0xff]
        %v596 = vld [vmem:[%s2 + $0xc8] sm:$0xff]
        %v597 = vld [vmem:[%s2 + $0xd0] sm:$0xff]
        %v598 = vld [vmem:[%s2 + $0xd8] sm:$0xff]
        %v599 = vld [vmem:[%s2 + $0xe0] sm:$0xff]
        %v600 = vld [vmem:[%s2 + $0xe8] sm:$0xff]
        %v601 = vld [vmem:[%s2 + $0xf0] sm:$0xff]
        %v602 = vld [vmem:[%s2 + $0xf8] sm:$0xff]
        %v603 = vld [vmem:[%s2 + $0x100] sm:$0xff]
        %v604 = vld [vmem:[%s2 + $0x108] sm:$0xff]
        %v605 = vld [vmem:[%s2 + $0x110] sm:$0xff]
        %v606 = vld [vmem:[%s2 + $0x118] sm:$0xff]
        %v607 = vld [vmem:[%s2 + $0x120] sm:$0xff]
        %v608 = vld [vmem:[%s2 + $0x128] sm:$0xff]
        %v609 = vld [vmem:[%s2 + $0x130] sm:$0xff]
        %v610 = vld [vmem:[%s2 + $0x138] sm:$0xff]
        %v611 = vld [vmem:[%s2 + $0x140] sm:$0xff]
        %v612 = vld [vmem:[%s2 + $0x148] sm:$0xff]
        %v613 = vld [vmem:[%s2 + $0x150] sm:$0xff]
        %v614 = vld [vmem:[%s2 + $0x158] sm:$0xff]
        %v615 = vld [vmem:[%s2 + $0x160] sm:$0xff]
        %v616 = vld [vmem:[%s2 + $0x168] sm:$0xff]
        %v617 = vld [vmem:[%s2 + $0x170] sm:$0xff]
        %v618 = vld [vmem:[%s2 + $0x178] sm:$0xff]
        %v619 = vld [vmem:[%s2 + $0x180] sm:$0xff]
        %v620 = vld [vmem:[%s2 + $0x188] sm:$0xff]
        %v621 = vld [vmem:[%s2 + $0x190] sm:$0xff]
        %v622 = vld [vmem:[%s2 + $0x198] sm:$0xff]
        %v623 = vld [vmem:[%s2 + $0x1a0] sm:$0xff]
        %v624 = vld [vmem:[%s2 + $0x1a8] sm:$0xff]
        %v625 = vld [vmem:[%s2 + $0x1b0] sm:$0xff]
        %v626 = vld [vmem:[%s2 + $0x1b8] sm:$0xff]
        %v627 = vld [vmem:[%s2 + $0x1c0] sm:$0xff]
        %v628 = vld [vmem:[%s2 + $0x1c8] sm:$0xff]
        %v629 = vld [vmem:[%s2 + $0x1d0] sm:$0xff]
        %v630 = vld [vmem:[%s2 + $0x1d8] sm:$0xff]
        %v631 = vld [vmem:[%s2 + $0x1e0] sm:$0xff]
        %v632 = vld [vmem:[%s2 + $0x1e8] sm:$0xff]
        %v633 = vld [vmem:[%s2 + $0x1f0] sm:$0xff]
        %v634 = vld [vmem:[%s2 + $0x1f8] sm:$0xff]
        %v635 = vld [vmem:[%s2 + $0x200] sm:$0xff]
        %v636 = vld [vmem:[%s2 + $0x208] sm:$0xff]
        %v637 = vld [vmem:[%s2 + $0x210] sm:$0xff]
        %v638 = vld [vmem:[%s2 + $0x218] sm:$0xff]
        %v639 = vld [vmem:[%s2 + $0x220] sm:$0xff]
        %v640 = vld [vmem:[%s2 + $0x228] sm:$0xff]
        %v641 = vld [vmem:[%s2 + $0x230] sm:$0xff]
        %v642 = vld [vmem:[%s2 + $0x238] sm:$0xff]
        %v643 = vld [vmem:[%s2 + $0x240] sm:$0xff]
        %v644 = vld [vmem:[%s2 + $0x248] sm:$0xff]
        %v645 = vld [vmem:[%s2 + $0x250] sm:$0xff]
        %v646 = vld [vmem:[%s2 + $0x258] sm:$0xff]
        %v647 = vld [vmem:[%s2 + $0x260] sm:$0xff]
        %v648 = vld [vmem:[%s2 + $0x268] sm:$0xff]
        %v649 = vld [vmem:[%s2 + $0x270] sm:$0xff]
        %v650 = vld [vmem:[%s2 + $0x278] sm:$0xff]
        %v651 = vld [vmem:[%s2 + $0x280] sm:$0xff]
        %v652 = vld [vmem:[%s2 + $0x288] sm:$0xff]
        %v653 = vld [vmem:[%s2 + $0x290] sm:$0xff]
        %v654 = vld [vmem:[%s2 + $0x298] sm:$0xff]
        %v655 = vld [vmem:[%s2 + $0x2a0] sm:$0xff]
        %v656 = vld [vmem:[%s2 + $0x2a8] sm:$0xff]
        %v657 = vld [vmem:[%s2 + $0x2b0] sm:$0xff]
        %v658 = vld [vmem:[%s2 + $0x2b8] sm:$0xff]
        %v659 = vld [vmem:[%s2 + $0x2c0] sm:$0xff]
        %v660 = vld [vmem:[%s2 + $0x2c8] sm:$0xff]
        %v661 = vld [vmem:[%s2 + $0x2d0] sm:$0xff]
        %v662 = vld [vmem:[%s2 + $0x2d8] sm:$0xff]
        %v663 = vld [vmem:[%s2 + $0x2e0] sm:$0xff]
        %v664 = vld [vmem:[%s2 + $0x2e8] sm:$0xff]
        %v665 = vld [vmem:[%s2 + $0x2f0] sm:$0xff]
        %v666 = vld [vmem:[%s2 + $0x2f8] sm:$0xff]
        %v667 = vld [vmem:[%s2 + $0x300] sm:$0xff]
        %v668 = vld [vmem:[%s2 + $0x308] sm:$0xff]
        %v669 = vld [vmem:[%s2 + $0x310] sm:$0xff]
        %v670 = vld [vmem:[%s2 + $0x318] sm:$0xff]
        %v671 = vld [vmem:[%s2 + $0x320] sm:$0xff]
        %v672 = vld [vmem:[%s2 + $0x328] sm:$0xff]
        %v673 = vld [vmem:[%s2 + $0x330] sm:$0xff]
        %v674 = vld [vmem:[%s2 + $0x338] sm:$0xff]
        %v675 = vld [vmem:[%s2 + $0x340] sm:$0xff]
        %v676 = vld [vmem:[%s2 + $0x348] sm:$0xff]
        %v677 = vld [vmem:[%s2 + $0x350] sm:$0xff]
        %v678 = vld [vmem:[%s2 + $0x358] sm:$0xff]
        %v679 = vld [vmem:[%s2 + $0x360] sm:$0xff]
        %v680 = vld [vmem:[%s2 + $0x368] sm:$0xff]
        %v681 = vld [vmem:[%s2 + $0x370] sm:$0xff]
        %v682 = vld [vmem:[%s2 + $0x378] sm:$0xff]
        %v683 = vld [vmem:[%s2 + $0x380] sm:$0xff]
        %v684 = vld [vmem:[%s2 + $0x388] sm:$0xff]
        %v685 = vld [vmem:[%s2 + $0x390] sm:$0xff]
        %v686 = vld [vmem:[%s2 + $0x398] sm:$0xff]
        %v687 = vld [vmem:[%s2 + $0x3a0] sm:$0xff]
        %v688 = vld [vmem:[%s2 + $0x3a8] sm:$0xff]
        %v689 = vld [vmem:[%s2 + $0x3b0] sm:$0xff]
        %v690 = vld [vmem:[%s2 + $0x3b8] sm:$0xff]
        %v691 = vld [vmem:[%s2 + $0x3c0] sm:$0xff]
        %v692 = vld [vmem:[%s2 + $0x3c8] sm:$0xff]
        %v693 = vld [vmem:[%s2 + $0x3d0] sm:$0xff]
        %v694 = vld [vmem:[%s2 + $0x3d8] sm:$0xff]
        %v695 = vld [vmem:[%s2 + $0x3e0] sm:$0xff]
        %v696 = vld [vmem:[%s2 + $0x3e8] sm:$0xff]
        %v697 = vld [vmem:[%s2 + $0x3f0] sm:$0xff]
        %v698 = vld [vmem:[%s2 + $0x3f8] sm:$0xff]
        %700 = vset.pattern.permute.xlu0 0
        %701 = vperm.xlu0 %700, %v571
        %v702 = vpop.permute.xlu0 %701
        %705 = vset.pattern.permute.xlu0 0
        %706 = vperm.xlu0 %705, %v572
        %v707 = vpop.permute.xlu0 %706
        %710 = vset.pattern.permute.xlu0 0
        %711 = vperm.xlu0 %710, %v573
        %v712 = vpop.permute.xlu0 %711
        %715 = vset.pattern.permute.xlu0 0
        %716 = vperm.xlu0 %715, %v574
        %v717 = vpop.permute.xlu0 %716
        %720 = vset.pattern.permute.xlu0 0
        %721 = vperm.xlu0 %720, %v575
        %v722 = vpop.permute.xlu0 %721
        %725 = vset.pattern.permute.xlu0 0
        %726 = vperm.xlu0 %725, %v576
        %v727 = vpop.permute.xlu0 %726
        %730 = vset.pattern.permute.xlu0 0
        %731 = vperm.xlu0 %730, %v577
        %v732 = vpop.permute.xlu0 %731
        %735 = vset.pattern.permute.xlu0 0
        %736 = vperm.xlu0 %735, %v578
        %v737 = vpop.permute.xlu0 %736
        %740 = vset.pattern.permute.xlu0 0
        %741 = vperm.xlu0 %740, %v579
        %v742 = vpop.permute.xlu0 %741
        %745 = vset.pattern.permute.xlu0 0
        %746 = vperm.xlu0 %745, %v580
        %v747 = vpop.permute.xlu0 %746
        %750 = vset.pattern.permute.xlu0 0
        %751 = vperm.xlu0 %750, %v581
        %v752 = vpop.permute.xlu0 %751
        %755 = vset.pattern.permute.xlu0 0
        %756 = vperm.xlu0 %755, %v582
        %v757 = vpop.permute.xlu0 %756
        %760 = vset.pattern.permute.xlu0 0
        %761 = vperm.xlu0 %760, %v583
        %v762 = vpop.permute.xlu0 %761
        %765 = vset.pattern.permute.xlu0 0
        %766 = vperm.xlu0 %765, %v584
        %v767 = vpop.permute.xlu0 %766
        %770 = vset.pattern.permute.xlu0 0
        %771 = vperm.xlu0 %770, %v585
        %v772 = vpop.permute.xlu0 %771
        %775 = vset.pattern.permute.xlu0 0
        %776 = vperm.xlu0 %775, %v586
        %v777 = vpop.permute.xlu0 %776
        %780 = vset.pattern.permute.xlu0 0
        %781 = vperm.xlu0 %780, %v587
        %v782 = vpop.permute.xlu0 %781
        %785 = vset.pattern.permute.xlu0 0
        %786 = vperm.xlu0 %785, %v588
        %v787 = vpop.permute.xlu0 %786
        %790 = vset.pattern.permute.xlu0 0
        %791 = vperm.xlu0 %790, %v589
        %v792 = vpop.permute.xlu0 %791
        %795 = vset.pattern.permute.xlu0 0
        %796 = vperm.xlu0 %795, %v590
        %v797 = vpop.permute.xlu0 %796
        %800 = vset.pattern.permute.xlu0 0
        %801 = vperm.xlu0 %800, %v591
        %v802 = vpop.permute.xlu0 %801
        %805 = vset.pattern.permute.xlu0 0
        %806 = vperm.xlu0 %805, %v592
        %v807 = vpop.permute.xlu0 %806
        %810 = vset.pattern.permute.xlu0 0
        %811 = vperm.xlu0 %810, %v593
        %v812 = vpop.permute.xlu0 %811
        %815 = vset.pattern.permute.xlu0 0
        %816 = vperm.xlu0 %815, %v594
        %v817 = vpop.permute.xlu0 %816
        %820 = vset.pattern.permute.xlu0 0
        %821 = vperm.xlu0 %820, %v595
        %v822 = vpop.permute.xlu0 %821
        %825 = vset.pattern.permute.xlu0 0
        %826 = vperm.xlu0 %825, %v596
        %v827 = vpop.permute.xlu0 %826
        %830 = vset.pattern.permute.xlu0 0
        %831 = vperm.xlu0 %830, %v597
        %v832 = vpop.permute.xlu0 %831
        %835 = vset.pattern.permute.xlu0 0
        %836 = vperm.xlu0 %835, %v598
        %v837 = vpop.permute.xlu0 %836
        %840 = vset.pattern.permute.xlu0 0
        %841 = vperm.xlu0 %840, %v599
        %v842 = vpop.permute.xlu0 %841
        %845 = vset.pattern.permute.xlu0 0
        %846 = vperm.xlu0 %845, %v600
        %v847 = vpop.permute.xlu0 %846
        %850 = vset.pattern.permute.xlu0 0
        %851 = vperm.xlu0 %850, %v601
        %v852 = vpop.permute.xlu0 %851
        %855 = vset.pattern.permute.xlu0 0
        %856 = vperm.xlu0 %855, %v602
        %v857 = vpop.permute.xlu0 %856
        %860 = vset.pattern.permute.xlu0 0
        %861 = vperm.xlu0 %860, %v603
        %v862 = vpop.permute.xlu0 %861
        %865 = vset.pattern.permute.xlu0 0
        %866 = vperm.xlu0 %865, %v604
        %v867 = vpop.permute.xlu0 %866
        %870 = vset.pattern.permute.xlu0 0
        %871 = vperm.xlu0 %870, %v605
        %v872 = vpop.permute.xlu0 %871
        %875 = vset.pattern.permute.xlu0 0
        %876 = vperm.xlu0 %875, %v606
        %v877 = vpop.permute.xlu0 %876
        %880 = vset.pattern.permute.xlu0 0
        %881 = vperm.xlu0 %880, %v607
        %v882 = vpop.permute.xlu0 %881
        %885 = vset.pattern.permute.xlu0 0
        %886 = vperm.xlu0 %885, %v608
        %v887 = vpop.permute.xlu0 %886
        %890 = vset.pattern.permute.xlu0 0
        %891 = vperm.xlu0 %890, %v609
        %v892 = vpop.permute.xlu0 %891
        %895 = vset.pattern.permute.xlu0 0
        %896 = vperm.xlu0 %895, %v610
        %v897 = vpop.permute.xlu0 %896
        %900 = vset.pattern.permute.xlu0 0
        %901 = vperm.xlu0 %900, %v611
        %v902 = vpop.permute.xlu0 %901
        %905 = vset.pattern.permute.xlu0 0
        %906 = vperm.xlu0 %905, %v612
        %v907 = vpop.permute.xlu0 %906
        %910 = vset.pattern.permute.xlu0 0
        %911 = vperm.xlu0 %910, %v613
        %v912 = vpop.permute.xlu0 %911
        %915 = vset.pattern.permute.xlu0 0
        %916 = vperm.xlu0 %915, %v614
        %v917 = vpop.permute.xlu0 %916
        %920 = vset.pattern.permute.xlu0 0
        %921 = vperm.xlu0 %920, %v615
        %v922 = vpop.permute.xlu0 %921
        %925 = vset.pattern.permute.xlu0 0
        %926 = vperm.xlu0 %925, %v616
        %v927 = vpop.permute.xlu0 %926
        %930 = vset.pattern.permute.xlu0 0
        %931 = vperm.xlu0 %930, %v617
        %v932 = vpop.permute.xlu0 %931
        %935 = vset.pattern.permute.xlu0 0
        %936 = vperm.xlu0 %935, %v618
        %v937 = vpop.permute.xlu0 %936
        %940 = vset.pattern.permute.xlu0 0
        %941 = vperm.xlu0 %940, %v619
        %v942 = vpop.permute.xlu0 %941
        %945 = vset.pattern.permute.xlu0 0
        %946 = vperm.xlu0 %945, %v620
        %v947 = vpop.permute.xlu0 %946
        %950 = vset.pattern.permute.xlu0 0
        %951 = vperm.xlu0 %950, %v621
        %v952 = vpop.permute.xlu0 %951
        %955 = vset.pattern.permute.xlu0 0
        %956 = vperm.xlu0 %955, %v622
        %v957 = vpop.permute.xlu0 %956
        %960 = vset.pattern.permute.xlu0 0
        %961 = vperm.xlu0 %960, %v623
        %v962 = vpop.permute.xlu0 %961
        %965 = vset.pattern.permute.xlu0 0
        %966 = vperm.xlu0 %965, %v624
        %v967 = vpop.permute.xlu0 %966
        %970 = vset.pattern.permute.xlu0 0
        %971 = vperm.xlu0 %970, %v625
        %v972 = vpop.permute.xlu0 %971
        %975 = vset.pattern.permute.xlu0 0
        %976 = vperm.xlu0 %975, %v626
        %v977 = vpop.permute.xlu0 %976
        %980 = vset.pattern.permute.xlu0 0
        %981 = vperm.xlu0 %980, %v627
        %v982 = vpop.permute.xlu0 %981
        %985 = vset.pattern.permute.xlu0 0
        %986 = vperm.xlu0 %985, %v628
        %v987 = vpop.permute.xlu0 %986
        %990 = vset.pattern.permute.xlu0 0
        %991 = vperm.xlu0 %990, %v629
        %v992 = vpop.permute.xlu0 %991
        %995 = vset.pattern.permute.xlu0 0
        %996 = vperm.xlu0 %995, %v630
        %v997 = vpop.permute.xlu0 %996
        %1000 = vset.pattern.permute.xlu0 0
        %1001 = vperm.xlu0 %1000, %v631
        %v1002 = vpop.permute.xlu0 %1001
        %1005 = vset.pattern.permute.xlu0 0
        %1006 = vperm.xlu0 %1005, %v632
        %v1007 = vpop.permute.xlu0 %1006
        %1010 = vset.pattern.permute.xlu0 0
        %1011 = vperm.xlu0 %1010, %v633
        %v1012 = vpop.permute.xlu0 %1011
        %1015 = vset.pattern.permute.xlu0 0
        %1016 = vperm.xlu0 %1015, %v634
        %v1017 = vpop.permute.xlu0 %1016
        %1020 = vset.pattern.permute.xlu0 0
        %1021 = vperm.xlu0 %1020, %v635
        %v1022 = vpop.permute.xlu0 %1021
        %1025 = vset.pattern.permute.xlu0 0
        %1026 = vperm.xlu0 %1025, %v636
        %v1027 = vpop.permute.xlu0 %1026
        %1030 = vset.pattern.permute.xlu0 0
        %1031 = vperm.xlu0 %1030, %v637
        %v1032 = vpop.permute.xlu0 %1031
        %1035 = vset.pattern.permute.xlu0 0
        %1036 = vperm.xlu0 %1035, %v638
        %v1037 = vpop.permute.xlu0 %1036
        %1040 = vset.pattern.permute.xlu0 0
        %1041 = vperm.xlu0 %1040, %v639
        %v1042 = vpop.permute.xlu0 %1041
        %1045 = vset.pattern.permute.xlu0 0
        %1046 = vperm.xlu0 %1045, %v640
        %v1047 = vpop.permute.xlu0 %1046
        %1050 = vset.pattern.permute.xlu0 0
        %1051 = vperm.xlu0 %1050, %v641
        %v1052 = vpop.permute.xlu0 %1051
        %1055 = vset.pattern.permute.xlu0 0
        %1056 = vperm.xlu0 %1055, %v642
        %v1057 = vpop.permute.xlu0 %1056
        %1060 = vset.pattern.permute.xlu0 0
        %1061 = vperm.xlu0 %1060, %v643
        %v1062 = vpop.permute.xlu0 %1061
        %1065 = vset.pattern.permute.xlu0 0
        %1066 = vperm.xlu0 %1065, %v644
        %v1067 = vpop.permute.xlu0 %1066
        %1070 = vset.pattern.permute.xlu0 0
        %1071 = vperm.xlu0 %1070, %v645
        %v1072 = vpop.permute.xlu0 %1071
        %1075 = vset.pattern.permute.xlu0 0
        %1076 = vperm.xlu0 %1075, %v646
        %v1077 = vpop.permute.xlu0 %1076
        %1080 = vset.pattern.permute.xlu0 0
        %1081 = vperm.xlu0 %1080, %v647
        %v1082 = vpop.permute.xlu0 %1081
        %1085 = vset.pattern.permute.xlu0 0
        %1086 = vperm.xlu0 %1085, %v648
        %v1087 = vpop.permute.xlu0 %1086
        %1090 = vset.pattern.permute.xlu0 0
        %1091 = vperm.xlu0 %1090, %v649
        %v1092 = vpop.permute.xlu0 %1091
        %1095 = vset.pattern.permute.xlu0 0
        %1096 = vperm.xlu0 %1095, %v650
        %v1097 = vpop.permute.xlu0 %1096
        %1100 = vset.pattern.permute.xlu0 0
        %1101 = vperm.xlu0 %1100, %v651
        %v1102 = vpop.permute.xlu0 %1101
        %1105 = vset.pattern.permute.xlu0 0
        %1106 = vperm.xlu0 %1105, %v652
        %v1107 = vpop.permute.xlu0 %1106
        %1110 = vset.pattern.permute.xlu0 0
        %1111 = vperm.xlu0 %1110, %v653
        %v1112 = vpop.permute.xlu0 %1111
        %1115 = vset.pattern.permute.xlu0 0
        %1116 = vperm.xlu0 %1115, %v654
        %v1117 = vpop.permute.xlu0 %1116
        %1120 = vset.pattern.permute.xlu0 0
        %1121 = vperm.xlu0 %1120, %v655
        %v1122 = vpop.permute.xlu0 %1121
        %1125 = vset.pattern.permute.xlu0 0
        %1126 = vperm.xlu0 %1125, %v656
        %v1127 = vpop.permute.xlu0 %1126
        %1130 = vset.pattern.permute.xlu0 0
        %1131 = vperm.xlu0 %1130, %v657
        %v1132 = vpop.permute.xlu0 %1131
        %1135 = vset.pattern.permute.xlu0 0
        %1136 = vperm.xlu0 %1135, %v658
        %v1137 = vpop.permute.xlu0 %1136
        %1140 = vset.pattern.permute.xlu0 0
        %1141 = vperm.xlu0 %1140, %v659
        %v1142 = vpop.permute.xlu0 %1141
        %1145 = vset.pattern.permute.xlu0 0
        %1146 = vperm.xlu0 %1145, %v660
        %v1147 = vpop.permute.xlu0 %1146
        %1150 = vset.pattern.permute.xlu0 0
        %1151 = vperm.xlu0 %1150, %v661
        %v1152 = vpop.permute.xlu0 %1151
        %1155 = vset.pattern.permute.xlu0 0
        %1156 = vperm.xlu0 %1155, %v662
        %v1157 = vpop.permute.xlu0 %1156
        %1160 = vset.pattern.permute.xlu0 0
        %1161 = vperm.xlu0 %1160, %v663
        %v1162 = vpop.permute.xlu0 %1161
        %1165 = vset.pattern.permute.xlu0 0
        %1166 = vperm.xlu0 %1165, %v664
        %v1167 = vpop.permute.xlu0 %1166
        %1170 = vset.pattern.permute.xlu0 0
        %1171 = vperm.xlu0 %1170, %v665
        %v1172 = vpop.permute.xlu0 %1171
        %1175 = vset.pattern.permute.xlu0 0
        %1176 = vperm.xlu0 %1175, %v666
        %v1177 = vpop.permute.xlu0 %1176
        %1180 = vset.pattern.permute.xlu0 0
        %1181 = vperm.xlu0 %1180, %v667
        %v1182 = vpop.permute.xlu0 %1181
        %1185 = vset.pattern.permute.xlu0 0
        %1186 = vperm.xlu0 %1185, %v668
        %v1187 = vpop.permute.xlu0 %1186
        %1190 = vset.pattern.permute.xlu0 0
        %1191 = vperm.xlu0 %1190, %v669
        %v1192 = vpop.permute.xlu0 %1191
        %1195 = vset.pattern.permute.xlu0 0
        %1196 = vperm.xlu0 %1195, %v670
        %v1197 = vpop.permute.xlu0 %1196
        %1200 = vset.pattern.permute.xlu0 0
        %1201 = vperm.xlu0 %1200, %v671
        %v1202 = vpop.permute.xlu0 %1201
        %1205 = vset.pattern.permute.xlu0 0
        %1206 = vperm.xlu0 %1205, %v672
        %v1207 = vpop.permute.xlu0 %1206
        %1210 = vset.pattern.permute.xlu0 0
        %1211 = vperm.xlu0 %1210, %v673
        %v1212 = vpop.permute.xlu0 %1211
        %1215 = vset.pattern.permute.xlu0 0
        %1216 = vperm.xlu0 %1215, %v674
        %v1217 = vpop.permute.xlu0 %1216
        %1220 = vset.pattern.permute.xlu0 0
        %1221 = vperm.xlu0 %1220, %v675
        %v1222 = vpop.permute.xlu0 %1221
        %1225 = vset.pattern.permute.xlu0 0
        %1226 = vperm.xlu0 %1225, %v676
        %v1227 = vpop.permute.xlu0 %1226
        %1230 = vset.pattern.permute.xlu0 0
        %1231 = vperm.xlu0 %1230, %v677
        %v1232 = vpop.permute.xlu0 %1231
        %1235 = vset.pattern.permute.xlu0 0
        %1236 = vperm.xlu0 %1235, %v678
        %v1237 = vpop.permute.xlu0 %1236
        %1240 = vset.pattern.permute.xlu0 0
        %1241 = vperm.xlu0 %1240, %v679
        %v1242 = vpop.permute.xlu0 %1241
        %1245 = vset.pattern.permute.xlu0 0
        %1246 = vperm.xlu0 %1245, %v680
        %v1247 = vpop.permute.xlu0 %1246
        %1250 = vset.pattern.permute.xlu0 0
        %1251 = vperm.xlu0 %1250, %v681
        %v1252 = vpop.permute.xlu0 %1251
        %1255 = vset.pattern.permute.xlu0 0
        %1256 = vperm.xlu0 %1255, %v682
        %v1257 = vpop.permute.xlu0 %1256
        %1260 = vset.pattern.permute.xlu0 0
        %1261 = vperm.xlu0 %1260, %v683
        %v1262 = vpop.permute.xlu0 %1261
        %1265 = vset.pattern.permute.xlu0 0
        %1266 = vperm.xlu0 %1265, %v684
        %v1267 = vpop.permute.xlu0 %1266
        %1270 = vset.pattern.permute.xlu0 0
        %1271 = vperm.xlu0 %1270, %v685
        %v1272 = vpop.permute.xlu0 %1271
        %1275 = vset.pattern.permute.xlu0 0
        %1276 = vperm.xlu0 %1275, %v686
        %v1277 = vpop.permute.xlu0 %1276
        %1280 = vset.pattern.permute.xlu0 0
        %1281 = vperm.xlu0 %1280, %v687
        %v1282 = vpop.permute.xlu0 %1281
        %1285 = vset.pattern.permute.xlu0 0
        %1286 = vperm.xlu0 %1285, %v688
        %v1287 = vpop.permute.xlu0 %1286
        %1290 = vset.pattern.permute.xlu0 0
        %1291 = vperm.xlu0 %1290, %v689
        %v1292 = vpop.permute.xlu0 %1291
        %1295 = vset.pattern.permute.xlu0 0
        %1296 = vperm.xlu0 %1295, %v690
        %v1297 = vpop.permute.xlu0 %1296
        %1300 = vset.pattern.permute.xlu0 0
        %1301 = vperm.xlu0 %1300, %v691
        %v1302 = vpop.permute.xlu0 %1301
        %1305 = vset.pattern.permute.xlu0 0
        %1306 = vperm.xlu0 %1305, %v692
        %v1307 = vpop.permute.xlu0 %1306
        %1310 = vset.pattern.permute.xlu0 0
        %1311 = vperm.xlu0 %1310, %v693
        %v1312 = vpop.permute.xlu0 %1311
        %1315 = vset.pattern.permute.xlu0 0
        %1316 = vperm.xlu0 %1315, %v694
        %v1317 = vpop.permute.xlu0 %1316
        %1320 = vset.pattern.permute.xlu0 0
        %1321 = vperm.xlu0 %1320, %v695
        %v1322 = vpop.permute.xlu0 %1321
        %1325 = vset.pattern.permute.xlu0 0
        %1326 = vperm.xlu0 %1325, %v696
        %v1327 = vpop.permute.xlu0 %1326
        %1330 = vset.pattern.permute.xlu0 0
        %1331 = vperm.xlu0 %1330, %v697
        %v1332 = vpop.permute.xlu0 %1331
        %1335 = vset.pattern.permute.xlu0 0
        %1336 = vperm.xlu0 %1335, %v698
        %v1337 = vpop.permute.xlu0 %1336
        %v1467 = vunpack.c.l.b16 %v443
        %v1468 = vunpack.c.l.b16 %v444
        %v1469 = vunpack.c.l.b16 %v445
        %v1470 = vunpack.c.l.b16 %v446
        %v1471 = vunpack.c.l.b16 %v447
        %v1472 = vunpack.c.l.b16 %v448
        %v1473 = vunpack.c.l.b16 %v449
        %v1474 = vunpack.c.l.b16 %v450
        %v1475 = vunpack.c.l.b16 %v451
        %v1476 = vunpack.c.l.b16 %v452
        %v1477 = vunpack.c.l.b16 %v453
        %v1478 = vunpack.c.l.b16 %v454
        %v1479 = vunpack.c.l.b16 %v455
        %v1480 = vunpack.c.l.b16 %v456
        %v1481 = vunpack.c.l.b16 %v457
        %v1482 = vunpack.c.l.b16 %v458
        %v1483 = vunpack.c.l.b16 %v459
        %v1484 = vunpack.c.l.b16 %v460
        %v1485 = vunpack.c.l.b16 %v461
        %v1486 = vunpack.c.l.b16 %v462
        %v1487 = vunpack.c.l.b16 %v463
        %v1488 = vunpack.c.l.b16 %v464
        %v1489 = vunpack.c.l.b16 %v465
        %v1490 = vunpack.c.l.b16 %v466
        %v1491 = vunpack.c.l.b16 %v467
        %v1492 = vunpack.c.l.b16 %v468
        %v1493 = vunpack.c.l.b16 %v469
        %v1494 = vunpack.c.l.b16 %v470
        %v1495 = vunpack.c.l.b16 %v471
        %v1496 = vunpack.c.l.b16 %v472
        %v1497 = vunpack.c.l.b16 %v473
        %v1498 = vunpack.c.l.b16 %v474
        %v1499 = vunpack.c.l.b16 %v475
        %v1500 = vunpack.c.l.b16 %v476
        %v1501 = vunpack.c.l.b16 %v477
        %v1502 = vunpack.c.l.b16 %v478
        %v1503 = vunpack.c.l.b16 %v479
        %v1504 = vunpack.c.l.b16 %v480
        %v1505 = vunpack.c.l.b16 %v481
        %v1506 = vunpack.c.l.b16 %v482
        %v1507 = vunpack.c.l.b16 %v483
        %v1508 = vunpack.c.l.b16 %v484
        %v1509 = vunpack.c.l.b16 %v485
        %v1510 = vunpack.c.l.b16 %v486
        %v1511 = vunpack.c.l.b16 %v487
        %v1512 = vunpack.c.l.b16 %v488
        %v1513 = vunpack.c.l.b16 %v489
        %v1514 = vunpack.c.l.b16 %v490
        %v1515 = vunpack.c.l.b16 %v491
        %v1516 = vunpack.c.l.b16 %v492
        %v1517 = vunpack.c.l.b16 %v493
        %v1518 = vunpack.c.l.b16 %v494
        %v1519 = vunpack.c.l.b16 %v495
        %v1520 = vunpack.c.l.b16 %v496
        %v1521 = vunpack.c.l.b16 %v497
        %v1522 = vunpack.c.l.b16 %v498
        %v1523 = vunpack.c.l.b16 %v499
        %v1524 = vunpack.c.l.b16 %v500
        %v1525 = vunpack.c.l.b16 %v501
        %v1526 = vunpack.c.l.b16 %v502
        %v1527 = vunpack.c.l.b16 %v503
        %v1528 = vunpack.c.l.b16 %v504
        %v1529 = vunpack.c.l.b16 %v505
        %v1530 = vunpack.c.l.b16 %v506
        %v1531 = vunpack.c.l.b16 %v507
        %v1532 = vunpack.c.l.b16 %v508
        %v1533 = vunpack.c.l.b16 %v509
        %v1534 = vunpack.c.l.b16 %v510
        %v1535 = vunpack.c.l.b16 %v511
        %v1536 = vunpack.c.l.b16 %v512
        %v1537 = vunpack.c.l.b16 %v513
        %v1538 = vunpack.c.l.b16 %v514
        %v1539 = vunpack.c.l.b16 %v515
        %v1540 = vunpack.c.l.b16 %v516
        %v1541 = vunpack.c.l.b16 %v517
        %v1542 = vunpack.c.l.b16 %v518
        %v1543 = vunpack.c.l.b16 %v519
        %v1544 = vunpack.c.l.b16 %v520
        %v1545 = vunpack.c.l.b16 %v521
        %v1546 = vunpack.c.l.b16 %v522
        %v1547 = vunpack.c.l.b16 %v523
        %v1548 = vunpack.c.l.b16 %v524
        %v1549 = vunpack.c.l.b16 %v525
        %v1550 = vunpack.c.l.b16 %v526
        %v1551 = vunpack.c.l.b16 %v527
        %v1552 = vunpack.c.l.b16 %v528
        %v1553 = vunpack.c.l.b16 %v529
        %v1554 = vunpack.c.l.b16 %v530
        %v1555 = vunpack.c.l.b16 %v531
        %v1556 = vunpack.c.l.b16 %v532
        %v1557 = vunpack.c.l.b16 %v533
        %v1558 = vunpack.c.l.b16 %v534
        %v1559 = vunpack.c.l.b16 %v535
        %v1560 = vunpack.c.l.b16 %v536
        %v1561 = vunpack.c.l.b16 %v537
        %v1562 = vunpack.c.l.b16 %v538
        %v1563 = vunpack.c.l.b16 %v539
        %v1564 = vunpack.c.l.b16 %v540
        %v1565 = vunpack.c.l.b16 %v541
        %v1566 = vunpack.c.l.b16 %v542
        %v1567 = vunpack.c.l.b16 %v543
        %v1568 = vunpack.c.l.b16 %v544
        %v1569 = vunpack.c.l.b16 %v545
        %v1570 = vunpack.c.l.b16 %v546
        %v1571 = vunpack.c.l.b16 %v547
        %v1572 = vunpack.c.l.b16 %v548
        %v1573 = vunpack.c.l.b16 %v549
        %v1574 = vunpack.c.l.b16 %v550
        %v1575 = vunpack.c.l.b16 %v551
        %v1576 = vunpack.c.l.b16 %v552
        %v1577 = vunpack.c.l.b16 %v553
        %v1578 = vunpack.c.l.b16 %v554
        %v1579 = vunpack.c.l.b16 %v555
        %v1580 = vunpack.c.l.b16 %v556
        %v1581 = vunpack.c.l.b16 %v557
        %v1582 = vunpack.c.l.b16 %v558
        %v1583 = vunpack.c.l.b16 %v559
        %v1584 = vunpack.c.l.b16 %v560
        %v1585 = vunpack.c.l.b16 %v561
        %v1586 = vunpack.c.l.b16 %v562
        %v1587 = vunpack.c.l.b16 %v563
        %v1588 = vunpack.c.l.b16 %v564
        %v1589 = vunpack.c.l.b16 %v565
        %v1590 = vunpack.c.l.b16 %v566
        %v1591 = vunpack.c.l.b16 %v567
        %v1592 = vunpack.c.l.b16 %v568
        %v1593 = vunpack.c.l.b16 %v569
        %v1594 = vunpack.c.l.b16 %v570
        %v1595 = vpack.c.b16 %v1468, %v1467
        %v1596 = vpack.c.b16 %v1470, %v1469
        %v1597 = vpack.c.b16 %v1472, %v1471
        %v1598 = vpack.c.b16 %v1474, %v1473
        %v1599 = vpack.c.b16 %v1476, %v1475
        %v1600 = vpack.c.b16 %v1478, %v1477
        %v1601 = vpack.c.b16 %v1480, %v1479
        %v1602 = vpack.c.b16 %v1482, %v1481
        %v1603 = vpack.c.b16 %v1484, %v1483
        %v1604 = vpack.c.b16 %v1486, %v1485
        %v1605 = vpack.c.b16 %v1488, %v1487
        %v1606 = vpack.c.b16 %v1490, %v1489
        %v1607 = vpack.c.b16 %v1492, %v1491
        %v1608 = vpack.c.b16 %v1494, %v1493
        %v1609 = vpack.c.b16 %v1496, %v1495
        %v1610 = vpack.c.b16 %v1498, %v1497
        %v1611 = vpack.c.b16 %v1500, %v1499
        %v1612 = vpack.c.b16 %v1502, %v1501
        %v1613 = vpack.c.b16 %v1504, %v1503
        %v1614 = vpack.c.b16 %v1506, %v1505
        %v1615 = vpack.c.b16 %v1508, %v1507
        %v1616 = vpack.c.b16 %v1510, %v1509
        %v1617 = vpack.c.b16 %v1512, %v1511
        %v1618 = vpack.c.b16 %v1514, %v1513
        %v1619 = vpack.c.b16 %v1516, %v1515
        %v1620 = vpack.c.b16 %v1518, %v1517
        %v1621 = vpack.c.b16 %v1520, %v1519
        %v1622 = vpack.c.b16 %v1522, %v1521
        %v1623 = vpack.c.b16 %v1524, %v1523
        %v1624 = vpack.c.b16 %v1526, %v1525
        %v1625 = vpack.c.b16 %v1528, %v1527
        %v1626 = vpack.c.b16 %v1530, %v1529
        %v1627 = vpack.c.b16 %v1532, %v1531
        %v1628 = vpack.c.b16 %v1534, %v1533
        %v1629 = vpack.c.b16 %v1536, %v1535
        %v1630 = vpack.c.b16 %v1538, %v1537
        %v1631 = vpack.c.b16 %v1540, %v1539
        %v1632 = vpack.c.b16 %v1542, %v1541
        %v1633 = vpack.c.b16 %v1544, %v1543
        %v1634 = vpack.c.b16 %v1546, %v1545
        %v1635 = vpack.c.b16 %v1548, %v1547
        %v1636 = vpack.c.b16 %v1550, %v1549
        %v1637 = vpack.c.b16 %v1552, %v1551
        %v1638 = vpack.c.b16 %v1554, %v1553
        %v1639 = vpack.c.b16 %v1556, %v1555
        %v1640 = vpack.c.b16 %v1558, %v1557
        %v1641 = vpack.c.b16 %v1560, %v1559
        %v1642 = vpack.c.b16 %v1562, %v1561
        %v1643 = vpack.c.b16 %v1564, %v1563
        %v1644 = vpack.c.b16 %v1566, %v1565
        %v1645 = vpack.c.b16 %v1568, %v1567
        %v1646 = vpack.c.b16 %v1570, %v1569
        %v1647 = vpack.c.b16 %v1572, %v1571
        %v1648 = vpack.c.b16 %v1574, %v1573
        %v1649 = vpack.c.b16 %v1576, %v1575
        %v1650 = vpack.c.b16 %v1578, %v1577
        %v1651 = vpack.c.b16 %v1580, %v1579
        %v1652 = vpack.c.b16 %v1582, %v1581
        %v1653 = vpack.c.b16 %v1584, %v1583
        %v1654 = vpack.c.b16 %v1586, %v1585
        %v1655 = vpack.c.b16 %v1588, %v1587
        %v1656 = vpack.c.b16 %v1590, %v1589
        %v1657 = vpack.c.b16 %v1592, %v1591
        %v1658 = vpack.c.b16 %v1594, %v1593
        %v1663 = vunpack.c.l.b16 %v439
        %v1664 = vunpack.c.l.b16 %v440
        %v1665 = vunpack.c.l.b16 %v441
        %v1666 = vunpack.c.l.b16 %v442
        %v1667 = vpack.c.b16 %v1664, %v1663
        %v1668 = vpack.c.b16 %v1666, %v1665
        %vm1671 = vcmask 261120
        %v1673 = vsel %vm1671, %v1595, 0
        %v1676 = vsel %vm1671, %v1596, 0
        %v1679 = vsel %vm1671, %v1597, 0
        %v1682 = vsel %vm1671, %v1598, 0
        %v1685 = vsel %vm1671, %v1599, 0
        %v1688 = vsel %vm1671, %v1600, 0
        %v1691 = vsel %vm1671, %v1601, 0
        %v1694 = vsel %vm1671, %v1602, 0
        %v1697 = vsel %vm1671, %v1603, 0
        %v1700 = vsel %vm1671, %v1604, 0
        %v1703 = vsel %vm1671, %v1605, 0
        %v1706 = vsel %vm1671, %v1606, 0
        %v1709 = vsel %vm1671, %v1607, 0
        %v1712 = vsel %vm1671, %v1608, 0
        %v1715 = vsel %vm1671, %v1609, 0
        %v1718 = vsel %vm1671, %v1610, 0
        %v1721 = vsel %vm1671, %v1611, 0
        %v1724 = vsel %vm1671, %v1612, 0
        %v1727 = vsel %vm1671, %v1613, 0
        %v1730 = vsel %vm1671, %v1614, 0
        %v1733 = vsel %vm1671, %v1615, 0
        %v1736 = vsel %vm1671, %v1616, 0
        %v1739 = vsel %vm1671, %v1617, 0
        %v1742 = vsel %vm1671, %v1618, 0
        %v1745 = vsel %vm1671, %v1619, 0
        %v1748 = vsel %vm1671, %v1620, 0
        %v1751 = vsel %vm1671, %v1621, 0
        %v1754 = vsel %vm1671, %v1622, 0
        %v1757 = vsel %vm1671, %v1623, 0
        %v1760 = vsel %vm1671, %v1624, 0
        %v1763 = vsel %vm1671, %v1625, 0
        %v1766 = vsel %vm1671, %v1626, 0
        %v1769 = vsel %vm1671, %v1627, 0
        %v1772 = vsel %vm1671, %v1628, 0
        %v1775 = vsel %vm1671, %v1629, 0
        %v1778 = vsel %vm1671, %v1630, 0
        %v1781 = vsel %vm1671, %v1631, 0
        %v1784 = vsel %vm1671, %v1632, 0
        %v1787 = vsel %vm1671, %v1633, 0
        %v1790 = vsel %vm1671, %v1634, 0
        %v1793 = vsel %vm1671, %v1635, 0
        %v1796 = vsel %vm1671, %v1636, 0
        %v1799 = vsel %vm1671, %v1637, 0
        %v1802 = vsel %vm1671, %v1638, 0
        %v1805 = vsel %vm1671, %v1639, 0
        %v1808 = vsel %vm1671, %v1640, 0
        %v1811 = vsel %vm1671, %v1641, 0
        %v1814 = vsel %vm1671, %v1642, 0
        %v1817 = vsel %vm1671, %v1643, 0
        %v1820 = vsel %vm1671, %v1644, 0
        %v1823 = vsel %vm1671, %v1645, 0
        %v1826 = vsel %vm1671, %v1646, 0
        %v1829 = vsel %vm1671, %v1647, 0
        %v1832 = vsel %vm1671, %v1648, 0
        %v1835 = vsel %vm1671, %v1649, 0
        %v1838 = vsel %vm1671, %v1650, 0
        %v1841 = vsel %vm1671, %v1651, 0
        %v1844 = vsel %vm1671, %v1652, 0
        %v1847 = vsel %vm1671, %v1653, 0
        %v1850 = vsel %vm1671, %v1654, 0
        %v1853 = vsel %vm1671, %v1655, 0
        %v1856 = vsel %vm1671, %v1656, 0
        %v1859 = vsel %vm1671, %v1657, 0
        %v1862 = vsel %vm1671, %v1658, 0
        %1864 = vmatprep.subr.bf16.mxu0 0
        %1865 = vmatpush1.bf16.msra.mxu0 %v1667
        %1866 = vmatprep.subr.bf16.mxu0 0
        %1867 = vmatpush1.bf16.msra.mxu0 %v1668
        %1868 = vmatprep.subr.bf16.mxu0 0
        %1869 = vmatpush1.bf16.msra.mxu0 0
        %1870 = vmatprep.subr.bf16.mxu0 0
        %1871 = vmatpush1.bf16.msra.mxu0 0
        %1872 = vmatprep.subr.bf16.mxu0 0
        %1873 = vmatpush1.bf16.msra.mxu0 0
        %1874 = vmatprep.subr.bf16.mxu0 0
        %1875 = vmatpush1.bf16.msra.mxu0 0
        %1876 = vmatprep.subr.bf16.mxu0 0
        %1877 = vmatpush1.bf16.msra.mxu0 0
        %1878 = vmatprep.subr.bf16.mxu0 0
        %1879 = vmatpush1.bf16.msra.mxu0 0
        %1880 = vmatprep.subr.bf16.mxu0 0
        %1881 = vmatpush1.bf16.msra.mxu0 0
        %1882 = vmatprep.subr.bf16.mxu0 0
        %1883 = vmatpush1.bf16.msra.mxu0 0
        %1884 = vmatprep.subr.bf16.mxu0 0
        %1885 = vmatpush1.bf16.msra.mxu0 0
        %1886 = vmatprep.subr.bf16.mxu0 0
        %1887 = vmatpush1.bf16.msra.mxu0 0
        %1888 = vmatprep.subr.bf16.mxu0 0
        %1889 = vmatpush1.bf16.msra.mxu0 0
        %1890 = vmatprep.subr.bf16.mxu0 0
        %1891 = vmatpush1.bf16.msra.mxu0 0
        %1892 = vmatprep.subr.bf16.mxu0 0
        %1893 = vmatpush1.bf16.msra.mxu0 0
        %1894 = vmatprep.subr.bf16.mxu0 0
        %1895 = vmatpush1.bf16.msra.mxu0 0
        %1896 = vmatprep.mubr.bf16.mxu0 0
        %1897 = vmatmul.mubr.bf16.gmra.mrb[0].mxu0 %v1673
        %v1898 = vpop.f32.mrb[0].mxu0
        %v1899 = vadd.f32 %v702, %v1898
        %v1900 = vpop.f32.mrb[0].mxu0
        %v1901 = vpop.f32.mrb[0].mxu0
        %v1902 = vadd.f32 %v707, %v1901
        %v1903 = vpop.f32.mrb[0].mxu0
        %1904 = vmatprep.mubr.bf16.mxu0 0
        %1905 = vmatmul.mubr.bf16.gmra.mrb[0].mxu0 %v1676
        %v1906 = vpop.f32.mrb[0].mxu0
        %v1907 = vadd.f32 %v712, %v1906
        %v1908 = vpop.f32.mrb[0].mxu0
        %v1909 = vpop.f32.mrb[0].mxu0
        %v1910 = vadd.f32 %v717, %v1909
        %v1911 = vpop.f32.mrb[0].mxu0
        %1912 = vmatprep.mubr.bf16.mxu0 0
        %1913 = vmatmul.mubr.bf16.gmra.mrb[0].mxu0 %v1679
        %v1914 = vpop.f32.mrb[0].mxu0
        %v1915 = vadd.f32 %v722, %v1914
        %v1916 = vpop.f32.mrb[0].mxu0
        %v1917 = vpop.f32.mrb[0].mxu0
        %v1918 = vadd.f32 %v727, %v1917
        %v1919 = vpop.f32.mrb[0].mxu0
        %1920 = vmatprep.mubr.bf16.mxu0 0
        %1921 = vmatmul.mubr.bf16.gmra.mrb[0].mxu0 %v1682
        %v1922 = vpop.f32.mrb[0].mxu0
        %v1923 = vadd.f32 %v732, %v1922
        %v1924 = vpop.f32.mrb[0].mxu0
        %v1925 = vpop.f32.mrb[0].mxu0
        %v1926 = vadd.f32 %v737, %v1925
        %v1927 = vpop.f32.mrb[0].mxu0
        %1928 = vmatprep.mubr.bf16.mxu0 0
        %1929 = vmatmul.mubr.bf16.gmra.mrb[0].mxu0 %v1685
        %v1930 = vpop.f32.mrb[0].mxu0
        %v1931 = vadd.f32 %v742, %v1930
        %v1932 = vpop.f32.mrb[0].mxu0
        %v1933 = vpop.f32.mrb[0].mxu0
        %v1934 = vadd.f32 %v747, %v1933
        %v1935 = vpop.f32.mrb[0].mxu0
        %1936 = vmatprep.mubr.bf16.mxu0 0
        %1937 = vmatmul.mubr.bf16.gmra.mrb[0].mxu0 %v1688
        %v1938 = vpop.f32.mrb[0].mxu0
        %v1939 = vadd.f32 %v752, %v1938
        %v1940 = vpop.f32.mrb[0].mxu0
        %v1941 = vpop.f32.mrb[0].mxu0
        %v1942 = vadd.f32 %v757, %v1941
        %v1943 = vpop.f32.mrb[0].mxu0
        %1944 = vmatprep.mubr.bf16.mxu0 0
        %1945 = vmatmul.mubr.bf16.gmra.mrb[0].mxu0 %v1691
        %v1946 = vpop.f32.mrb[0].mxu0
        %v1947 = vadd.f32 %v762, %v1946
        %v1948 = vpop.f32.mrb[0].mxu0
        %v1949 = vpop.f32.mrb[0].mxu0
        %v1950 = vadd.f32 %v767, %v1949
        %v1951 = vpop.f32.mrb[0].mxu0
        %1952 = vmatprep.mubr.bf16.mxu0 0
        %1953 = vmatmul.mubr.bf16.gmra.mrb[0].mxu0 %v1694
        %v1954 = vpop.f32.mrb[0].mxu0
        %v1955 = vadd.f32 %v772, %v1954
        %v1956 = vpop.f32.mrb[0].mxu0
        %v1957 = vpop.f32.mrb[0].mxu0
        %v1958 = vadd.f32 %v777, %v1957
        %v1959 = vpop.f32.mrb[0].mxu0
        %1960 = vmatprep.mubr.bf16.mxu0 0
        %1961 = vmatmul.mubr.bf16.gmra.mrb[0].mxu0 %v1697
        %v1962 = vpop.f32.mrb[0].mxu0
        %v1963 = vadd.f32 %v782, %v1962
        %v1964 = vpop.f32.mrb[0].mxu0
        %v1965 = vpop.f32.mrb[0].mxu0
        %v1966 = vadd.f32 %v787, %v1965
        %v1967 = vpop.f32.mrb[0].mxu0
        %1968 = vmatprep.mubr.bf16.mxu0 0
        %1969 = vmatmul.mubr.bf16.gmra.mrb[0].mxu0 %v1700
        %v1970 = vpop.f32.mrb[0].mxu0
        %v1971 = vadd.f32 %v792, %v1970
        %v1972 = vpop.f32.mrb[0].mxu0
        %v1973 = vpop.f32.mrb[0].mxu0
        %v1974 = vadd.f32 %v797, %v1973
        %v1975 = vpop.f32.mrb[0].mxu0
        %1976 = vmatprep.mubr.bf16.mxu0 0
        %1977 = vmatmul.mubr.bf16.gmra.mrb[0].mxu0 %v1703
        %v1978 = vpop.f32.mrb[0].mxu0
        %v1979 = vadd.f32 %v802, %v1978
        %v1980 = vpop.f32.mrb[0].mxu0
        %v1981 = vpop.f32.mrb[0].mxu0
        %v1982 = vadd.f32 %v807, %v1981
        %v1983 = vpop.f32.mrb[0].mxu0
        %1984 = vmatprep.mubr.bf16.mxu0 0
        %1985 = vmatmul.mubr.bf16.gmra.mrb[0].mxu0 %v1706
        %v1986 = vpop.f32.mrb[0].mxu0
        %v1987 = vadd.f32 %v812, %v1986
        %v1988 = vpop.f32.mrb[0].mxu0
        %v1989 = vpop.f32.mrb[0].mxu0
        %v1990 = vadd.f32 %v817, %v1989
        %v1991 = vpop.f32.mrb[0].mxu0
        %1992 = vmatprep.mubr.bf16.mxu0 0
        %1993 = vmatmul.mubr.bf16.gmra.mrb[0].mxu0 %v1709
        %v1994 = vpop.f32.mrb[0].mxu0
        %v1995 = vadd.f32 %v822, %v1994
        %v1996 = vpop.f32.mrb[0].mxu0
        %v1997 = vpop.f32.mrb[0].mxu0
        %v1998 = vadd.f32 %v827, %v1997
        %v1999 = vpop.f32.mrb[0].mxu0
        %2000 = vmatprep.mubr.bf16.mxu0 0
        %2001 = vmatmul.mubr.bf16.gmra.mrb[0].mxu0 %v1712
        %v2002 = vpop.f32.mrb[0].mxu0
        %v2003 = vadd.f32 %v832, %v2002
        %v2004 = vpop.f32.mrb[0].mxu0
        %v2005 = vpop.f32.mrb[0].mxu0
        %v2006 = vadd.f32 %v837, %v2005
        %v2007 = vpop.f32.mrb[0].mxu0
        %2008 = vmatprep.mubr.bf16.mxu0 0
        %2009 = vmatmul.mubr.bf16.gmra.mrb[0].mxu0 %v1715
        %v2010 = vpop.f32.mrb[0].mxu0
        %v2011 = vadd.f32 %v842, %v2010
        %v2012 = vpop.f32.mrb[0].mxu0
        %v2013 = vpop.f32.mrb[0].mxu0
        %v2014 = vadd.f32 %v847, %v2013
        %v2015 = vpop.f32.mrb[0].mxu0
        %2016 = vmatprep.mubr.bf16.mxu0 0
        %2017 = vmatmul.mubr.bf16.gmra.mrb[0].mxu0 %v1718
        %v2018 = vpop.f32.mrb[0].mxu0
        %v2019 = vadd.f32 %v852, %v2018
        %v2020 = vpop.f32.mrb[0].mxu0
        %v2021 = vpop.f32.mrb[0].mxu0
        %v2022 = vadd.f32 %v857, %v2021
        %v2023 = vpop.f32.mrb[0].mxu0
        %2024 = vmatprep.mubr.bf16.mxu0 0
        %2025 = vmatmul.mubr.bf16.gmra.mrb[0].mxu0 %v1721
        %v2026 = vpop.f32.mrb[0].mxu0
        %v2027 = vadd.f32 %v862, %v2026
        %v2028 = vpop.f32.mrb[0].mxu0
        %v2029 = vpop.f32.mrb[0].mxu0
        %v2030 = vadd.f32 %v867, %v2029
        %v2031 = vpop.f32.mrb[0].mxu0
        %2032 = vmatprep.mubr.bf16.mxu0 0
        %2033 = vmatmul.mubr.bf16.gmra.mrb[0].mxu0 %v1724
        %v2034 = vpop.f32.mrb[0].mxu0
        %v2035 = vadd.f32 %v872, %v2034
        %v2036 = vpop.f32.mrb[0].mxu0
        %v2037 = vpop.f32.mrb[0].mxu0
        %v2038 = vadd.f32 %v877, %v2037
        %v2039 = vpop.f32.mrb[0].mxu0
        %2040 = vmatprep.mubr.bf16.mxu0 0
        %2041 = vmatmul.mubr.bf16.gmra.mrb[0].mxu0 %v1727
        %v2042 = vpop.f32.mrb[0].mxu0
        %v2043 = vadd.f32 %v882, %v2042
        %v2044 = vpop.f32.mrb[0].mxu0
        %v2045 = vpop.f32.mrb[0].mxu0
        %v2046 = vadd.f32 %v887, %v2045
        %v2047 = vpop.f32.mrb[0].mxu0
        %2048 = vmatprep.mubr.bf16.mxu0 0
        %2049 = vmatmul.mubr.bf16.gmra.mrb[0].mxu0 %v1730
        %v2050 = vpop.f32.mrb[0].mxu0
        %v2051 = vadd.f32 %v892, %v2050
        %v2052 = vpop.f32.mrb[0].mxu0
        %v2053 = vpop.f32.mrb[0].mxu0
        %v2054 = vadd.f32 %v897, %v2053
        %v2055 = vpop.f32.mrb[0].mxu0
        %2056 = vmatprep.mubr.bf16.mxu0 0
        %2057 = vmatmul.mubr.bf16.gmra.mrb[0].mxu0 %v1733
        %v2058 = vpop.f32.mrb[0].mxu0
        %v2059 = vadd.f32 %v902, %v2058
        %v2060 = vpop.f32.mrb[0].mxu0
        %v2061 = vpop.f32.mrb[0].mxu0
        %v2062 = vadd.f32 %v907, %v2061
        %v2063 = vpop.f32.mrb[0].mxu0
        %2064 = vmatprep.mubr.bf16.mxu0 0
        %2065 = vmatmul.mubr.bf16.gmra.mrb[0].mxu0 %v1736
        %v2066 = vpop.f32.mrb[0].mxu0
        %v2067 = vadd.f32 %v912, %v2066
        %v2068 = vpop.f32.mrb[0].mxu0
        %v2069 = vpop.f32.mrb[0].mxu0
        %v2070 = vadd.f32 %v917, %v2069
        %v2071 = vpop.f32.mrb[0].mxu0
        %2072 = vmatprep.mubr.bf16.mxu0 0
        %2073 = vmatmul.mubr.bf16.gmra.mrb[0].mxu0 %v1739
        %v2074 = vpop.f32.mrb[0].mxu0
        %v2075 = vadd.f32 %v922, %v2074
        %v2076 = vpop.f32.mrb[0].mxu0
        %v2077 = vpop.f32.mrb[0].mxu0
        %v2078 = vadd.f32 %v927, %v2077
        %v2079 = vpop.f32.mrb[0].mxu0
        %2080 = vmatprep.mubr.bf16.mxu0 0
        %2081 = vmatmul.mubr.bf16.gmra.mrb[0].mxu0 %v1742
        %v2082 = vpop.f32.mrb[0].mxu0
        %v2083 = vadd.f32 %v932, %v2082
        %v2084 = vpop.f32.mrb[0].mxu0
        %v2085 = vpop.f32.mrb[0].mxu0
        %v2086 = vadd.f32 %v937, %v2085
        %v2087 = vpop.f32.mrb[0].mxu0
        %2088 = vmatprep.mubr.bf16.mxu0 0
        %2089 = vmatmul.mubr.bf16.gmra.mrb[0].mxu0 %v1745
        %v2090 = vpop.f32.mrb[0].mxu0
        %v2091 = vadd.f32 %v942, %v2090
        %v2092 = vpop.f32.mrb[0].mxu0
        %v2093 = vpop.f32.mrb[0].mxu0
        %v2094 = vadd.f32 %v947, %v2093
        %v2095 = vpop.f32.mrb[0].mxu0
        %2096 = vmatprep.mubr.bf16.mxu0 0
        %2097 = vmatmul.mubr.bf16.gmra.mrb[0].mxu0 %v1748
        %v2098 = vpop.f32.mrb[0].mxu0
        %v2099 = vadd.f32 %v952, %v2098
        %v2100 = vpop.f32.mrb[0].mxu0
        %v2101 = vpop.f32.mrb[0].mxu0
        %v2102 = vadd.f32 %v957, %v2101
        %v2103 = vpop.f32.mrb[0].mxu0
        %2104 = vmatprep.mubr.bf16.mxu0 0
        %2105 = vmatmul.mubr.bf16.gmra.mrb[0].mxu0 %v1751
        %v2106 = vpop.f32.mrb[0].mxu0
        %v2107 = vadd.f32 %v962, %v2106
        %v2108 = vpop.f32.mrb[0].mxu0
        %v2109 = vpop.f32.mrb[0].mxu0
        %v2110 = vadd.f32 %v967, %v2109
        %v2111 = vpop.f32.mrb[0].mxu0
        %2112 = vmatprep.mubr.bf16.mxu0 0
        %2113 = vmatmul.mubr.bf16.gmra.mrb[0].mxu0 %v1754
        %v2114 = vpop.f32.mrb[0].mxu0
        %v2115 = vadd.f32 %v972, %v2114
        %v2116 = vpop.f32.mrb[0].mxu0
        %v2117 = vpop.f32.mrb[0].mxu0
        %v2118 = vadd.f32 %v977, %v2117
        %v2119 = vpop.f32.mrb[0].mxu0
        %2120 = vmatprep.mubr.bf16.mxu0 0
        %2121 = vmatmul.mubr.bf16.gmra.mrb[0].mxu0 %v1757
        %v2122 = vpop.f32.mrb[0].mxu0
        %v2123 = vadd.f32 %v982, %v2122
        %v2124 = vpop.f32.mrb[0].mxu0
        %v2125 = vpop.f32.mrb[0].mxu0
        %v2126 = vadd.f32 %v987, %v2125
        %v2127 = vpop.f32.mrb[0].mxu0
        %2128 = vmatprep.mubr.bf16.mxu0 0
        %2129 = vmatmul.mubr.bf16.gmra.mrb[0].mxu0 %v1760
        %v2130 = vpop.f32.mrb[0].mxu0
        %v2131 = vadd.f32 %v992, %v2130
        %v2132 = vpop.f32.mrb[0].mxu0
        %v2133 = vpop.f32.mrb[0].mxu0
        %v2134 = vadd.f32 %v997, %v2133
        %v2135 = vpop.f32.mrb[0].mxu0
        %2136 = vmatprep.mubr.bf16.mxu0 0
        %2137 = vmatmul.mubr.bf16.gmra.mrb[0].mxu0 %v1763
        %v2138 = vpop.f32.mrb[0].mxu0
        %v2139 = vadd.f32 %v1002, %v2138
        %v2140 = vpop.f32.mrb[0].mxu0
        %v2141 = vpop.f32.mrb[0].mxu0
        %v2142 = vadd.f32 %v1007, %v2141
        %v2143 = vpop.f32.mrb[0].mxu0
        %2144 = vmatprep.mubr.bf16.mxu0 0
        %2145 = vmatmul.mubr.bf16.gmra.mrb[0].mxu0 %v1766
        %v2146 = vpop.f32.mrb[0].mxu0
        %v2147 = vadd.f32 %v1012, %v2146
        %v2148 = vpop.f32.mrb[0].mxu0
        %v2149 = vpop.f32.mrb[0].mxu0
        %v2150 = vadd.f32 %v1017, %v2149
        %v2151 = vpop.f32.mrb[0].mxu0
        %2152 = vmatprep.mubr.bf16.mxu0 0
        %2153 = vmatmul.mubr.bf16.gmra.mrb[0].mxu0 %v1769
        %v2154 = vpop.f32.mrb[0].mxu0
        %v2155 = vadd.f32 %v1022, %v2154
        %v2156 = vpop.f32.mrb[0].mxu0
        %v2157 = vpop.f32.mrb[0].mxu0
        %v2158 = vadd.f32 %v1027, %v2157
        %v2159 = vpop.f32.mrb[0].mxu0
        %2160 = vmatprep.mubr.bf16.mxu0 0
        %2161 = vmatmul.mubr.bf16.gmra.mrb[0].mxu0 %v1772
        %v2162 = vpop.f32.mrb[0].mxu0
        %v2163 = vadd.f32 %v1032, %v2162
        %v2164 = vpop.f32.mrb[0].mxu0
        %v2165 = vpop.f32.mrb[0].mxu0
        %v2166 = vadd.f32 %v1037, %v2165
        %v2167 = vpop.f32.mrb[0].mxu0
        %2168 = vmatprep.mubr.bf16.mxu0 0
        %2169 = vmatmul.mubr.bf16.gmra.mrb[0].mxu0 %v1775
        %v2170 = vpop.f32.mrb[0].mxu0
        %v2171 = vadd.f32 %v1042, %v2170
        %v2172 = vpop.f32.mrb[0].mxu0
        %v2173 = vpop.f32.mrb[0].mxu0
        %v2174 = vadd.f32 %v1047, %v2173
        %v2175 = vpop.f32.mrb[0].mxu0
        %2176 = vmatprep.mubr.bf16.mxu0 0
        %2177 = vmatmul.mubr.bf16.gmra.mrb[0].mxu0 %v1778
        %v2178 = vpop.f32.mrb[0].mxu0
        %v2179 = vadd.f32 %v1052, %v2178
        %v2180 = vpop.f32.mrb[0].mxu0
        %v2181 = vpop.f32.mrb[0].mxu0
        %v2182 = vadd.f32 %v1057, %v2181
        %v2183 = vpop.f32.mrb[0].mxu0
        %2184 = vmatprep.mubr.bf16.mxu0 0
        %2185 = vmatmul.mubr.bf16.gmra.mrb[0].mxu0 %v1781
        %v2186 = vpop.f32.mrb[0].mxu0
        %v2187 = vadd.f32 %v1062, %v2186
        %v2188 = vpop.f32.mrb[0].mxu0
        %v2189 = vpop.f32.mrb[0].mxu0
        %v2190 = vadd.f32 %v1067, %v2189
        %v2191 = vpop.f32.mrb[0].mxu0
        %2192 = vmatprep.mubr.bf16.mxu0 0
        %2193 = vmatmul.mubr.bf16.gmra.mrb[0].mxu0 %v1784
        %v2194 = vpop.f32.mrb[0].mxu0
        %v2195 = vadd.f32 %v1072, %v2194
        %v2196 = vpop.f32.mrb[0].mxu0
        %v2197 = vpop.f32.mrb[0].mxu0
        %v2198 = vadd.f32 %v1077, %v2197
        %v2199 = vpop.f32.mrb[0].mxu0
        %2200 = vmatprep.mubr.bf16.mxu0 0
        %2201 = vmatmul.mubr.bf16.gmra.mrb[0].mxu0 %v1787
        %v2202 = vpop.f32.mrb[0].mxu0
        %v2203 = vadd.f32 %v1082, %v2202
        %v2204 = vpop.f32.mrb[0].mxu0
        %v2205 = vpop.f32.mrb[0].mxu0
        %v2206 = vadd.f32 %v1087, %v2205
        %v2207 = vpop.f32.mrb[0].mxu0
        %2208 = vmatprep.mubr.bf16.mxu0 0
        %2209 = vmatmul.mubr.bf16.gmra.mrb[0].mxu0 %v1790
        %v2210 = vpop.f32.mrb[0].mxu0
        %v2211 = vadd.f32 %v1092, %v2210
        %v2212 = vpop.f32.mrb[0].mxu0
        %v2213 = vpop.f32.mrb[0].mxu0
        %v2214 = vadd.f32 %v1097, %v2213
        %v2215 = vpop.f32.mrb[0].mxu0
        %2216 = vmatprep.mubr.bf16.mxu0 0
        %2217 = vmatmul.mubr.bf16.gmra.mrb[0].mxu0 %v1793
        %v2218 = vpop.f32.mrb[0].mxu0
        %v2219 = vadd.f32 %v1102, %v2218
        %v2220 = vpop.f32.mrb[0].mxu0
        %v2221 = vpop.f32.mrb[0].mxu0
        %v2222 = vadd.f32 %v1107, %v2221
        %v2223 = vpop.f32.mrb[0].mxu0
        %2224 = vmatprep.mubr.bf16.mxu0 0
        %2225 = vmatmul.mubr.bf16.gmra.mrb[0].mxu0 %v1796
        %v2226 = vpop.f32.mrb[0].mxu0
        %v2227 = vadd.f32 %v1112, %v2226
        %v2228 = vpop.f32.mrb[0].mxu0
        %v2229 = vpop.f32.mrb[0].mxu0
        %v2230 = vadd.f32 %v1117, %v2229
        %v2231 = vpop.f32.mrb[0].mxu0
        %2232 = vmatprep.mubr.bf16.mxu0 0
        %2233 = vmatmul.mubr.bf16.gmra.mrb[0].mxu0 %v1799
        %v2234 = vpop.f32.mrb[0].mxu0
        %v2235 = vadd.f32 %v1122, %v2234
        %v2236 = vpop.f32.mrb[0].mxu0
        %v2237 = vpop.f32.mrb[0].mxu0
        %v2238 = vadd.f32 %v1127, %v2237
        %v2239 = vpop.f32.mrb[0].mxu0
        %2240 = vmatprep.mubr.bf16.mxu0 0
        %2241 = vmatmul.mubr.bf16.gmra.mrb[0].mxu0 %v1802
        %v2242 = vpop.f32.mrb[0].mxu0
        %v2243 = vadd.f32 %v1132, %v2242
        %v2244 = vpop.f32.mrb[0].mxu0
        %v2245 = vpop.f32.mrb[0].mxu0
        %v2246 = vadd.f32 %v1137, %v2245
        %v2247 = vpop.f32.mrb[0].mxu0
        %2248 = vmatprep.mubr.bf16.mxu0 0
        %2249 = vmatmul.mubr.bf16.gmra.mrb[0].mxu0 %v1805
        %v2250 = vpop.f32.mrb[0].mxu0
        %v2251 = vadd.f32 %v1142, %v2250
        %v2252 = vpop.f32.mrb[0].mxu0
        %v2253 = vpop.f32.mrb[0].mxu0
        %v2254 = vadd.f32 %v1147, %v2253
        %v2255 = vpop.f32.mrb[0].mxu0
        %2256 = vmatprep.mubr.bf16.mxu0 0
        %2257 = vmatmul.mubr.bf16.gmra.mrb[0].mxu0 %v1808
        %v2258 = vpop.f32.mrb[0].mxu0
        %v2259 = vadd.f32 %v1152, %v2258
        %v2260 = vpop.f32.mrb[0].mxu0
        %v2261 = vpop.f32.mrb[0].mxu0
        %v2262 = vadd.f32 %v1157, %v2261
        %v2263 = vpop.f32.mrb[0].mxu0
        %2264 = vmatprep.mubr.bf16.mxu0 0
        %2265 = vmatmul.mubr.bf16.gmra.mrb[0].mxu0 %v1811
        %v2266 = vpop.f32.mrb[0].mxu0
        %v2267 = vadd.f32 %v1162, %v2266
        %v2268 = vpop.f32.mrb[0].mxu0
        %v2269 = vpop.f32.mrb[0].mxu0
        %v2270 = vadd.f32 %v1167, %v2269
        %v2271 = vpop.f32.mrb[0].mxu0
        %2272 = vmatprep.mubr.bf16.mxu0 0
        %2273 = vmatmul.mubr.bf16.gmra.mrb[0].mxu0 %v1814
        %v2274 = vpop.f32.mrb[0].mxu0
        %v2275 = vadd.f32 %v1172, %v2274
        %v2276 = vpop.f32.mrb[0].mxu0
        %v2277 = vpop.f32.mrb[0].mxu0
        %v2278 = vadd.f32 %v1177, %v2277
        %v2279 = vpop.f32.mrb[0].mxu0
        %2280 = vmatprep.mubr.bf16.mxu0 0
        %2281 = vmatmul.mubr.bf16.gmra.mrb[0].mxu0 %v1817
        %v2282 = vpop.f32.mrb[0].mxu0
        %v2283 = vadd.f32 %v1182, %v2282
        %v2284 = vpop.f32.mrb[0].mxu0
        %v2285 = vpop.f32.mrb[0].mxu0
        %v2286 = vadd.f32 %v1187, %v2285
        %v2287 = vpop.f32.mrb[0].mxu0
        %2288 = vmatprep.mubr.bf16.mxu0 0
        %2289 = vmatmul.mubr.bf16.gmra.mrb[0].mxu0 %v1820
        %v2290 = vpop.f32.mrb[0].mxu0
        %v2291 = vadd.f32 %v1192, %v2290
        %v2292 = vpop.f32.mrb[0].mxu0
        %v2293 = vpop.f32.mrb[0].mxu0
        %v2294 = vadd.f32 %v1197, %v2293
        %v2295 = vpop.f32.mrb[0].mxu0
        %2296 = vmatprep.mubr.bf16.mxu0 0
        %2297 = vmatmul.mubr.bf16.gmra.mrb[0].mxu0 %v1823
        %v2298 = vpop.f32.mrb[0].mxu0
        %v2299 = vadd.f32 %v1202, %v2298
        %v2300 = vpop.f32.mrb[0].mxu0
        %v2301 = vpop.f32.mrb[0].mxu0
        %v2302 = vadd.f32 %v1207, %v2301
        %v2303 = vpop.f32.mrb[0].mxu0
        %2304 = vmatprep.mubr.bf16.mxu0 0
        %2305 = vmatmul.mubr.bf16.gmra.mrb[0].mxu0 %v1826
        %v2306 = vpop.f32.mrb[0].mxu0
        %v2307 = vadd.f32 %v1212, %v2306
        %v2308 = vpop.f32.mrb[0].mxu0
        %v2309 = vpop.f32.mrb[0].mxu0
        %v2310 = vadd.f32 %v1217, %v2309
        %v2311 = vpop.f32.mrb[0].mxu0
        %2312 = vmatprep.mubr.bf16.mxu0 0
        %2313 = vmatmul.mubr.bf16.gmra.mrb[0].mxu0 %v1829
        %v2314 = vpop.f32.mrb[0].mxu0
        %v2315 = vadd.f32 %v1222, %v2314
        %v2316 = vpop.f32.mrb[0].mxu0
        %v2317 = vpop.f32.mrb[0].mxu0
        %v2318 = vadd.f32 %v1227, %v2317
        %v2319 = vpop.f32.mrb[0].mxu0
        %2320 = vmatprep.mubr.bf16.mxu0 0
        %2321 = vmatmul.mubr.bf16.gmra.mrb[0].mxu0 %v1832
        %v2322 = vpop.f32.mrb[0].mxu0
        %v2323 = vadd.f32 %v1232, %v2322
        %v2324 = vpop.f32.mrb[0].mxu0
        %v2325 = vpop.f32.mrb[0].mxu0
        %v2326 = vadd.f32 %v1237, %v2325
        %v2327 = vpop.f32.mrb[0].mxu0
        %2328 = vmatprep.mubr.bf16.mxu0 0
        %2329 = vmatmul.mubr.bf16.gmra.mrb[0].mxu0 %v1835
        %v2330 = vpop.f32.mrb[0].mxu0
        %v2331 = vadd.f32 %v1242, %v2330
        %v2332 = vpop.f32.mrb[0].mxu0
        %v2333 = vpop.f32.mrb[0].mxu0
        %v2334 = vadd.f32 %v1247, %v2333
        %v2335 = vpop.f32.mrb[0].mxu0
        %2336 = vmatprep.mubr.bf16.mxu0 0
        %2337 = vmatmul.mubr.bf16.gmra.mrb[0].mxu0 %v1838
        %v2338 = vpop.f32.mrb[0].mxu0
        %v2339 = vadd.f32 %v1252, %v2338
        %v2340 = vpop.f32.mrb[0].mxu0
        %v2341 = vpop.f32.mrb[0].mxu0
        %v2342 = vadd.f32 %v1257, %v2341
        %v2343 = vpop.f32.mrb[0].mxu0
        %2344 = vmatprep.mubr.bf16.mxu0 0
        %2345 = vmatmul.mubr.bf16.gmra.mrb[0].mxu0 %v1841
        %v2346 = vpop.f32.mrb[0].mxu0
        %v2347 = vadd.f32 %v1262, %v2346
        %v2348 = vpop.f32.mrb[0].mxu0
        %v2349 = vpop.f32.mrb[0].mxu0
        %v2350 = vadd.f32 %v1267, %v2349
        %v2351 = vpop.f32.mrb[0].mxu0
        %2352 = vmatprep.mubr.bf16.mxu0 0
        %2353 = vmatmul.mubr.bf16.gmra.mrb[0].mxu0 %v1844
        %v2354 = vpop.f32.mrb[0].mxu0
        %v2355 = vadd.f32 %v1272, %v2354
        %v2356 = vpop.f32.mrb[0].mxu0
        %v2357 = vpop.f32.mrb[0].mxu0
        %v2358 = vadd.f32 %v1277, %v2357
        %v2359 = vpop.f32.mrb[0].mxu0
        %2360 = vmatprep.mubr.bf16.mxu0 0
        %2361 = vmatmul.mubr.bf16.gmra.mrb[0].mxu0 %v1847
        %v2362 = vpop.f32.mrb[0].mxu0
        %v2363 = vadd.f32 %v1282, %v2362
        %v2364 = vpop.f32.mrb[0].mxu0
        %v2365 = vpop.f32.mrb[0].mxu0
        %v2366 = vadd.f32 %v1287, %v2365
        %v2367 = vpop.f32.mrb[0].mxu0
        %2368 = vmatprep.mubr.bf16.mxu0 0
        %2369 = vmatmul.mubr.bf16.gmra.mrb[0].mxu0 %v1850
        %v2370 = vpop.f32.mrb[0].mxu0
        %v2371 = vadd.f32 %v1292, %v2370
        %v2372 = vpop.f32.mrb[0].mxu0
        %v2373 = vpop.f32.mrb[0].mxu0
        %v2374 = vadd.f32 %v1297, %v2373
        %v2375 = vpop.f32.mrb[0].mxu0
        %2376 = vmatprep.mubr.bf16.mxu0 0
        %2377 = vmatmul.mubr.bf16.gmra.mrb[0].mxu0 %v1853
        %v2378 = vpop.f32.mrb[0].mxu0
        %v2379 = vadd.f32 %v1302, %v2378
        %v2380 = vpop.f32.mrb[0].mxu0
        %v2381 = vpop.f32.mrb[0].mxu0
        %v2382 = vadd.f32 %v1307, %v2381
        %v2383 = vpop.f32.mrb[0].mxu0
        %2384 = vmatprep.mubr.bf16.mxu0 0
        %2385 = vmatmul.mubr.bf16.gmra.mrb[0].mxu0 %v1856
        %v2386 = vpop.f32.mrb[0].mxu0
        %v2387 = vadd.f32 %v1312, %v2386
        %v2388 = vpop.f32.mrb[0].mxu0
        %v2389 = vpop.f32.mrb[0].mxu0
        %v2390 = vadd.f32 %v1317, %v2389
        %v2391 = vpop.f32.mrb[0].mxu0
        %2392 = vmatprep.mubr.bf16.mxu0 0
        %2393 = vmatmul.mubr.bf16.gmra.mrb[0].mxu0 %v1859
        %v2394 = vpop.f32.mrb[0].mxu0
        %v2395 = vadd.f32 %v1322, %v2394
        %v2396 = vpop.f32.mrb[0].mxu0
        %v2397 = vpop.f32.mrb[0].mxu0
        %v2398 = vadd.f32 %v1327, %v2397
        %v2399 = vpop.f32.mrb[0].mxu0
        %2400 = vmatprep.mubr.bf16.mxu0 0
        %2401 = vmatmul.mubr.bf16.gmra.mrb[0].mxu0 %v1862
        %v2402 = vpop.f32.mrb[0].mxu0
        %v2403 = vadd.f32 %v1332, %v2402
        %v2404 = vpop.f32.mrb[0].mxu0
        %v2405 = vpop.f32.mrb[0].mxu0
        %v2406 = vadd.f32 %v1337, %v2405
        %v2407 = vpop.f32.mrb[0].mxu0
        %2408 = vdwg.mxu0
        %v2409 = vmax.f32 %v1899, 0.0
        %v2410 = vmax.f32 %v1902, 0.0
        %v2411 = vmax.f32 %v1907, 0.0
        %v2412 = vmax.f32 %v1910, 0.0
        %v2413 = vmax.f32 %v1915, 0.0
        %v2414 = vmax.f32 %v1918, 0.0
        %v2415 = vmax.f32 %v1923, 0.0
        %v2416 = vmax.f32 %v1926, 0.0
        %v2417 = vmax.f32 %v1931, 0.0
        %v2418 = vmax.f32 %v1934, 0.0
        %v2419 = vmax.f32 %v1939, 0.0
        %v2420 = vmax.f32 %v1942, 0.0
        %v2421 = vmax.f32 %v1947, 0.0
        %v2422 = vmax.f32 %v1950, 0.0
        %v2423 = vmax.f32 %v1955, 0.0
        %v2424 = vmax.f32 %v1958, 0.0
        %v2425 = vmax.f32 %v1963, 0.0
        %v2426 = vmax.f32 %v1966, 0.0
        %v2427 = vmax.f32 %v1971, 0.0
        %v2428 = vmax.f32 %v1974, 0.0
        %v2429 = vmax.f32 %v1979, 0.0
        %v2430 = vmax.f32 %v1982, 0.0
        %v2431 = vmax.f32 %v1987, 0.0
        %v2432 = vmax.f32 %v1990, 0.0
        %v2433 = vmax.f32 %v1995, 0.0
        %v2434 = vmax.f32 %v1998, 0.0
        %v2435 = vmax.f32 %v2003, 0.0
        %v2436 = vmax.f32 %v2006, 0.0
        %v2437 = vmax.f32 %v2011, 0.0
        %v2438 = vmax.f32 %v2014, 0.0
        %v2439 = vmax.f32 %v2019, 0.0
        %v2440 = vmax.f32 %v2022, 0.0
        %v2441 = vmax.f32 %v2027, 0.0
        %v2442 = vmax.f32 %v2030, 0.0
        %v2443 = vmax.f32 %v2035, 0.0
        %v2444 = vmax.f32 %v2038, 0.0
        %v2445 = vmax.f32 %v2043, 0.0
        %v2446 = vmax.f32 %v2046, 0.0
        %v2447 = vmax.f32 %v2051, 0.0
        %v2448 = vmax.f32 %v2054, 0.0
        %v2449 = vmax.f32 %v2059, 0.0
        %v2450 = vmax.f32 %v2062, 0.0
        %v2451 = vmax.f32 %v2067, 0.0
        %v2452 = vmax.f32 %v2070, 0.0
        %v2453 = vmax.f32 %v2075, 0.0
        %v2454 = vmax.f32 %v2078, 0.0
        %v2455 = vmax.f32 %v2083, 0.0
        %v2456 = vmax.f32 %v2086, 0.0
        %v2457 = vmax.f32 %v2091, 0.0
        %v2458 = vmax.f32 %v2094, 0.0
        %v2459 = vmax.f32 %v2099, 0.0
        %v2460 = vmax.f32 %v2102, 0.0
        %v2461 = vmax.f32 %v2107, 0.0
        %v2462 = vmax.f32 %v2110, 0.0
        %v2463 = vmax.f32 %v2115, 0.0
        %v2464 = vmax.f32 %v2118, 0.0
        %v2465 = vmax.f32 %v2123, 0.0
        %v2466 = vmax.f32 %v2126, 0.0
        %v2467 = vmax.f32 %v2131, 0.0
        %v2468 = vmax.f32 %v2134, 0.0
        %v2469 = vmax.f32 %v2139, 0.0
        %v2470 = vmax.f32 %v2142, 0.0
        %v2471 = vmax.f32 %v2147, 0.0
        %v2472 = vmax.f32 %v2150, 0.0
        %v2473 = vmax.f32 %v2155, 0.0
        %v2474 = vmax.f32 %v2158, 0.0
        %v2475 = vmax.f32 %v2163, 0.0
        %v2476 = vmax.f32 %v2166, 0.0
        %v2477 = vmax.f32 %v2171, 0.0
        %v2478 = vmax.f32 %v2174, 0.0
        %v2479 = vmax.f32 %v2179, 0.0
        %v2480 = vmax.f32 %v2182, 0.0
        %v2481 = vmax.f32 %v2187, 0.0
        %v2482 = vmax.f32 %v2190, 0.0
        %v2483 = vmax.f32 %v2195, 0.0
        %v2484 = vmax.f32 %v2198, 0.0
        %v2485 = vmax.f32 %v2203, 0.0
        %v2486 = vmax.f32 %v2206, 0.0
        %v2487 = vmax.f32 %v2211, 0.0
        %v2488 = vmax.f32 %v2214, 0.0
        %v2489 = vmax.f32 %v2219, 0.0
        %v2490 = vmax.f32 %v2222, 0.0
        %v2491 = vmax.f32 %v2227, 0.0
        %v2492 = vmax.f32 %v2230, 0.0
        %v2493 = vmax.f32 %v2235, 0.0
        %v2494 = vmax.f32 %v2238, 0.0
        %v2495 = vmax.f32 %v2243, 0.0
        %v2496 = vmax.f32 %v2246, 0.0
        %v2497 = vmax.f32 %v2251, 0.0
        %v2498 = vmax.f32 %v2254, 0.0
        %v2499 = vmax.f32 %v2259, 0.0
        %v2500 = vmax.f32 %v2262, 0.0
        %v2501 = vmax.f32 %v2267, 0.0
        %v2502 = vmax.f32 %v2270, 0.0
        %v2503 = vmax.f32 %v2275, 0.0
        %v2504 = vmax.f32 %v2278, 0.0
        %v2505 = vmax.f32 %v2283, 0.0
        %v2506 = vmax.f32 %v2286, 0.0
        %v2507 = vmax.f32 %v2291, 0.0
        %v2508 = vmax.f32 %v2294, 0.0
        %v2509 = vmax.f32 %v2299, 0.0
        %v2510 = vmax.f32 %v2302, 0.0
        %v2511 = vmax.f32 %v2307, 0.0
        %v2512 = vmax.f32 %v2310, 0.0
        %v2513 = vmax.f32 %v2315, 0.0
        %v2514 = vmax.f32 %v2318, 0.0
        %v2515 = vmax.f32 %v2323, 0.0
        %v2516 = vmax.f32 %v2326, 0.0
        %v2517 = vmax.f32 %v2331, 0.0
        %v2518 = vmax.f32 %v2334, 0.0
        %v2519 = vmax.f32 %v2339, 0.0
        %v2520 = vmax.f32 %v2342, 0.0
        %v2521 = vmax.f32 %v2347, 0.0
        %v2522 = vmax.f32 %v2350, 0.0
        %v2523 = vmax.f32 %v2355, 0.0
        %v2524 = vmax.f32 %v2358, 0.0
        %v2525 = vmax.f32 %v2363, 0.0
        %v2526 = vmax.f32 %v2366, 0.0
        %v2527 = vmax.f32 %v2371, 0.0
        %v2528 = vmax.f32 %v2374, 0.0
        %v2529 = vmax.f32 %v2379, 0.0
        %v2530 = vmax.f32 %v2382, 0.0
        %v2531 = vmax.f32 %v2387, 0.0
        %v2532 = vmax.f32 %v2390, 0.0
        %v2533 = vmax.f32 %v2395, 0.0
        %v2534 = vmax.f32 %v2398, 0.0
        %v2535 = vmax.f32 %v2403, 0.0
        %v2536 = vmax.f32 %v2406, 0.0
        %v2537 = vld [vmem:[%s3] sm:$0xff]
        %v2538 = vld [vmem:[%s3 + $0x8] sm:$0xff]
        %v2539 = vld [vmem:[%s3 + $0x10] sm:$0xff]
        %v2540 = vld [vmem:[%s3 + $0x18] sm:$0xff]
        %v2541 = vld [vmem:[%s3 + $0x20] sm:$0xff]
        %v2542 = vld [vmem:[%s3 + $0x28] sm:$0xff]
        %v2543 = vld [vmem:[%s3 + $0x30] sm:$0xff]
        %v2544 = vld [vmem:[%s3 + $0x38] sm:$0xff]
        %v2545 = vld [vmem:[%s3 + $0x40] sm:$0xff]
        %v2546 = vld [vmem:[%s3 + $0x48] sm:$0xff]
        %v2547 = vld [vmem:[%s3 + $0x50] sm:$0xff]
        %v2548 = vld [vmem:[%s3 + $0x58] sm:$0xff]
        %v2549 = vld [vmem:[%s3 + $0x60] sm:$0xff]
        %v2550 = vld [vmem:[%s3 + $0x68] sm:$0xff]
        %v2551 = vld [vmem:[%s3 + $0x70] sm:$0xff]
        %v2552 = vld [vmem:[%s3 + $0x78] sm:$0xff]
        %v2553 = vld [vmem:[%s3 + $0x80] sm:$0xff]
        %v2554 = vld [vmem:[%s3 + $0x88] sm:$0xff]
        %v2555 = vld [vmem:[%s3 + $0x90] sm:$0xff]
        %v2556 = vld [vmem:[%s3 + $0x98] sm:$0xff]
        %v2557 = vld [vmem:[%s3 + $0xa0] sm:$0xff]
        %v2558 = vld [vmem:[%s3 + $0xa8] sm:$0xff]
        %v2559 = vld [vmem:[%s3 + $0xb0] sm:$0xff]
        %v2560 = vld [vmem:[%s3 + $0xb8] sm:$0xff]
        %v2561 = vld [vmem:[%s3 + $0xc0] sm:$0xff]
        %v2562 = vld [vmem:[%s3 + $0xc8] sm:$0xff]
        %v2563 = vld [vmem:[%s3 + $0xd0] sm:$0xff]
        %v2564 = vld [vmem:[%s3 + $0xd8] sm:$0xff]
        %v2565 = vld [vmem:[%s3 + $0xe0] sm:$0xff]
        %v2566 = vld [vmem:[%s3 + $0xe8] sm:$0xff]
        %v2567 = vld [vmem:[%s3 + $0xf0] sm:$0xff]
        %v2568 = vld [vmem:[%s3 + $0xf8] sm:$0xff]
        %v2569 = vld [vmem:[%s3 + $0x100] sm:$0xff]
        %v2570 = vld [vmem:[%s3 + $0x108] sm:$0xff]
        %v2571 = vld [vmem:[%s3 + $0x110] sm:$0xff]
        %v2572 = vld [vmem:[%s3 + $0x118] sm:$0xff]
        %v2573 = vld [vmem:[%s3 + $0x120] sm:$0xff]
        %v2574 = vld [vmem:[%s3 + $0x128] sm:$0xff]
        %v2575 = vld [vmem:[%s3 + $0x130] sm:$0xff]
        %v2576 = vld [vmem:[%s3 + $0x138] sm:$0xff]
        %v2577 = vld [vmem:[%s3 + $0x140] sm:$0xff]
        %v2578 = vld [vmem:[%s3 + $0x148] sm:$0xff]
        %v2579 = vld [vmem:[%s3 + $0x150] sm:$0xff]
        %v2580 = vld [vmem:[%s3 + $0x158] sm:$0xff]
        %v2581 = vld [vmem:[%s3 + $0x160] sm:$0xff]
        %v2582 = vld [vmem:[%s3 + $0x168] sm:$0xff]
        %v2583 = vld [vmem:[%s3 + $0x170] sm:$0xff]
        %v2584 = vld [vmem:[%s3 + $0x178] sm:$0xff]
        %v2585 = vld [vmem:[%s3 + $0x180] sm:$0xff]
        %v2586 = vld [vmem:[%s3 + $0x188] sm:$0xff]
        %v2587 = vld [vmem:[%s3 + $0x190] sm:$0xff]
        %v2588 = vld [vmem:[%s3 + $0x198] sm:$0xff]
        %v2589 = vld [vmem:[%s3 + $0x1a0] sm:$0xff]
        %v2590 = vld [vmem:[%s3 + $0x1a8] sm:$0xff]
        %v2591 = vld [vmem:[%s3 + $0x1b0] sm:$0xff]
        %v2592 = vld [vmem:[%s3 + $0x1b8] sm:$0xff]
        %v2593 = vld [vmem:[%s3 + $0x1c0] sm:$0xff]
        %v2594 = vld [vmem:[%s3 + $0x1c8] sm:$0xff]
        %v2595 = vld [vmem:[%s3 + $0x1d0] sm:$0xff]
        %v2596 = vld [vmem:[%s3 + $0x1d8] sm:$0xff]
        %v2597 = vld [vmem:[%s3 + $0x1e0] sm:$0xff]
        %v2598 = vld [vmem:[%s3 + $0x1e8] sm:$0xff]
        %v2599 = vld [vmem:[%s3 + $0x1f0] sm:$0xff]
        %v2600 = vld [vmem:[%s3 + $0x1f8] sm:$0xff]
        %v2601 = vld [vmem:[%s3 + $0x200] sm:$0xff]
        %v2602 = vld [vmem:[%s3 + $0x208] sm:$0xff]
        %v2603 = vld [vmem:[%s3 + $0x210] sm:$0xff]
        %v2604 = vld [vmem:[%s3 + $0x218] sm:$0xff]
        %v2605 = vld [vmem:[%s3 + $0x220] sm:$0xff]
        %v2606 = vld [vmem:[%s3 + $0x228] sm:$0xff]
        %v2607 = vld [vmem:[%s3 + $0x230] sm:$0xff]
        %v2608 = vld [vmem:[%s3 + $0x238] sm:$0xff]
        %v2609 = vld [vmem:[%s3 + $0x240] sm:$0xff]
        %v2610 = vld [vmem:[%s3 + $0x248] sm:$0xff]
        %v2611 = vld [vmem:[%s3 + $0x250] sm:$0xff]
        %v2612 = vld [vmem:[%s3 + $0x258] sm:$0xff]
        %v2613 = vld [vmem:[%s3 + $0x260] sm:$0xff]
        %v2614 = vld [vmem:[%s3 + $0x268] sm:$0xff]
        %v2615 = vld [vmem:[%s3 + $0x270] sm:$0xff]
        %v2616 = vld [vmem:[%s3 + $0x278] sm:$0xff]
        %v2617 = vld [vmem:[%s3 + $0x280] sm:$0xff]
        %v2618 = vld [vmem:[%s3 + $0x288] sm:$0xff]
        %v2619 = vld [vmem:[%s3 + $0x290] sm:$0xff]
        %v2620 = vld [vmem:[%s3 + $0x298] sm:$0xff]
        %v2621 = vld [vmem:[%s3 + $0x2a0] sm:$0xff]
        %v2622 = vld [vmem:[%s3 + $0x2a8] sm:$0xff]
        %v2623 = vld [vmem:[%s3 + $0x2b0] sm:$0xff]
        %v2624 = vld [vmem:[%s3 + $0x2b8] sm:$0xff]
        %v2625 = vld [vmem:[%s3 + $0x2c0] sm:$0xff]
        %v2626 = vld [vmem:[%s3 + $0x2c8] sm:$0xff]
        %v2627 = vld [vmem:[%s3 + $0x2d0] sm:$0xff]
        %v2628 = vld [vmem:[%s3 + $0x2d8] sm:$0xff]
        %v2629 = vld [vmem:[%s3 + $0x2e0] sm:$0xff]
        %v2630 = vld [vmem:[%s3 + $0x2e8] sm:$0xff]
        %v2631 = vld [vmem:[%s3 + $0x2f0] sm:$0xff]
        %v2632 = vld [vmem:[%s3 + $0x2f8] sm:$0xff]
        %v2633 = vld [vmem:[%s3 + $0x300] sm:$0xff]
        %v2634 = vld [vmem:[%s3 + $0x308] sm:$0xff]
        %v2635 = vld [vmem:[%s3 + $0x310] sm:$0xff]
        %v2636 = vld [vmem:[%s3 + $0x318] sm:$0xff]
        %v2637 = vld [vmem:[%s3 + $0x320] sm:$0xff]
        %v2638 = vld [vmem:[%s3 + $0x328] sm:$0xff]
        %v2639 = vld [vmem:[%s3 + $0x330] sm:$0xff]
        %v2640 = vld [vmem:[%s3 + $0x338] sm:$0xff]
        %v2641 = vld [vmem:[%s3 + $0x340] sm:$0xff]
        %v2642 = vld [vmem:[%s3 + $0x348] sm:$0xff]
        %v2643 = vld [vmem:[%s3 + $0x350] sm:$0xff]
        %v2644 = vld [vmem:[%s3 + $0x358] sm:$0xff]
        %v2645 = vld [vmem:[%s3 + $0x360] sm:$0xff]
        %v2646 = vld [vmem:[%s3 + $0x368] sm:$0xff]
        %v2647 = vld [vmem:[%s3 + $0x370] sm:$0xff]
        %v2648 = vld [vmem:[%s3 + $0x378] sm:$0xff]
        %v2649 = vld [vmem:[%s3 + $0x380] sm:$0xff]
        %v2650 = vld [vmem:[%s3 + $0x388] sm:$0xff]
        %v2651 = vld [vmem:[%s3 + $0x390] sm:$0xff]
        %v2652 = vld [vmem:[%s3 + $0x398] sm:$0xff]
        %v2653 = vld [vmem:[%s3 + $0x3a0] sm:$0xff]
        %v2654 = vld [vmem:[%s3 + $0x3a8] sm:$0xff]
        %v2655 = vld [vmem:[%s3 + $0x3b0] sm:$0xff]
        %v2656 = vld [vmem:[%s3 + $0x3b8] sm:$0xff]
        %v2657 = vld [vmem:[%s3 + $0x3c0] sm:$0xff]
        %v2658 = vld [vmem:[%s3 + $0x3c8] sm:$0xff]
        %v2659 = vld [vmem:[%s3 + $0x3d0] sm:$0xff]
        %v2660 = vld [vmem:[%s3 + $0x3d8] sm:$0xff]
        %v2661 = vld [vmem:[%s3 + $0x3e0] sm:$0xff]
        %v2662 = vld [vmem:[%s3 + $0x3e8] sm:$0xff]
        %v2663 = vld [vmem:[%s3 + $0x3f0] sm:$0xff]
        %v2664 = vld [vmem:[%s3 + $0x3f8] sm:$0xff]
        %v2665 = vld [vmem:[%s3 + $0x400] sm:$0xff]
        %v2666 = vld [vmem:[%s3 + $0x408] sm:$0xff]
        %v2667 = vld [vmem:[%s3 + $0x410] sm:$0xff]
        %v2668 = vld [vmem:[%s3 + $0x418] sm:$0xff]
        %v2669 = vld [vmem:[%s3 + $0x420] sm:$0xff]
        %v2670 = vld [vmem:[%s3 + $0x428] sm:$0xff]
        %v2671 = vld [vmem:[%s3 + $0x430] sm:$0xff]
        %v2672 = vld [vmem:[%s3 + $0x438] sm:$0xff]
        %v2673 = vld [vmem:[%s3 + $0x440] sm:$0xff]
        %v2674 = vld [vmem:[%s3 + $0x448] sm:$0xff]
        %v2675 = vld [vmem:[%s3 + $0x450] sm:$0xff]
        %v2676 = vld [vmem:[%s3 + $0x458] sm:$0xff]
        %v2677 = vld [vmem:[%s3 + $0x460] sm:$0xff]
        %v2678 = vld [vmem:[%s3 + $0x468] sm:$0xff]
        %v2679 = vld [vmem:[%s3 + $0x470] sm:$0xff]
        %v2680 = vld [vmem:[%s3 + $0x478] sm:$0xff]
        %v2681 = vld [vmem:[%s3 + $0x480] sm:$0xff]
        %v2682 = vld [vmem:[%s3 + $0x488] sm:$0xff]
        %v2683 = vld [vmem:[%s3 + $0x490] sm:$0xff]
        %v2684 = vld [vmem:[%s3 + $0x498] sm:$0xff]
        %v2685 = vld [vmem:[%s3 + $0x4a0] sm:$0xff]
        %v2686 = vld [vmem:[%s3 + $0x4a8] sm:$0xff]
        %v2687 = vld [vmem:[%s3 + $0x4b0] sm:$0xff]
        %v2688 = vld [vmem:[%s3 + $0x4b8] sm:$0xff]
        %v2689 = vld [vmem:[%s3 + $0x4c0] sm:$0xff]
        %v2690 = vld [vmem:[%s3 + $0x4c8] sm:$0xff]
        %v2691 = vld [vmem:[%s3 + $0x4d0] sm:$0xff]
        %v2692 = vld [vmem:[%s3 + $0x4d8] sm:$0xff]
        %v2693 = vld [vmem:[%s3 + $0x4e0] sm:$0xff]
        %v2694 = vld [vmem:[%s3 + $0x4e8] sm:$0xff]
        %v2695 = vld [vmem:[%s3 + $0x4f0] sm:$0xff]
        %v2696 = vld [vmem:[%s3 + $0x4f8] sm:$0xff]
        %v2697 = vld [vmem:[%s3 + $0x500] sm:$0xff]
        %v2698 = vld [vmem:[%s3 + $0x508] sm:$0xff]
        %v2699 = vld [vmem:[%s3 + $0x510] sm:$0xff]
        %v2700 = vld [vmem:[%s3 + $0x518] sm:$0xff]
        %v2701 = vld [vmem:[%s3 + $0x520] sm:$0xff]
        %v2702 = vld [vmem:[%s3 + $0x528] sm:$0xff]
        %v2703 = vld [vmem:[%s3 + $0x530] sm:$0xff]
        %v2704 = vld [vmem:[%s3 + $0x538] sm:$0xff]
        %v2705 = vld [vmem:[%s3 + $0x540] sm:$0xff]
        %v2706 = vld [vmem:[%s3 + $0x548] sm:$0xff]
        %v2707 = vld [vmem:[%s3 + $0x550] sm:$0xff]
        %v2708 = vld [vmem:[%s3 + $0x558] sm:$0xff]
        %v2709 = vld [vmem:[%s3 + $0x560] sm:$0xff]
        %v2710 = vld [vmem:[%s3 + $0x568] sm:$0xff]
        %v2711 = vld [vmem:[%s3 + $0x570] sm:$0xff]
        %v2712 = vld [vmem:[%s3 + $0x578] sm:$0xff]
        %v2713 = vld [vmem:[%s3 + $0x580] sm:$0xff]
        %v2714 = vld [vmem:[%s3 + $0x588] sm:$0xff]
        %v2715 = vld [vmem:[%s3 + $0x590] sm:$0xff]
        %v2716 = vld [vmem:[%s3 + $0x598] sm:$0xff]
        %v2717 = vld [vmem:[%s3 + $0x5a0] sm:$0xff]
        %v2718 = vld [vmem:[%s3 + $0x5a8] sm:$0xff]
        %v2719 = vld [vmem:[%s3 + $0x5b0] sm:$0xff]
        %v2720 = vld [vmem:[%s3 + $0x5b8] sm:$0xff]
        %v2721 = vld [vmem:[%s3 + $0x5c0] sm:$0xff]
        %v2722 = vld [vmem:[%s3 + $0x5c8] sm:$0xff]
        %v2723 = vld [vmem:[%s3 + $0x5d0] sm:$0xff]
        %v2724 = vld [vmem:[%s3 + $0x5d8] sm:$0xff]
        %v2725 = vld [vmem:[%s3 + $0x5e0] sm:$0xff]
        %v2726 = vld [vmem:[%s3 + $0x5e8] sm:$0xff]
        %v2727 = vld [vmem:[%s3 + $0x5f0] sm:$0xff]
        %v2728 = vld [vmem:[%s3 + $0x5f8] sm:$0xff]
        %v2729 = vld [vmem:[%s3 + $0x600] sm:$0xff]
        %v2730 = vld [vmem:[%s3 + $0x608] sm:$0xff]
        %v2731 = vld [vmem:[%s3 + $0x610] sm:$0xff]
        %v2732 = vld [vmem:[%s3 + $0x618] sm:$0xff]
        %v2733 = vld [vmem:[%s3 + $0x620] sm:$0xff]
        %v2734 = vld [vmem:[%s3 + $0x628] sm:$0xff]
        %v2735 = vld [vmem:[%s3 + $0x630] sm:$0xff]
        %v2736 = vld [vmem:[%s3 + $0x638] sm:$0xff]
        %v2737 = vld [vmem:[%s3 + $0x640] sm:$0xff]
        %v2738 = vld [vmem:[%s3 + $0x648] sm:$0xff]
        %v2739 = vld [vmem:[%s3 + $0x650] sm:$0xff]
        %v2740 = vld [vmem:[%s3 + $0x658] sm:$0xff]
        %v2741 = vld [vmem:[%s3 + $0x660] sm:$0xff]
        %v2742 = vld [vmem:[%s3 + $0x668] sm:$0xff]
        %v2743 = vld [vmem:[%s3 + $0x670] sm:$0xff]
        %v2744 = vld [vmem:[%s3 + $0x678] sm:$0xff]
        %v2745 = vld [vmem:[%s3 + $0x680] sm:$0xff]
        %v2746 = vld [vmem:[%s3 + $0x688] sm:$0xff]
        %v2747 = vld [vmem:[%s3 + $0x690] sm:$0xff]
        %v2748 = vld [vmem:[%s3 + $0x698] sm:$0xff]
        %v2749 = vld [vmem:[%s3 + $0x6a0] sm:$0xff]
        %v2750 = vld [vmem:[%s3 + $0x6a8] sm:$0xff]
        %v2751 = vld [vmem:[%s3 + $0x6b0] sm:$0xff]
        %v2752 = vld [vmem:[%s3 + $0x6b8] sm:$0xff]
        %v2753 = vld [vmem:[%s3 + $0x6c0] sm:$0xff]
        %v2754 = vld [vmem:[%s3 + $0x6c8] sm:$0xff]
        %v2755 = vld [vmem:[%s3 + $0x6d0] sm:$0xff]
        %v2756 = vld [vmem:[%s3 + $0x6d8] sm:$0xff]
        %v2757 = vld [vmem:[%s3 + $0x6e0] sm:$0xff]
        %v2758 = vld [vmem:[%s3 + $0x6e8] sm:$0xff]
        %v2759 = vld [vmem:[%s3 + $0x6f0] sm:$0xff]
        %v2760 = vld [vmem:[%s3 + $0x6f8] sm:$0xff]
        %v2761 = vld [vmem:[%s3 + $0x700] sm:$0xff]
        %v2762 = vld [vmem:[%s3 + $0x708] sm:$0xff]
        %v2763 = vld [vmem:[%s3 + $0x710] sm:$0xff]
        %v2764 = vld [vmem:[%s3 + $0x718] sm:$0xff]
        %v2765 = vld [vmem:[%s3 + $0x720] sm:$0xff]
        %v2766 = vld [vmem:[%s3 + $0x728] sm:$0xff]
        %v2767 = vld [vmem:[%s3 + $0x730] sm:$0xff]
        %v2768 = vld [vmem:[%s3 + $0x738] sm:$0xff]
        %v2769 = vld [vmem:[%s3 + $0x740] sm:$0xff]
        %v2770 = vld [vmem:[%s3 + $0x748] sm:$0xff]
        %v2771 = vld [vmem:[%s3 + $0x750] sm:$0xff]
        %v2772 = vld [vmem:[%s3 + $0x758] sm:$0xff]
        %v2773 = vld [vmem:[%s3 + $0x760] sm:$0xff]
        %v2774 = vld [vmem:[%s3 + $0x768] sm:$0xff]
        %v2775 = vld [vmem:[%s3 + $0x770] sm:$0xff]
        %v2776 = vld [vmem:[%s3 + $0x778] sm:$0xff]
        %v2777 = vld [vmem:[%s3 + $0x780] sm:$0xff]
        %v2778 = vld [vmem:[%s3 + $0x788] sm:$0xff]
        %v2779 = vld [vmem:[%s3 + $0x790] sm:$0xff]
        %v2780 = vld [vmem:[%s3 + $0x798] sm:$0xff]
        %v2781 = vld [vmem:[%s3 + $0x7a0] sm:$0xff]
        %v2782 = vld [vmem:[%s3 + $0x7a8] sm:$0xff]
        %v2783 = vld [vmem:[%s3 + $0x7b0] sm:$0xff]
        %v2784 = vld [vmem:[%s3 + $0x7b8] sm:$0xff]
        %v2785 = vld [vmem:[%s3 + $0x7c0] sm:$0xff]
        %v2786 = vld [vmem:[%s3 + $0x7c8] sm:$0xff]
        %v2787 = vld [vmem:[%s3 + $0x7d0] sm:$0xff]
        %v2788 = vld [vmem:[%s3 + $0x7d8] sm:$0xff]
        %v2789 = vld [vmem:[%s3 + $0x7e0] sm:$0xff]
        %v2790 = vld [vmem:[%s3 + $0x7e8] sm:$0xff]
        %v2791 = vld [vmem:[%s3 + $0x7f0] sm:$0xff]
        %v2792 = vld [vmem:[%s3 + $0x7f8] sm:$0xff]
        %v2793 = vpack.c.bf16 %v2410, %v2409
        %v2794 = vpack.c.bf16 %v2412, %v2411
        %v2795 = vpack.c.bf16 %v2414, %v2413
        %v2796 = vpack.c.bf16 %v2416, %v2415
        %v2797 = vpack.c.bf16 %v2418, %v2417
        %v2798 = vpack.c.bf16 %v2420, %v2419
        %v2799 = vpack.c.bf16 %v2422, %v2421
        %v2800 = vpack.c.bf16 %v2424, %v2423
        %v2801 = vpack.c.bf16 %v2426, %v2425
        %v2802 = vpack.c.bf16 %v2428, %v2427
        %v2803 = vpack.c.bf16 %v2430, %v2429
        %v2804 = vpack.c.bf16 %v2432, %v2431
        %v2805 = vpack.c.bf16 %v2434, %v2433
        %v2806 = vpack.c.bf16 %v2436, %v2435
        %v2807 = vpack.c.bf16 %v2438, %v2437
        %v2808 = vpack.c.bf16 %v2440, %v2439
        %v2809 = vpack.c.bf16 %v2442, %v2441
        %v2810 = vpack.c.bf16 %v2444, %v2443
        %v2811 = vpack.c.bf16 %v2446, %v2445
        %v2812 = vpack.c.bf16 %v2448, %v2447
        %v2813 = vpack.c.bf16 %v2450, %v2449
        %v2814 = vpack.c.bf16 %v2452, %v2451
        %v2815 = vpack.c.bf16 %v2454, %v2453
        %v2816 = vpack.c.bf16 %v2456, %v2455
        %v2817 = vpack.c.bf16 %v2458, %v2457
        %v2818 = vpack.c.bf16 %v2460, %v2459
        %v2819 = vpack.c.bf16 %v2462, %v2461
        %v2820 = vpack.c.bf16 %v2464, %v2463
        %v2821 = vpack.c.bf16 %v2466, %v2465
        %v2822 = vpack.c.bf16 %v2468, %v2467
        %v2823 = vpack.c.bf16 %v2470, %v2469
        %v2824 = vpack.c.bf16 %v2472, %v2471
        %v2825 = vpack.c.bf16 %v2474, %v2473
        %v2826 = vpack.c.bf16 %v2476, %v2475
        %v2827 = vpack.c.bf16 %v2478, %v2477
        %v2828 = vpack.c.bf16 %v2480, %v2479
        %v2829 = vpack.c.bf16 %v2482, %v2481
        %v2830 = vpack.c.bf16 %v2484, %v2483
        %v2831 = vpack.c.bf16 %v2486, %v2485
        %v2832 = vpack.c.bf16 %v2488, %v2487
        %v2833 = vpack.c.bf16 %v2490, %v2489
        %v2834 = vpack.c.bf16 %v2492, %v2491
        %v2835 = vpack.c.bf16 %v2494, %v2493
        %v2836 = vpack.c.bf16 %v2496, %v2495
        %v2837 = vpack.c.bf16 %v2498, %v2497
        %v2838 = vpack.c.bf16 %v2500, %v2499
        %v2839 = vpack.c.bf16 %v2502, %v2501
        %v2840 = vpack.c.bf16 %v2504, %v2503
        %v2841 = vpack.c.bf16 %v2506, %v2505
        %v2842 = vpack.c.bf16 %v2508, %v2507
        %v2843 = vpack.c.bf16 %v2510, %v2509
        %v2844 = vpack.c.bf16 %v2512, %v2511
        %v2845 = vpack.c.bf16 %v2514, %v2513
        %v2846 = vpack.c.bf16 %v2516, %v2515
        %v2847 = vpack.c.bf16 %v2518, %v2517
        %v2848 = vpack.c.bf16 %v2520, %v2519
        %v2849 = vpack.c.bf16 %v2522, %v2521
        %v2850 = vpack.c.bf16 %v2524, %v2523
        %v2851 = vpack.c.bf16 %v2526, %v2525
        %v2852 = vpack.c.bf16 %v2528, %v2527
        %v2853 = vpack.c.bf16 %v2530, %v2529
        %v2854 = vpack.c.bf16 %v2532, %v2531
        %v2855 = vpack.c.bf16 %v2534, %v2533
        %v2856 = vpack.c.bf16 %v2536, %v2535
        %v2857 = vld [vmem:[%s4] sm:$0xff]
        %v2858 = vld [vmem:[%s4 + $0x8] sm:$0xff]
        %v2859 = vld [vmem:[%s4 + $0x10] sm:$0xff]
        %v2860 = vld [vmem:[%s4 + $0x18] sm:$0xff]
        %v2861 = vld [vmem:[%s4 + $0x20] sm:$0xff]
        %v2862 = vld [vmem:[%s4 + $0x28] sm:$0xff]
        %v2863 = vld [vmem:[%s4 + $0x30] sm:$0xff]
        %v2864 = vld [vmem:[%s4 + $0x38] sm:$0xff]
        %v2865 = vld [vmem:[%s4 + $0x40] sm:$0xff]
        %v2866 = vld [vmem:[%s4 + $0x48] sm:$0xff]
        %v2867 = vld [vmem:[%s4 + $0x50] sm:$0xff]
        %v2868 = vld [vmem:[%s4 + $0x58] sm:$0xff]
        %v2869 = vld [vmem:[%s4 + $0x60] sm:$0xff]
        %v2870 = vld [vmem:[%s4 + $0x68] sm:$0xff]
        %v2871 = vld [vmem:[%s4 + $0x70] sm:$0xff]
        %v2872 = vld [vmem:[%s4 + $0x78] sm:$0xff]
        %v2873 = vld [vmem:[%s4 + $0x80] sm:$0xff]
        %v2874 = vld [vmem:[%s4 + $0x88] sm:$0xff]
        %v2875 = vld [vmem:[%s4 + $0x90] sm:$0xff]
        %v2876 = vld [vmem:[%s4 + $0x98] sm:$0xff]
        %v2877 = vld [vmem:[%s4 + $0xa0] sm:$0xff]
        %v2878 = vld [vmem:[%s4 + $0xa8] sm:$0xff]
        %v2879 = vld [vmem:[%s4 + $0xb0] sm:$0xff]
        %v2880 = vld [vmem:[%s4 + $0xb8] sm:$0xff]
        %v2881 = vld [vmem:[%s4 + $0xc0] sm:$0xff]
        %v2882 = vld [vmem:[%s4 + $0xc8] sm:$0xff]
        %v2883 = vld [vmem:[%s4 + $0xd0] sm:$0xff]
        %v2884 = vld [vmem:[%s4 + $0xd8] sm:$0xff]
        %v2885 = vld [vmem:[%s4 + $0xe0] sm:$0xff]
        %v2886 = vld [vmem:[%s4 + $0xe8] sm:$0xff]
        %v2887 = vld [vmem:[%s4 + $0xf0] sm:$0xff]
        %v2888 = vld [vmem:[%s4 + $0xf8] sm:$0xff]
        %v2889 = vld [vmem:[%s4 + $0x100] sm:$0xff]
        %v2890 = vld [vmem:[%s4 + $0x108] sm:$0xff]
        %v2891 = vld [vmem:[%s4 + $0x110] sm:$0xff]
        %v2892 = vld [vmem:[%s4 + $0x118] sm:$0xff]
        %v2893 = vld [vmem:[%s4 + $0x120] sm:$0xff]
        %v2894 = vld [vmem:[%s4 + $0x128] sm:$0xff]
        %v2895 = vld [vmem:[%s4 + $0x130] sm:$0xff]
        %v2896 = vld [vmem:[%s4 + $0x138] sm:$0xff]
        %v2897 = vld [vmem:[%s4 + $0x140] sm:$0xff]
        %v2898 = vld [vmem:[%s4 + $0x148] sm:$0xff]
        %v2899 = vld [vmem:[%s4 + $0x150] sm:$0xff]
        %v2900 = vld [vmem:[%s4 + $0x158] sm:$0xff]
        %v2901 = vld [vmem:[%s4 + $0x160] sm:$0xff]
        %v2902 = vld [vmem:[%s4 + $0x168] sm:$0xff]
        %v2903 = vld [vmem:[%s4 + $0x170] sm:$0xff]
        %v2904 = vld [vmem:[%s4 + $0x178] sm:$0xff]
        %v2905 = vld [vmem:[%s4 + $0x180] sm:$0xff]
        %v2906 = vld [vmem:[%s4 + $0x188] sm:$0xff]
        %v2907 = vld [vmem:[%s4 + $0x190] sm:$0xff]
        %v2908 = vld [vmem:[%s4 + $0x198] sm:$0xff]
        %v2909 = vld [vmem:[%s4 + $0x1a0] sm:$0xff]
        %v2910 = vld [vmem:[%s4 + $0x1a8] sm:$0xff]
        %v2911 = vld [vmem:[%s4 + $0x1b0] sm:$0xff]
        %v2912 = vld [vmem:[%s4 + $0x1b8] sm:$0xff]
        %v2913 = vld [vmem:[%s4 + $0x1c0] sm:$0xff]
        %v2914 = vld [vmem:[%s4 + $0x1c8] sm:$0xff]
        %v2915 = vld [vmem:[%s4 + $0x1d0] sm:$0xff]
        %v2916 = vld [vmem:[%s4 + $0x1d8] sm:$0xff]
        %v2917 = vld [vmem:[%s4 + $0x1e0] sm:$0xff]
        %v2918 = vld [vmem:[%s4 + $0x1e8] sm:$0xff]
        %v2919 = vld [vmem:[%s4 + $0x1f0] sm:$0xff]
        %v2920 = vld [vmem:[%s4 + $0x1f8] sm:$0xff]
        %2922 = vset.pattern.permute.xlu0 0
        %2923 = vperm.xlu0 %2922, %v2857
        %v2924 = vpop.permute.xlu0 %2923
        %2927 = vset.pattern.permute.xlu0 0
        %2928 = vperm.xlu0 %2927, %v2858
        %v2929 = vpop.permute.xlu0 %2928
        %2932 = vset.pattern.permute.xlu0 0
        %2933 = vperm.xlu0 %2932, %v2859
        %v2934 = vpop.permute.xlu0 %2933
        %2937 = vset.pattern.permute.xlu0 0
        %2938 = vperm.xlu0 %2937, %v2860
        %v2939 = vpop.permute.xlu0 %2938
        %2942 = vset.pattern.permute.xlu0 0
        %2943 = vperm.xlu0 %2942, %v2861
        %v2944 = vpop.permute.xlu0 %2943
        %2947 = vset.pattern.permute.xlu0 0
        %2948 = vperm.xlu0 %2947, %v2862
        %v2949 = vpop.permute.xlu0 %2948
        %2952 = vset.pattern.permute.xlu0 0
        %2953 = vperm.xlu0 %2952, %v2863
        %v2954 = vpop.permute.xlu0 %2953
        %2957 = vset.pattern.permute.xlu0 0
        %2958 = vperm.xlu0 %2957, %v2864
        %v2959 = vpop.permute.xlu0 %2958
        %2962 = vset.pattern.permute.xlu0 0
        %2963 = vperm.xlu0 %2962, %v2865
        %v2964 = vpop.permute.xlu0 %2963
        %2967 = vset.pattern.permute.xlu0 0
        %2968 = vperm.xlu0 %2967, %v2866
        %v2969 = vpop.permute.xlu0 %2968
        %2972 = vset.pattern.permute.xlu0 0
        %2973 = vperm.xlu0 %2972, %v2867
        %v2974 = vpop.permute.xlu0 %2973
        %2977 = vset.pattern.permute.xlu0 0
        %2978 = vperm.xlu0 %2977, %v2868
        %v2979 = vpop.permute.xlu0 %2978
        %2982 = vset.pattern.permute.xlu0 0
        %2983 = vperm.xlu0 %2982, %v2869
        %v2984 = vpop.permute.xlu0 %2983
        %2987 = vset.pattern.permute.xlu0 0
        %2988 = vperm.xlu0 %2987, %v2870
        %v2989 = vpop.permute.xlu0 %2988
        %2992 = vset.pattern.permute.xlu0 0
        %2993 = vperm.xlu0 %2992, %v2871
        %v2994 = vpop.permute.xlu0 %2993
        %2997 = vset.pattern.permute.xlu0 0
        %2998 = vperm.xlu0 %2997, %v2872
        %v2999 = vpop.permute.xlu0 %2998
        %3002 = vset.pattern.permute.xlu0 0
        %3003 = vperm.xlu0 %3002, %v2873
        %v3004 = vpop.permute.xlu0 %3003
        %3007 = vset.pattern.permute.xlu0 0
        %3008 = vperm.xlu0 %3007, %v2874
        %v3009 = vpop.permute.xlu0 %3008
        %3012 = vset.pattern.permute.xlu0 0
        %3013 = vperm.xlu0 %3012, %v2875
        %v3014 = vpop.permute.xlu0 %3013
        %3017 = vset.pattern.permute.xlu0 0
        %3018 = vperm.xlu0 %3017, %v2876
        %v3019 = vpop.permute.xlu0 %3018
        %3022 = vset.pattern.permute.xlu0 0
        %3023 = vperm.xlu0 %3022, %v2877
        %v3024 = vpop.permute.xlu0 %3023
        %3027 = vset.pattern.permute.xlu0 0
        %3028 = vperm.xlu0 %3027, %v2878
        %v3029 = vpop.permute.xlu0 %3028
        %3032 = vset.pattern.permute.xlu0 0
        %3033 = vperm.xlu0 %3032, %v2879
        %v3034 = vpop.permute.xlu0 %3033
        %3037 = vset.pattern.permute.xlu0 0
        %3038 = vperm.xlu0 %3037, %v2880
        %v3039 = vpop.permute.xlu0 %3038
        %3042 = vset.pattern.permute.xlu0 0
        %3043 = vperm.xlu0 %3042, %v2881
        %v3044 = vpop.permute.xlu0 %3043
        %3047 = vset.pattern.permute.xlu0 0
        %3048 = vperm.xlu0 %3047, %v2882
        %v3049 = vpop.permute.xlu0 %3048
        %3052 = vset.pattern.permute.xlu0 0
        %3053 = vperm.xlu0 %3052, %v2883
        %v3054 = vpop.permute.xlu0 %3053
        %3057 = vset.pattern.permute.xlu0 0
        %3058 = vperm.xlu0 %3057, %v2884
        %v3059 = vpop.permute.xlu0 %3058
        %3062 = vset.pattern.permute.xlu0 0
        %3063 = vperm.xlu0 %3062, %v2885
        %v3064 = vpop.permute.xlu0 %3063
        %3067 = vset.pattern.permute.xlu0 0
        %3068 = vperm.xlu0 %3067, %v2886
        %v3069 = vpop.permute.xlu0 %3068
        %3072 = vset.pattern.permute.xlu0 0
        %3073 = vperm.xlu0 %3072, %v2887
        %v3074 = vpop.permute.xlu0 %3073
        %3077 = vset.pattern.permute.xlu0 0
        %3078 = vperm.xlu0 %3077, %v2888
        %v3079 = vpop.permute.xlu0 %3078
        %3082 = vset.pattern.permute.xlu0 0
        %3083 = vperm.xlu0 %3082, %v2889
        %v3084 = vpop.permute.xlu0 %3083
        %3087 = vset.pattern.permute.xlu0 0
        %3088 = vperm.xlu0 %3087, %v2890
        %v3089 = vpop.permute.xlu0 %3088
        %3092 = vset.pattern.permute.xlu0 0
        %3093 = vperm.xlu0 %3092, %v2891
        %v3094 = vpop.permute.xlu0 %3093
        %3097 = vset.pattern.permute.xlu0 0
        %3098 = vperm.xlu0 %3097, %v2892
        %v3099 = vpop.permute.xlu0 %3098
        %3102 = vset.pattern.permute.xlu0 0
        %3103 = vperm.xlu0 %3102, %v2893
        %v3104 = vpop.permute.xlu0 %3103
        %3107 = vset.pattern.permute.xlu0 0
        %3108 = vperm.xlu0 %3107, %v2894
        %v3109 = vpop.permute.xlu0 %3108
        %3112 = vset.pattern.permute.xlu0 0
        %3113 = vperm.xlu0 %3112, %v2895
        %v3114 = vpop.permute.xlu0 %3113
        %3117 = vset.pattern.permute.xlu0 0
        %3118 = vperm.xlu0 %3117, %v2896
        %v3119 = vpop.permute.xlu0 %3118
        %3122 = vset.pattern.permute.xlu0 0
        %3123 = vperm.xlu0 %3122, %v2897
        %v3124 = vpop.permute.xlu0 %3123
        %3127 = vset.pattern.permute.xlu0 0
        %3128 = vperm.xlu0 %3127, %v2898
        %v3129 = vpop.permute.xlu0 %3128
        %3132 = vset.pattern.permute.xlu0 0
        %3133 = vperm.xlu0 %3132, %v2899
        %v3134 = vpop.permute.xlu0 %3133
        %3137 = vset.pattern.permute.xlu0 0
        %3138 = vperm.xlu0 %3137, %v2900
        %v3139 = vpop.permute.xlu0 %3138
        %3142 = vset.pattern.permute.xlu0 0
        %3143 = vperm.xlu0 %3142, %v2901
        %v3144 = vpop.permute.xlu0 %3143
        %3147 = vset.pattern.permute.xlu0 0
        %3148 = vperm.xlu0 %3147, %v2902
        %v3149 = vpop.permute.xlu0 %3148
        %3152 = vset.pattern.permute.xlu0 0
        %3153 = vperm.xlu0 %3152, %v2903
        %v3154 = vpop.permute.xlu0 %3153
        %3157 = vset.pattern.permute.xlu0 0
        %3158 = vperm.xlu0 %3157, %v2904
        %v3159 = vpop.permute.xlu0 %3158
        %3162 = vset.pattern.permute.xlu0 0
        %3163 = vperm.xlu0 %3162, %v2905
        %v3164 = vpop.permute.xlu0 %3163
        %3167 = vset.pattern.permute.xlu0 0
        %3168 = vperm.xlu0 %3167, %v2906
        %v3169 = vpop.permute.xlu0 %3168
        %3172 = vset.pattern.permute.xlu0 0
        %3173 = vperm.xlu0 %3172, %v2907
        %v3174 = vpop.permute.xlu0 %3173
        %3177 = vset.pattern.permute.xlu0 0
        %3178 = vperm.xlu0 %3177, %v2908
        %v3179 = vpop.permute.xlu0 %3178
        %3182 = vset.pattern.permute.xlu0 0
        %3183 = vperm.xlu0 %3182, %v2909
        %v3184 = vpop.permute.xlu0 %3183
        %3187 = vset.pattern.permute.xlu0 0
        %3188 = vperm.xlu0 %3187, %v2910
        %v3189 = vpop.permute.xlu0 %3188
        %3192 = vset.pattern.permute.xlu0 0
        %3193 = vperm.xlu0 %3192, %v2911
        %v3194 = vpop.permute.xlu0 %3193
        %3197 = vset.pattern.permute.xlu0 0
        %3198 = vperm.xlu0 %3197, %v2912
        %v3199 = vpop.permute.xlu0 %3198
        %3202 = vset.pattern.permute.xlu0 0
        %3203 = vperm.xlu0 %3202, %v2913
        %v3204 = vpop.permute.xlu0 %3203
        %3207 = vset.pattern.permute.xlu0 0
        %3208 = vperm.xlu0 %3207, %v2914
        %v3209 = vpop.permute.xlu0 %3208
        %3212 = vset.pattern.permute.xlu0 0
        %3213 = vperm.xlu0 %3212, %v2915
        %v3214 = vpop.permute.xlu0 %3213
        %3217 = vset.pattern.permute.xlu0 0
        %3218 = vperm.xlu0 %3217, %v2916
        %v3219 = vpop.permute.xlu0 %3218
        %3222 = vset.pattern.permute.xlu0 0
        %3223 = vperm.xlu0 %3222, %v2917
        %v3224 = vpop.permute.xlu0 %3223
        %3227 = vset.pattern.permute.xlu0 0
        %3228 = vperm.xlu0 %3227, %v2918
        %v3229 = vpop.permute.xlu0 %3228
        %3232 = vset.pattern.permute.xlu0 0
        %3233 = vperm.xlu0 %3232, %v2919
        %v3234 = vpop.permute.xlu0 %3233
        %3237 = vset.pattern.permute.xlu0 0
        %3238 = vperm.xlu0 %3237, %v2920
        %v3239 = vpop.permute.xlu0 %3238
        %v3497 = vunpack.c.l.b16 %v2537
        %v3498 = vunpack.c.h.b16 %v2537
        %v3499 = vunpack.c.l.b16 %v2538
        %v3500 = vunpack.c.h.b16 %v2538
        %v3501 = vunpack.c.l.b16 %v2539
        %v3502 = vunpack.c.h.b16 %v2539
        %v3503 = vunpack.c.l.b16 %v2540
        %v3504 = vunpack.c.h.b16 %v2540
        %v3505 = vunpack.c.l.b16 %v2541
        %v3506 = vunpack.c.h.b16 %v2541
        %v3507 = vunpack.c.l.b16 %v2542
        %v3508 = vunpack.c.h.b16 %v2542
        %v3509 = vunpack.c.l.b16 %v2543
        %v3510 = vunpack.c.h.b16 %v2543
        %v3511 = vunpack.c.l.b16 %v2544
        %v3512 = vunpack.c.h.b16 %v2544
        %v3513 = vunpack.c.l.b16 %v2545
        %v3514 = vunpack.c.h.b16 %v2545
        %v3515 = vunpack.c.l.b16 %v2546
        %v3516 = vunpack.c.h.b16 %v2546
        %v3517 = vunpack.c.l.b16 %v2547
        %v3518 = vunpack.c.h.b16 %v2547
        %v3519 = vunpack.c.l.b16 %v2548
        %v3520 = vunpack.c.h.b16 %v2548
        %v3521 = vunpack.c.l.b16 %v2549
        %v3522 = vunpack.c.h.b16 %v2549
        %v3523 = vunpack.c.l.b16 %v2550
        %v3524 = vunpack.c.h.b16 %v2550
        %v3525 = vunpack.c.l.b16 %v2551
        %v3526 = vunpack.c.h.b16 %v2551
        %v3527 = vunpack.c.l.b16 %v2552
        %v3528 = vunpack.c.h.b16 %v2552
        %v3529 = vunpack.c.l.b16 %v2553
        %v3530 = vunpack.c.h.b16 %v2553
        %v3531 = vunpack.c.l.b16 %v2554
        %v3532 = vunpack.c.h.b16 %v2554
        %v3533 = vunpack.c.l.b16 %v2555
        %v3534 = vunpack.c.h.b16 %v2555
        %v3535 = vunpack.c.l.b16 %v2556
        %v3536 = vunpack.c.h.b16 %v2556
        %v3537 = vunpack.c.l.b16 %v2557
        %v3538 = vunpack.c.h.b16 %v2557
        %v3539 = vunpack.c.l.b16 %v2558
        %v3540 = vunpack.c.h.b16 %v2558
        %v3541 = vunpack.c.l.b16 %v2559
        %v3542 = vunpack.c.h.b16 %v2559
        %v3543 = vunpack.c.l.b16 %v2560
        %v3544 = vunpack.c.h.b16 %v2560
        %v3545 = vunpack.c.l.b16 %v2561
        %v3546 = vunpack.c.h.b16 %v2561
        %v3547 = vunpack.c.l.b16 %v2562
        %v3548 = vunpack.c.h.b16 %v2562
        %v3549 = vunpack.c.l.b16 %v2563
        %v3550 = vunpack.c.h.b16 %v2563
        %v3551 = vunpack.c.l.b16 %v2564
        %v3552 = vunpack.c.h.b16 %v2564
        %v3553 = vunpack.c.l.b16 %v2565
        %v3554 = vunpack.c.h.b16 %v2565
        %v3555 = vunpack.c.l.b16 %v2566
        %v3556 = vunpack.c.h.b16 %v2566
        %v3557 = vunpack.c.l.b16 %v2567
        %v3558 = vunpack.c.h.b16 %v2567
        %v3559 = vunpack.c.l.b16 %v2568
        %v3560 = vunpack.c.h.b16 %v2568
        %v3561 = vunpack.c.l.b16 %v2569
        %v3562 = vunpack.c.h.b16 %v2569
        %v3563 = vunpack.c.l.b16 %v2570
        %v3564 = vunpack.c.h.b16 %v2570
        %v3565 = vunpack.c.l.b16 %v2571
        %v3566 = vunpack.c.h.b16 %v2571
        %v3567 = vunpack.c.l.b16 %v2572
        %v3568 = vunpack.c.h.b16 %v2572
        %v3569 = vunpack.c.l.b16 %v2573
        %v3570 = vunpack.c.h.b16 %v2573
        %v3571 = vunpack.c.l.b16 %v2574
        %v3572 = vunpack.c.h.b16 %v2574
        %v3573 = vunpack.c.l.b16 %v2575
        %v3574 = vunpack.c.h.b16 %v2575
        %v3575 = vunpack.c.l.b16 %v2576
        %v3576 = vunpack.c.h.b16 %v2576
        %v3577 = vunpack.c.l.b16 %v2577
        %v3578 = vunpack.c.h.b16 %v2577
        %v3579 = vunpack.c.l.b16 %v2578
        %v3580 = vunpack.c.h.b16 %v2578
        %v3581 = vunpack.c.l.b16 %v2579
        %v3582 = vunpack.c.h.b16 %v2579
        %v3583 = vunpack.c.l.b16 %v2580
        %v3584 = vunpack.c.h.b16 %v2580
        %v3585 = vunpack.c.l.b16 %v2581
        %v3586 = vunpack.c.h.b16 %v2581
        %v3587 = vunpack.c.l.b16 %v2582
        %v3588 = vunpack.c.h.b16 %v2582
        %v3589 = vunpack.c.l.b16 %v2583
        %v3590 = vunpack.c.h.b16 %v2583
        %v3591 = vunpack.c.l.b16 %v2584
        %v3592 = vunpack.c.h.b16 %v2584
        %v3593 = vunpack.c.l.b16 %v2585
        %v3594 = vunpack.c.h.b16 %v2585
        %v3595 = vunpack.c.l.b16 %v2586
        %v3596 = vunpack.c.h.b16 %v2586
        %v3597 = vunpack.c.l.b16 %v2587
        %v3598 = vunpack.c.h.b16 %v2587
        %v3599 = vunpack.c.l.b16 %v2588
        %v3600 = vunpack.c.h.b16 %v2588
        %v3601 = vunpack.c.l.b16 %v2589
        %v3602 = vunpack.c.h.b16 %v2589
        %v3603 = vunpack.c.l.b16 %v2590
        %v3604 = vunpack.c.h.b16 %v2590
        %v3605 = vunpack.c.l.b16 %v2591
        %v3606 = vunpack.c.h.b16 %v2591
        %v3607 = vunpack.c.l.b16 %v2592
        %v3608 = vunpack.c.h.b16 %v2592
        %v3609 = vunpack.c.l.b16 %v2593
        %v3610 = vunpack.c.h.b16 %v2593
        %v3611 = vunpack.c.l.b16 %v2594
        %v3612 = vunpack.c.h.b16 %v2594
        %v3613 = vunpack.c.l.b16 %v2595
        %v3614 = vunpack.c.h.b16 %v2595
        %v3615 = vunpack.c.l.b16 %v2596
        %v3616 = vunpack.c.h.b16 %v2596
        %v3617 = vunpack.c.l.b16 %v2597
        %v3618 = vunpack.c.h.b16 %v2597
        %v3619 = vunpack.c.l.b16 %v2598
        %v3620 = vunpack.c.h.b16 %v2598
        %v3621 = vunpack.c.l.b16 %v2599
        %v3622 = vunpack.c.h.b16 %v2599
        %v3623 = vunpack.c.l.b16 %v2600
        %v3624 = vunpack.c.h.b16 %v2600
        %v3625 = vunpack.c.l.b16 %v2601
        %v3626 = vunpack.c.h.b16 %v2601
        %v3627 = vunpack.c.l.b16 %v2602
        %v3628 = vunpack.c.h.b16 %v2602
        %v3629 = vunpack.c.l.b16 %v2603
        %v3630 = vunpack.c.h.b16 %v2603
        %v3631 = vunpack.c.l.b16 %v2604
        %v3632 = vunpack.c.h.b16 %v2604
        %v3633 = vunpack.c.l.b16 %v2605
        %v3634 = vunpack.c.h.b16 %v2605
        %v3635 = vunpack.c.l.b16 %v2606
        %v3636 = vunpack.c.h.b16 %v2606
        %v3637 = vunpack.c.l.b16 %v2607
        %v3638 = vunpack.c.h.b16 %v2607
        %v3639 = vunpack.c.l.b16 %v2608
        %v3640 = vunpack.c.h.b16 %v2608
        %v3641 = vunpack.c.l.b16 %v2609
        %v3642 = vunpack.c.h.b16 %v2609
        %v3643 = vunpack.c.l.b16 %v2610
        %v3644 = vunpack.c.h.b16 %v2610
        %v3645 = vunpack.c.l.b16 %v2611
        %v3646 = vunpack.c.h.b16 %v2611
        %v3647 = vunpack.c.l.b16 %v2612
        %v3648 = vunpack.c.h.b16 %v2612
        %v3649 = vunpack.c.l.b16 %v2613
        %v3650 = vunpack.c.h.b16 %v2613
        %v3651 = vunpack.c.l.b16 %v2614
        %v3652 = vunpack.c.h.b16 %v2614
        %v3653 = vunpack.c.l.b16 %v2615
        %v3654 = vunpack.c.h.b16 %v2615
        %v3655 = vunpack.c.l.b16 %v2616
        %v3656 = vunpack.c.h.b16 %v2616
        %v3657 = vunpack.c.l.b16 %v2617
        %v3658 = vunpack.c.h.b16 %v2617
        %v3659 = vunpack.c.l.b16 %v2618
        %v3660 = vunpack.c.h.b16 %v2618
        %v3661 = vunpack.c.l.b16 %v2619
        %v3662 = vunpack.c.h.b16 %v2619
        %v3663 = vunpack.c.l.b16 %v2620
        %v3664 = vunpack.c.h.b16 %v2620
        %v3665 = vunpack.c.l.b16 %v2621
        %v3666 = vunpack.c.h.b16 %v2621
        %v3667 = vunpack.c.l.b16 %v2622
        %v3668 = vunpack.c.h.b16 %v2622
        %v3669 = vunpack.c.l.b16 %v2623
        %v3670 = vunpack.c.h.b16 %v2623
        %v3671 = vunpack.c.l.b16 %v2624
        %v3672 = vunpack.c.h.b16 %v2624
        %v3673 = vunpack.c.l.b16 %v2625
        %v3674 = vunpack.c.h.b16 %v2625
        %v3675 = vunpack.c.l.b16 %v2626
        %v3676 = vunpack.c.h.b16 %v2626
        %v3677 = vunpack.c.l.b16 %v2627
        %v3678 = vunpack.c.h.b16 %v2627
        %v3679 = vunpack.c.l.b16 %v2628
        %v3680 = vunpack.c.h.b16 %v2628
        %v3681 = vunpack.c.l.b16 %v2629
        %v3682 = vunpack.c.h.b16 %v2629
        %v3683 = vunpack.c.l.b16 %v2630
        %v3684 = vunpack.c.h.b16 %v2630
        %v3685 = vunpack.c.l.b16 %v2631
        %v3686 = vunpack.c.h.b16 %v2631
        %v3687 = vunpack.c.l.b16 %v2632
        %v3688 = vunpack.c.h.b16 %v2632
        %v3689 = vunpack.c.l.b16 %v2633
        %v3690 = vunpack.c.h.b16 %v2633
        %v3691 = vunpack.c.l.b16 %v2634
        %v3692 = vunpack.c.h.b16 %v2634
        %v3693 = vunpack.c.l.b16 %v2635
        %v3694 = vunpack.c.h.b16 %v2635
        %v3695 = vunpack.c.l.b16 %v2636
        %v3696 = vunpack.c.h.b16 %v2636
        %v3697 = vunpack.c.l.b16 %v2637
        %v3698 = vunpack.c.h.b16 %v2637
        %v3699 = vunpack.c.l.b16 %v2638
        %v3700 = vunpack.c.h.b16 %v2638
        %v3701 = vunpack.c.l.b16 %v2639
        %v3702 = vunpack.c.h.b16 %v2639
        %v3703 = vunpack.c.l.b16 %v2640
        %v3704 = vunpack.c.h.b16 %v2640
        %v3705 = vunpack.c.l.b16 %v2641
        %v3706 = vunpack.c.h.b16 %v2641
        %v3707 = vunpack.c.l.b16 %v2642
        %v3708 = vunpack.c.h.b16 %v2642
        %v3709 = vunpack.c.l.b16 %v2643
        %v3710 = vunpack.c.h.b16 %v2643
        %v3711 = vunpack.c.l.b16 %v2644
        %v3712 = vunpack.c.h.b16 %v2644
        %v3713 = vunpack.c.l.b16 %v2645
        %v3714 = vunpack.c.h.b16 %v2645
        %v3715 = vunpack.c.l.b16 %v2646
        %v3716 = vunpack.c.h.b16 %v2646
        %v3717 = vunpack.c.l.b16 %v2647
        %v3718 = vunpack.c.h.b16 %v2647
        %v3719 = vunpack.c.l.b16 %v2648
        %v3720 = vunpack.c.h.b16 %v2648
        %v3721 = vunpack.c.l.b16 %v2649
        %v3722 = vunpack.c.h.b16 %v2649
        %v3723 = vunpack.c.l.b16 %v2650
        %v3724 = vunpack.c.h.b16 %v2650
        %v3725 = vunpack.c.l.b16 %v2651
        %v3726 = vunpack.c.h.b16 %v2651
        %v3727 = vunpack.c.l.b16 %v2652
        %v3728 = vunpack.c.h.b16 %v2652
        %v3729 = vunpack.c.l.b16 %v2653
        %v3730 = vunpack.c.h.b16 %v2653
        %v3731 = vunpack.c.l.b16 %v2654
        %v3732 = vunpack.c.h.b16 %v2654
        %v3733 = vunpack.c.l.b16 %v2655
        %v3734 = vunpack.c.h.b16 %v2655
        %v3735 = vunpack.c.l.b16 %v2656
        %v3736 = vunpack.c.h.b16 %v2656
        %v3737 = vunpack.c.l.b16 %v2657
        %v3738 = vunpack.c.h.b16 %v2657
        %v3739 = vunpack.c.l.b16 %v2658
        %v3740 = vunpack.c.h.b16 %v2658
        %v3741 = vunpack.c.l.b16 %v2659
        %v3742 = vunpack.c.h.b16 %v2659
        %v3743 = vunpack.c.l.b16 %v2660
        %v3744 = vunpack.c.h.b16 %v2660
        %v3745 = vunpack.c.l.b16 %v2661
        %v3746 = vunpack.c.h.b16 %v2661
        %v3747 = vunpack.c.l.b16 %v2662
        %v3748 = vunpack.c.h.b16 %v2662
        %v3749 = vunpack.c.l.b16 %v2663
        %v3750 = vunpack.c.h.b16 %v2663
        %v3751 = vunpack.c.l.b16 %v2664
        %v3752 = vunpack.c.h.b16 %v2664
        %v3753 = vunpack.c.l.b16 %v2665
        %v3754 = vunpack.c.h.b16 %v2665
        %v3755 = vunpack.c.l.b16 %v2666
        %v3756 = vunpack.c.h.b16 %v2666
        %v3757 = vunpack.c.l.b16 %v2667
        %v3758 = vunpack.c.h.b16 %v2667
        %v3759 = vunpack.c.l.b16 %v2668
        %v3760 = vunpack.c.h.b16 %v2668
        %v3761 = vunpack.c.l.b16 %v2669
        %v3762 = vunpack.c.h.b16 %v2669
        %v3763 = vunpack.c.l.b16 %v2670
        %v3764 = vunpack.c.h.b16 %v2670
        %v3765 = vunpack.c.l.b16 %v2671
        %v3766 = vunpack.c.h.b16 %v2671
        %v3767 = vunpack.c.l.b16 %v2672
        %v3768 = vunpack.c.h.b16 %v2672
        %v3769 = vunpack.c.l.b16 %v2673
        %v3770 = vunpack.c.h.b16 %v2673
        %v3771 = vunpack.c.l.b16 %v2674
        %v3772 = vunpack.c.h.b16 %v2674
        %v3773 = vunpack.c.l.b16 %v2675
        %v3774 = vunpack.c.h.b16 %v2675
        %v3775 = vunpack.c.l.b16 %v2676
        %v3776 = vunpack.c.h.b16 %v2676
        %v3777 = vunpack.c.l.b16 %v2677
        %v3778 = vunpack.c.h.b16 %v2677
        %v3779 = vunpack.c.l.b16 %v2678
        %v3780 = vunpack.c.h.b16 %v2678
        %v3781 = vunpack.c.l.b16 %v2679
        %v3782 = vunpack.c.h.b16 %v2679
        %v3783 = vunpack.c.l.b16 %v2680
        %v3784 = vunpack.c.h.b16 %v2680
        %v3785 = vunpack.c.l.b16 %v2681
        %v3786 = vunpack.c.h.b16 %v2681
        %v3787 = vunpack.c.l.b16 %v2682
        %v3788 = vunpack.c.h.b16 %v2682
        %v3789 = vunpack.c.l.b16 %v2683
        %v3790 = vunpack.c.h.b16 %v2683
        %v3791 = vunpack.c.l.b16 %v2684
        %v3792 = vunpack.c.h.b16 %v2684
        %v3793 = vunpack.c.l.b16 %v2685
        %v3794 = vunpack.c.h.b16 %v2685
        %v3795 = vunpack.c.l.b16 %v2686
        %v3796 = vunpack.c.h.b16 %v2686
        %v3797 = vunpack.c.l.b16 %v2687
        %v3798 = vunpack.c.h.b16 %v2687
        %v3799 = vunpack.c.l.b16 %v2688
        %v3800 = vunpack.c.h.b16 %v2688
        %v3801 = vunpack.c.l.b16 %v2689
        %v3802 = vunpack.c.h.b16 %v2689
        %v3803 = vunpack.c.l.b16 %v2690
        %v3804 = vunpack.c.h.b16 %v2690
        %v3805 = vunpack.c.l.b16 %v2691
        %v3806 = vunpack.c.h.b16 %v2691
        %v3807 = vunpack.c.l.b16 %v2692
        %v3808 = vunpack.c.h.b16 %v2692
        %v3809 = vunpack.c.l.b16 %v2693
        %v3810 = vunpack.c.h.b16 %v2693
        %v3811 = vunpack.c.l.b16 %v2694
        %v3812 = vunpack.c.h.b16 %v2694
        %v3813 = vunpack.c.l.b16 %v2695
        %v3814 = vunpack.c.h.b16 %v2695
        %v3815 = vunpack.c.l.b16 %v2696
        %v3816 = vunpack.c.h.b16 %v2696
        %v3817 = vunpack.c.l.b16 %v2697
        %v3818 = vunpack.c.h.b16 %v2697
        %v3819 = vunpack.c.l.b16 %v2698
        %v3820 = vunpack.c.h.b16 %v2698
        %v3821 = vunpack.c.l.b16 %v2699
        %v3822 = vunpack.c.h.b16 %v2699
        %v3823 = vunpack.c.l.b16 %v2700
        %v3824 = vunpack.c.h.b16 %v2700
        %v3825 = vunpack.c.l.b16 %v2701
        %v3826 = vunpack.c.h.b16 %v2701
        %v3827 = vunpack.c.l.b16 %v2702
        %v3828 = vunpack.c.h.b16 %v2702
        %v3829 = vunpack.c.l.b16 %v2703
        %v3830 = vunpack.c.h.b16 %v2703
        %v3831 = vunpack.c.l.b16 %v2704
        %v3832 = vunpack.c.h.b16 %v2704
        %v3833 = vunpack.c.l.b16 %v2705
        %v3834 = vunpack.c.h.b16 %v2705
        %v3835 = vunpack.c.l.b16 %v2706
        %v3836 = vunpack.c.h.b16 %v2706
        %v3837 = vunpack.c.l.b16 %v2707
        %v3838 = vunpack.c.h.b16 %v2707
        %v3839 = vunpack.c.l.b16 %v2708
        %v3840 = vunpack.c.h.b16 %v2708
        %v3841 = vunpack.c.l.b16 %v2709
        %v3842 = vunpack.c.h.b16 %v2709
        %v3843 = vunpack.c.l.b16 %v2710
        %v3844 = vunpack.c.h.b16 %v2710
        %v3845 = vunpack.c.l.b16 %v2711
        %v3846 = vunpack.c.h.b16 %v2711
        %v3847 = vunpack.c.l.b16 %v2712
        %v3848 = vunpack.c.h.b16 %v2712
        %v3849 = vunpack.c.l.b16 %v2713
        %v3850 = vunpack.c.h.b16 %v2713
        %v3851 = vunpack.c.l.b16 %v2714
        %v3852 = vunpack.c.h.b16 %v2714
        %v3853 = vunpack.c.l.b16 %v2715
        %v3854 = vunpack.c.h.b16 %v2715
        %v3855 = vunpack.c.l.b16 %v2716
        %v3856 = vunpack.c.h.b16 %v2716
        %v3857 = vunpack.c.l.b16 %v2717
        %v3858 = vunpack.c.h.b16 %v2717
        %v3859 = vunpack.c.l.b16 %v2718
        %v3860 = vunpack.c.h.b16 %v2718
        %v3861 = vunpack.c.l.b16 %v2719
        %v3862 = vunpack.c.h.b16 %v2719
        %v3863 = vunpack.c.l.b16 %v2720
        %v3864 = vunpack.c.h.b16 %v2720
        %v3865 = vunpack.c.l.b16 %v2721
        %v3866 = vunpack.c.h.b16 %v2721
        %v3867 = vunpack.c.l.b16 %v2722
        %v3868 = vunpack.c.h.b16 %v2722
        %v3869 = vunpack.c.l.b16 %v2723
        %v3870 = vunpack.c.h.b16 %v2723
        %v3871 = vunpack.c.l.b16 %v2724
        %v3872 = vunpack.c.h.b16 %v2724
        %v3873 = vunpack.c.l.b16 %v2725
        %v3874 = vunpack.c.h.b16 %v2725
        %v3875 = vunpack.c.l.b16 %v2726
        %v3876 = vunpack.c.h.b16 %v2726
        %v3877 = vunpack.c.l.b16 %v2727
        %v3878 = vunpack.c.h.b16 %v2727
        %v3879 = vunpack.c.l.b16 %v2728
        %v3880 = vunpack.c.h.b16 %v2728
        %v3881 = vunpack.c.l.b16 %v2729
        %v3882 = vunpack.c.h.b16 %v2729
        %v3883 = vunpack.c.l.b16 %v2730
        %v3884 = vunpack.c.h.b16 %v2730
        %v3885 = vunpack.c.l.b16 %v2731
        %v3886 = vunpack.c.h.b16 %v2731
        %v3887 = vunpack.c.l.b16 %v2732
        %v3888 = vunpack.c.h.b16 %v2732
        %v3889 = vunpack.c.l.b16 %v2733
        %v3890 = vunpack.c.h.b16 %v2733
        %v3891 = vunpack.c.l.b16 %v2734
        %v3892 = vunpack.c.h.b16 %v2734
        %v3893 = vunpack.c.l.b16 %v2735
        %v3894 = vunpack.c.h.b16 %v2735
        %v3895 = vunpack.c.l.b16 %v2736
        %v3896 = vunpack.c.h.b16 %v2736
        %v3897 = vunpack.c.l.b16 %v2737
        %v3898 = vunpack.c.h.b16 %v2737
        %v3899 = vunpack.c.l.b16 %v2738
        %v3900 = vunpack.c.h.b16 %v2738
        %v3901 = vunpack.c.l.b16 %v2739
        %v3902 = vunpack.c.h.b16 %v2739
        %v3903 = vunpack.c.l.b16 %v2740
        %v3904 = vunpack.c.h.b16 %v2740
        %v3905 = vunpack.c.l.b16 %v2741
        %v3906 = vunpack.c.h.b16 %v2741
        %v3907 = vunpack.c.l.b16 %v2742
        %v3908 = vunpack.c.h.b16 %v2742
        %v3909 = vunpack.c.l.b16 %v2743
        %v3910 = vunpack.c.h.b16 %v2743
        %v3911 = vunpack.c.l.b16 %v2744
        %v3912 = vunpack.c.h.b16 %v2744
        %v3913 = vunpack.c.l.b16 %v2745
        %v3914 = vunpack.c.h.b16 %v2745
        %v3915 = vunpack.c.l.b16 %v2746
        %v3916 = vunpack.c.h.b16 %v2746
        %v3917 = vunpack.c.l.b16 %v2747
        %v3918 = vunpack.c.h.b16 %v2747
        %v3919 = vunpack.c.l.b16 %v2748
        %v3920 = vunpack.c.h.b16 %v2748
        %v3921 = vunpack.c.l.b16 %v2749
        %v3922 = vunpack.c.h.b16 %v2749
        %v3923 = vunpack.c.l.b16 %v2750
        %v3924 = vunpack.c.h.b16 %v2750
        %v3925 = vunpack.c.l.b16 %v2751
        %v3926 = vunpack.c.h.b16 %v2751
        %v3927 = vunpack.c.l.b16 %v2752
        %v3928 = vunpack.c.h.b16 %v2752
        %v3929 = vunpack.c.l.b16 %v2753
        %v3930 = vunpack.c.h.b16 %v2753
        %v3931 = vunpack.c.l.b16 %v2754
        %v3932 = vunpack.c.h.b16 %v2754
        %v3933 = vunpack.c.l.b16 %v2755
        %v3934 = vunpack.c.h.b16 %v2755
        %v3935 = vunpack.c.l.b16 %v2756
        %v3936 = vunpack.c.h.b16 %v2756
        %v3937 = vunpack.c.l.b16 %v2757
        %v3938 = vunpack.c.h.b16 %v2757
        %v3939 = vunpack.c.l.b16 %v2758
        %v3940 = vunpack.c.h.b16 %v2758
        %v3941 = vunpack.c.l.b16 %v2759
        %v3942 = vunpack.c.h.b16 %v2759
        %v3943 = vunpack.c.l.b16 %v2760
        %v3944 = vunpack.c.h.b16 %v2760
        %v3945 = vunpack.c.l.b16 %v2761
        %v3946 = vunpack.c.h.b16 %v2761
        %v3947 = vunpack.c.l.b16 %v2762
        %v3948 = vunpack.c.h.b16 %v2762
        %v3949 = vunpack.c.l.b16 %v2763
        %v3950 = vunpack.c.h.b16 %v2763
        %v3951 = vunpack.c.l.b16 %v2764
        %v3952 = vunpack.c.h.b16 %v2764
        %v3953 = vunpack.c.l.b16 %v2765
        %v3954 = vunpack.c.h.b16 %v2765
        %v3955 = vunpack.c.l.b16 %v2766
        %v3956 = vunpack.c.h.b16 %v2766
        %v3957 = vunpack.c.l.b16 %v2767
        %v3958 = vunpack.c.h.b16 %v2767
        %v3959 = vunpack.c.l.b16 %v2768
        %v3960 = vunpack.c.h.b16 %v2768
        %v3961 = vunpack.c.l.b16 %v2769
        %v3962 = vunpack.c.h.b16 %v2769
        %v3963 = vunpack.c.l.b16 %v2770
        %v3964 = vunpack.c.h.b16 %v2770
        %v3965 = vunpack.c.l.b16 %v2771
        %v3966 = vunpack.c.h.b16 %v2771
        %v3967 = vunpack.c.l.b16 %v2772
        %v3968 = vunpack.c.h.b16 %v2772
        %v3969 = vunpack.c.l.b16 %v2773
        %v3970 = vunpack.c.h.b16 %v2773
        %v3971 = vunpack.c.l.b16 %v2774
        %v3972 = vunpack.c.h.b16 %v2774
        %v3973 = vunpack.c.l.b16 %v2775
        %v3974 = vunpack.c.h.b16 %v2775
        %v3975 = vunpack.c.l.b16 %v2776
        %v3976 = vunpack.c.h.b16 %v2776
        %v3977 = vunpack.c.l.b16 %v2777
        %v3978 = vunpack.c.h.b16 %v2777
        %v3979 = vunpack.c.l.b16 %v2778
        %v3980 = vunpack.c.h.b16 %v2778
        %v3981 = vunpack.c.l.b16 %v2779
        %v3982 = vunpack.c.h.b16 %v2779
        %v3983 = vunpack.c.l.b16 %v2780
        %v3984 = vunpack.c.h.b16 %v2780
        %v3985 = vunpack.c.l.b16 %v2781
        %v3986 = vunpack.c.h.b16 %v2781
        %v3987 = vunpack.c.l.b16 %v2782
        %v3988 = vunpack.c.h.b16 %v2782
        %v3989 = vunpack.c.l.b16 %v2783
        %v3990 = vunpack.c.h.b16 %v2783
        %v3991 = vunpack.c.l.b16 %v2784
        %v3992 = vunpack.c.h.b16 %v2784
        %v3993 = vunpack.c.l.b16 %v2785
        %v3994 = vunpack.c.h.b16 %v2785
        %v3995 = vunpack.c.l.b16 %v2786
        %v3996 = vunpack.c.h.b16 %v2786
        %v3997 = vunpack.c.l.b16 %v2787
        %v3998 = vunpack.c.h.b16 %v2787
        %v3999 = vunpack.c.l.b16 %v2788
        %v4000 = vunpack.c.h.b16 %v2788
        %v4001 = vunpack.c.l.b16 %v2789
        %v4002 = vunpack.c.h.b16 %v2789
        %v4003 = vunpack.c.l.b16 %v2790
        %v4004 = vunpack.c.h.b16 %v2790
        %v4005 = vunpack.c.l.b16 %v2791
        %v4006 = vunpack.c.h.b16 %v2791
        %v4007 = vunpack.c.l.b16 %v2792
        %v4008 = vunpack.c.h.b16 %v2792
        %v4009 = vpack.c.b16 %v3505, %v3497
        %v4010 = vpack.c.b16 %v3506, %v3498
        %v4011 = vpack.c.b16 %v3507, %v3499
        %v4012 = vpack.c.b16 %v3508, %v3500
        %v4013 = vpack.c.b16 %v3509, %v3501
        %v4014 = vpack.c.b16 %v3510, %v3502
        %v4015 = vpack.c.b16 %v3511, %v3503
        %v4016 = vpack.c.b16 %v3512, %v3504
        %v4017 = vpack.c.b16 %v3521, %v3513
        %v4018 = vpack.c.b16 %v3522, %v3514
        %v4019 = vpack.c.b16 %v3523, %v3515
        %v4020 = vpack.c.b16 %v3524, %v3516
        %v4021 = vpack.c.b16 %v3525, %v3517
        %v4022 = vpack.c.b16 %v3526, %v3518
        %v4023 = vpack.c.b16 %v3527, %v3519
        %v4024 = vpack.c.b16 %v3528, %v3520
        %v4025 = vpack.c.b16 %v3537, %v3529
        %v4026 = vpack.c.b16 %v3538, %v3530
        %v4027 = vpack.c.b16 %v3539, %v3531
        %v4028 = vpack.c.b16 %v3540, %v3532
        %v4029 = vpack.c.b16 %v3541, %v3533
        %v4030 = vpack.c.b16 %v3542, %v3534
        %v4031 = vpack.c.b16 %v3543, %v3535
        %v4032 = vpack.c.b16 %v3544, %v3536
        %v4033 = vpack.c.b16 %v3553, %v3545
        %v4034 = vpack.c.b16 %v3554, %v3546
        %v4035 = vpack.c.b16 %v3555, %v3547
        %v4036 = vpack.c.b16 %v3556, %v3548
        %v4037 = vpack.c.b16 %v3557, %v3549
        %v4038 = vpack.c.b16 %v3558, %v3550
        %v4039 = vpack.c.b16 %v3559, %v3551
        %v4040 = vpack.c.b16 %v3560, %v3552
        %v4041 = vpack.c.b16 %v3569, %v3561
        %v4042 = vpack.c.b16 %v3570, %v3562
        %v4043 = vpack.c.b16 %v3571, %v3563
        %v4044 = vpack.c.b16 %v3572, %v3564
        %v4045 = vpack.c.b16 %v3573, %v3565
        %v4046 = vpack.c.b16 %v3574, %v3566
        %v4047 = vpack.c.b16 %v3575, %v3567
        %v4048 = vpack.c.b16 %v3576, %v3568
        %v4049 = vpack.c.b16 %v3585, %v3577
        %v4050 = vpack.c.b16 %v3586, %v3578
        %v4051 = vpack.c.b16 %v3587, %v3579
        %v4052 = vpack.c.b16 %v3588, %v3580
        %v4053 = vpack.c.b16 %v3589, %v3581
        %v4054 = vpack.c.b16 %v3590, %v3582
        %v4055 = vpack.c.b16 %v3591, %v3583
        %v4056 = vpack.c.b16 %v3592, %v3584
        %v4057 = vpack.c.b16 %v3601, %v3593
        %v4058 = vpack.c.b16 %v3602, %v3594
        %v4059 = vpack.c.b16 %v3603, %v3595
        %v4060 = vpack.c.b16 %v3604, %v3596
        %v4061 = vpack.c.b16 %v3605, %v3597
        %v4062 = vpack.c.b16 %v3606, %v3598
        %v4063 = vpack.c.b16 %v3607, %v3599
        %v4064 = vpack.c.b16 %v3608, %v3600
        %v4065 = vpack.c.b16 %v3617, %v3609
        %v4066 = vpack.c.b16 %v3618, %v3610
        %v4067 = vpack.c.b16 %v3619, %v3611
        %v4068 = vpack.c.b16 %v3620, %v3612
        %v4069 = vpack.c.b16 %v3621, %v3613
        %v4070 = vpack.c.b16 %v3622, %v3614
        %v4071 = vpack.c.b16 %v3623, %v3615
        %v4072 = vpack.c.b16 %v3624, %v3616
        %v4073 = vpack.c.b16 %v3633, %v3625
        %v4074 = vpack.c.b16 %v3634, %v3626
        %v4075 = vpack.c.b16 %v3635, %v3627
        %v4076 = vpack.c.b16 %v3636, %v3628
        %v4077 = vpack.c.b16 %v3637, %v3629
        %v4078 = vpack.c.b16 %v3638, %v3630
        %v4079 = vpack.c.b16 %v3639, %v3631
        %v4080 = vpack.c.b16 %v3640, %v3632
        %v4081 = vpack.c.b16 %v3649, %v3641
        %v4082 = vpack.c.b16 %v3650, %v3642
        %v4083 = vpack.c.b16 %v3651, %v3643
        %v4084 = vpack.c.b16 %v3652, %v3644
        %v4085 = vpack.c.b16 %v3653, %v3645
        %v4086 = vpack.c.b16 %v3654, %v3646
        %v4087 = vpack.c.b16 %v3655, %v3647
        %v4088 = vpack.c.b16 %v3656, %v3648
        %v4089 = vpack.c.b16 %v3665, %v3657
        %v4090 = vpack.c.b16 %v3666, %v3658
        %v4091 = vpack.c.b16 %v3667, %v3659
        %v4092 = vpack.c.b16 %v3668, %v3660
        %v4093 = vpack.c.b16 %v3669, %v3661
        %v4094 = vpack.c.b16 %v3670, %v3662
        %v4095 = vpack.c.b16 %v3671, %v3663
        %v4096 = vpack.c.b16 %v3672, %v3664
        %v4097 = vpack.c.b16 %v3681, %v3673
        %v4098 = vpack.c.b16 %v3682, %v3674
        %v4099 = vpack.c.b16 %v3683, %v3675
        %v4100 = vpack.c.b16 %v3684, %v3676
        %v4101 = vpack.c.b16 %v3685, %v3677
        %v4102 = vpack.c.b16 %v3686, %v3678
        %v4103 = vpack.c.b16 %v3687, %v3679
        %v4104 = vpack.c.b16 %v3688, %v3680
        %v4105 = vpack.c.b16 %v3697, %v3689
        %v4106 = vpack.c.b16 %v3698, %v3690
        %v4107 = vpack.c.b16 %v3699, %v3691
        %v4108 = vpack.c.b16 %v3700, %v3692
        %v4109 = vpack.c.b16 %v3701, %v3693
        %v4110 = vpack.c.b16 %v3702, %v3694
        %v4111 = vpack.c.b16 %v3703, %v3695
        %v4112 = vpack.c.b16 %v3704, %v3696
        %v4113 = vpack.c.b16 %v3713, %v3705
        %v4114 = vpack.c.b16 %v3714, %v3706
        %v4115 = vpack.c.b16 %v3715, %v3707
        %v4116 = vpack.c.b16 %v3716, %v3708
        %v4117 = vpack.c.b16 %v3717, %v3709
        %v4118 = vpack.c.b16 %v3718, %v3710
        %v4119 = vpack.c.b16 %v3719, %v3711
        %v4120 = vpack.c.b16 %v3720, %v3712
        %v4121 = vpack.c.b16 %v3729, %v3721
        %v4122 = vpack.c.b16 %v3730, %v3722
        %v4123 = vpack.c.b16 %v3731, %v3723
        %v4124 = vpack.c.b16 %v3732, %v3724
        %v4125 = vpack.c.b16 %v3733, %v3725
        %v4126 = vpack.c.b16 %v3734, %v3726
        %v4127 = vpack.c.b16 %v3735, %v3727
        %v4128 = vpack.c.b16 %v3736, %v3728
        %v4129 = vpack.c.b16 %v3745, %v3737
        %v4130 = vpack.c.b16 %v3746, %v3738
        %v4131 = vpack.c.b16 %v3747, %v3739
        %v4132 = vpack.c.b16 %v3748, %v3740
        %v4133 = vpack.c.b16 %v3749, %v3741
        %v4134 = vpack.c.b16 %v3750, %v3742
        %v4135 = vpack.c.b16 %v3751, %v3743
        %v4136 = vpack.c.b16 %v3752, %v3744
        %v4137 = vpack.c.b16 %v3761, %v3753
        %v4138 = vpack.c.b16 %v3762, %v3754
        %v4139 = vpack.c.b16 %v3763, %v3755
        %v4140 = vpack.c.b16 %v3764, %v3756
        %v4141 = vpack.c.b16 %v3765, %v3757
        %v4142 = vpack.c.b16 %v3766, %v3758
        %v4143 = vpack.c.b16 %v3767, %v3759
        %v4144 = vpack.c.b16 %v3768, %v3760
        %v4145 = vpack.c.b16 %v3777, %v3769
        %v4146 = vpack.c.b16 %v3778, %v3770
        %v4147 = vpack.c.b16 %v3779, %v3771
        %v4148 = vpack.c.b16 %v3780, %v3772
        %v4149 = vpack.c.b16 %v3781, %v3773
        %v4150 = vpack.c.b16 %v3782, %v3774
        %v4151 = vpack.c.b16 %v3783, %v3775
        %v4152 = vpack.c.b16 %v3784, %v3776
        %v4153 = vpack.c.b16 %v3793, %v3785
        %v4154 = vpack.c.b16 %v3794, %v3786
        %v4155 = vpack.c.b16 %v3795, %v3787
        %v4156 = vpack.c.b16 %v3796, %v3788
        %v4157 = vpack.c.b16 %v3797, %v3789
        %v4158 = vpack.c.b16 %v3798, %v3790
        %v4159 = vpack.c.b16 %v3799, %v3791
        %v4160 = vpack.c.b16 %v3800, %v3792
        %v4161 = vpack.c.b16 %v3809, %v3801
        %v4162 = vpack.c.b16 %v3810, %v3802
        %v4163 = vpack.c.b16 %v3811, %v3803
        %v4164 = vpack.c.b16 %v3812, %v3804
        %v4165 = vpack.c.b16 %v3813, %v3805
        %v4166 = vpack.c.b16 %v3814, %v3806
        %v4167 = vpack.c.b16 %v3815, %v3807
        %v4168 = vpack.c.b16 %v3816, %v3808
        %v4169 = vpack.c.b16 %v3825, %v3817
        %v4170 = vpack.c.b16 %v3826, %v3818
        %v4171 = vpack.c.b16 %v3827, %v3819
        %v4172 = vpack.c.b16 %v3828, %v3820
        %v4173 = vpack.c.b16 %v3829, %v3821
        %v4174 = vpack.c.b16 %v3830, %v3822
        %v4175 = vpack.c.b16 %v3831, %v3823
        %v4176 = vpack.c.b16 %v3832, %v3824
        %v4177 = vpack.c.b16 %v3841, %v3833
        %v4178 = vpack.c.b16 %v3842, %v3834
        %v4179 = vpack.c.b16 %v3843, %v3835
        %v4180 = vpack.c.b16 %v3844, %v3836
        %v4181 = vpack.c.b16 %v3845, %v3837
        %v4182 = vpack.c.b16 %v3846, %v3838
        %v4183 = vpack.c.b16 %v3847, %v3839
        %v4184 = vpack.c.b16 %v3848, %v3840
        %v4185 = vpack.c.b16 %v3857, %v3849
        %v4186 = vpack.c.b16 %v3858, %v3850
        %v4187 = vpack.c.b16 %v3859, %v3851
        %v4188 = vpack.c.b16 %v3860, %v3852
        %v4189 = vpack.c.b16 %v3861, %v3853
        %v4190 = vpack.c.b16 %v3862, %v3854
        %v4191 = vpack.c.b16 %v3863, %v3855
        %v4192 = vpack.c.b16 %v3864, %v3856
        %v4193 = vpack.c.b16 %v3873, %v3865
        %v4194 = vpack.c.b16 %v3874, %v3866
        %v4195 = vpack.c.b16 %v3875, %v3867
        %v4196 = vpack.c.b16 %v3876, %v3868
        %v4197 = vpack.c.b16 %v3877, %v3869
        %v4198 = vpack.c.b16 %v3878, %v3870
        %v4199 = vpack.c.b16 %v3879, %v3871
        %v4200 = vpack.c.b16 %v3880, %v3872
        %v4201 = vpack.c.b16 %v3889, %v3881
        %v4202 = vpack.c.b16 %v3890, %v3882
        %v4203 = vpack.c.b16 %v3891, %v3883
        %v4204 = vpack.c.b16 %v3892, %v3884
        %v4205 = vpack.c.b16 %v3893, %v3885
        %v4206 = vpack.c.b16 %v3894, %v3886
        %v4207 = vpack.c.b16 %v3895, %v3887
        %v4208 = vpack.c.b16 %v3896, %v3888
        %v4209 = vpack.c.b16 %v3905, %v3897
        %v4210 = vpack.c.b16 %v3906, %v3898
        %v4211 = vpack.c.b16 %v3907, %v3899
        %v4212 = vpack.c.b16 %v3908, %v3900
        %v4213 = vpack.c.b16 %v3909, %v3901
        %v4214 = vpack.c.b16 %v3910, %v3902
        %v4215 = vpack.c.b16 %v3911, %v3903
        %v4216 = vpack.c.b16 %v3912, %v3904
        %v4217 = vpack.c.b16 %v3921, %v3913
        %v4218 = vpack.c.b16 %v3922, %v3914
        %v4219 = vpack.c.b16 %v3923, %v3915
        %v4220 = vpack.c.b16 %v3924, %v3916
        %v4221 = vpack.c.b16 %v3925, %v3917
        %v4222 = vpack.c.b16 %v3926, %v3918
        %v4223 = vpack.c.b16 %v3927, %v3919
        %v4224 = vpack.c.b16 %v3928, %v3920
        %v4225 = vpack.c.b16 %v3937, %v3929
        %v4226 = vpack.c.b16 %v3938, %v3930
        %v4227 = vpack.c.b16 %v3939, %v3931
        %v4228 = vpack.c.b16 %v3940, %v3932
        %v4229 = vpack.c.b16 %v3941, %v3933
        %v4230 = vpack.c.b16 %v3942, %v3934
        %v4231 = vpack.c.b16 %v3943, %v3935
        %v4232 = vpack.c.b16 %v3944, %v3936
        %v4233 = vpack.c.b16 %v3953, %v3945
        %v4234 = vpack.c.b16 %v3954, %v3946
        %v4235 = vpack.c.b16 %v3955, %v3947
        %v4236 = vpack.c.b16 %v3956, %v3948
        %v4237 = vpack.c.b16 %v3957, %v3949
        %v4238 = vpack.c.b16 %v3958, %v3950
        %v4239 = vpack.c.b16 %v3959, %v3951
        %v4240 = vpack.c.b16 %v3960, %v3952
        %v4241 = vpack.c.b16 %v3969, %v3961
        %v4242 = vpack.c.b16 %v3970, %v3962
        %v4243 = vpack.c.b16 %v3971, %v3963
        %v4244 = vpack.c.b16 %v3972, %v3964
        %v4245 = vpack.c.b16 %v3973, %v3965
        %v4246 = vpack.c.b16 %v3974, %v3966
        %v4247 = vpack.c.b16 %v3975, %v3967
        %v4248 = vpack.c.b16 %v3976, %v3968
        %v4249 = vpack.c.b16 %v3985, %v3977
        %v4250 = vpack.c.b16 %v3986, %v3978
        %v4251 = vpack.c.b16 %v3987, %v3979
        %v4252 = vpack.c.b16 %v3988, %v3980
        %v4253 = vpack.c.b16 %v3989, %v3981
        %v4254 = vpack.c.b16 %v3990, %v3982
        %v4255 = vpack.c.b16 %v3991, %v3983
        %v4256 = vpack.c.b16 %v3992, %v3984
        %v4257 = vpack.c.b16 %v4001, %v3993
        %v4258 = vpack.c.b16 %v4002, %v3994
        %v4259 = vpack.c.b16 %v4003, %v3995
        %v4260 = vpack.c.b16 %v4004, %v3996
        %v4261 = vpack.c.b16 %v4005, %v3997
        %v4262 = vpack.c.b16 %v4006, %v3998
        %v4263 = vpack.c.b16 %v4007, %v3999
        %v4264 = vpack.c.b16 %v4008, %v4000
        %4521 = vmatprep.subr.bf16.mxu0 0
        %4522 = vmatpush1.bf16.msra.mxu0 %v2793
        %4523 = vmatprep.subr.bf16.mxu0 0
        %4524 = vmatpush1.bf16.msra.mxu0 %v2794
        %4525 = vmatprep.subr.bf16.mxu0 0
        %4526 = vmatpush1.bf16.msra.mxu0 %v2795
        %4527 = vmatprep.subr.bf16.mxu0 0
        %4528 = vmatpush1.bf16.msra.mxu0 %v2796
        %4529 = vmatprep.subr.bf16.mxu0 0
        %4530 = vmatpush1.bf16.msra.mxu0 %v2797
        %4531 = vmatprep.subr.bf16.mxu0 0
        %4532 = vmatpush1.bf16.msra.mxu0 %v2798
        %4533 = vmatprep.subr.bf16.mxu0 0
        %4534 = vmatpush1.bf16.msra.mxu0 %v2799
        %4535 = vmatprep.subr.bf16.mxu0 0
        %4536 = vmatpush1.bf16.msra.mxu0 %v2800
        %4537 = vmatprep.subr.bf16.mxu0 0
        %4538 = vmatpush1.bf16.msra.mxu0 %v2801
        %4539 = vmatprep.subr.bf16.mxu0 0
        %4540 = vmatpush1.bf16.msra.mxu0 %v2802
        %4541 = vmatprep.subr.bf16.mxu0 0
        %4542 = vmatpush1.bf16.msra.mxu0 %v2803
        %4543 = vmatprep.subr.bf16.mxu0 0
        %4544 = vmatpush1.bf16.msra.mxu0 %v2804
        %4545 = vmatprep.subr.bf16.mxu0 0
        %4546 = vmatpush1.bf16.msra.mxu0 %v2805
        %4547 = vmatprep.subr.bf16.mxu0 0
        %4548 = vmatpush1.bf16.msra.mxu0 %v2806
        %4549 = vmatprep.subr.bf16.mxu0 0
        %4550 = vmatpush1.bf16.msra.mxu0 %v2807
        %4551 = vmatprep.subr.bf16.mxu0 0
        %4552 = vmatpush1.bf16.msra.mxu0 %v2808
        %4553 = vmatprep.mubr.bf16.mxu0 %v4010
        %4554 = vmatmul.mubr.bf16.gmra.mrb[0].mxu0 %v4009
        %v4555 = vpop.f32.mrb[0].mxu0
        %v4556 = vadd.f32 %v2924, %v4555
        %v4557 = vpop.f32.mrb[0].mxu0
        %v4558 = vpop.f32.mrb[0].mxu0
        %v4559 = vadd.f32 %v2929, %v4558
        %v4560 = vpop.f32.mrb[0].mxu0
        %4561 = vmatprep.mubr.bf16.mxu0 %v4018
        %4562 = vmatmul.mubr.bf16.gmra.mrb[0].mxu0 %v4017
        %v4563 = vpop.f32.mrb[0].mxu0
        %v4564 = vadd.f32 %v2934, %v4563
        %v4565 = vpop.f32.mrb[0].mxu0
        %v4566 = vpop.f32.mrb[0].mxu0
        %v4567 = vadd.f32 %v2939, %v4566
        %v4568 = vpop.f32.mrb[0].mxu0
        %4569 = vmatprep.mubr.bf16.mxu0 %v4026
        %4570 = vmatmul.mubr.bf16.gmra.mrb[0].mxu0 %v4025
        %v4571 = vpop.f32.mrb[0].mxu0
        %v4572 = vadd.f32 %v2944, %v4571
        %v4573 = vpop.f32.mrb[0].mxu0
        %v4574 = vpop.f32.mrb[0].mxu0
        %v4575 = vadd.f32 %v2949, %v4574
        %v4576 = vpop.f32.mrb[0].mxu0
        %4577 = vmatprep.mubr.bf16.mxu0 %v4034
        %4578 = vmatmul.mubr.bf16.gmra.mrb[0].mxu0 %v4033
        %v4579 = vpop.f32.mrb[0].mxu0
        %v4580 = vadd.f32 %v2954, %v4579
        %v4581 = vpop.f32.mrb[0].mxu0
        %v4582 = vpop.f32.mrb[0].mxu0
        %v4583 = vadd.f32 %v2959, %v4582
        %v4584 = vpop.f32.mrb[0].mxu0
        %4585 = vmatprep.mubr.bf16.mxu0 %v4042
        %4586 = vmatmul.mubr.bf16.gmra.mrb[0].mxu0 %v4041
        %v4587 = vpop.f32.mrb[0].mxu0
        %v4588 = vadd.f32 %v2964, %v4587
        %v4589 = vpop.f32.mrb[0].mxu0
        %v4590 = vpop.f32.mrb[0].mxu0
        %v4591 = vadd.f32 %v2969, %v4590
        %v4592 = vpop.f32.mrb[0].mxu0
        %4593 = vmatprep.mubr.bf16.mxu0 %v4050
        %4594 = vmatmul.mubr.bf16.gmra.mrb[0].mxu0 %v4049
        %v4595 = vpop.f32.mrb[0].mxu0
        %v4596 = vadd.f32 %v2974, %v4595
        %v4597 = vpop.f32.mrb[0].mxu0
        %v4598 = vpop.f32.mrb[0].mxu0
        %v4599 = vadd.f32 %v2979, %v4598
        %v4600 = vpop.f32.mrb[0].mxu0
        %4601 = vmatprep.mubr.bf16.mxu0 %v4058
        %4602 = vmatmul.mubr.bf16.gmra.mrb[0].mxu0 %v4057
        %v4603 = vpop.f32.mrb[0].mxu0
        %v4604 = vadd.f32 %v2984, %v4603
        %v4605 = vpop.f32.mrb[0].mxu0
        %v4606 = vpop.f32.mrb[0].mxu0
        %v4607 = vadd.f32 %v2989, %v4606
        %v4608 = vpop.f32.mrb[0].mxu0
        %4609 = vmatprep.mubr.bf16.mxu0 %v4066
        %4610 = vmatmul.mubr.bf16.gmra.mrb[0].mxu0 %v4065
        %v4611 = vpop.f32.mrb[0].mxu0
        %v4612 = vadd.f32 %v2994, %v4611
        %v4613 = vpop.f32.mrb[0].mxu0
        %v4614 = vpop.f32.mrb[0].mxu0
        %v4615 = vadd.f32 %v2999, %v4614
        %v4616 = vpop.f32.mrb[0].mxu0
        %4617 = vmatprep.mubr.bf16.mxu0 %v4074
        %4618 = vmatmul.mubr.bf16.gmra.mrb[0].mxu0 %v4073
        %v4619 = vpop.f32.mrb[0].mxu0
        %v4620 = vadd.f32 %v3004, %v4619
        %v4621 = vpop.f32.mrb[0].mxu0
        %v4622 = vpop.f32.mrb[0].mxu0
        %v4623 = vadd.f32 %v3009, %v4622
        %v4624 = vpop.f32.mrb[0].mxu0
        %4625 = vmatprep.mubr.bf16.mxu0 %v4082
        %4626 = vmatmul.mubr.bf16.gmra.mrb[0].mxu0 %v4081
        %v4627 = vpop.f32.mrb[0].mxu0
        %v4628 = vadd.f32 %v3014, %v4627
        %v4629 = vpop.f32.mrb[0].mxu0
        %v4630 = vpop.f32.mrb[0].mxu0
        %v4631 = vadd.f32 %v3019, %v4630
        %v4632 = vpop.f32.mrb[0].mxu0
        %4633 = vmatprep.mubr.bf16.mxu0 %v4090
        %4634 = vmatmul.mubr.bf16.gmra.mrb[0].mxu0 %v4089
        %v4635 = vpop.f32.mrb[0].mxu0
        %v4636 = vadd.f32 %v3024, %v4635
        %v4637 = vpop.f32.mrb[0].mxu0
        %v4638 = vpop.f32.mrb[0].mxu0
        %v4639 = vadd.f32 %v3029, %v4638
        %v4640 = vpop.f32.mrb[0].mxu0
        %4641 = vmatprep.mubr.bf16.mxu0 %v4098
        %4642 = vmatmul.mubr.bf16.gmra.mrb[0].mxu0 %v4097
        %v4643 = vpop.f32.mrb[0].mxu0
        %v4644 = vadd.f32 %v3034, %v4643
        %v4645 = vpop.f32.mrb[0].mxu0
        %v4646 = vpop.f32.mrb[0].mxu0
        %v4647 = vadd.f32 %v3039, %v4646
        %v4648 = vpop.f32.mrb[0].mxu0
        %4649 = vmatprep.mubr.bf16.mxu0 %v4106
        %4650 = vmatmul.mubr.bf16.gmra.mrb[0].mxu0 %v4105
        %v4651 = vpop.f32.mrb[0].mxu0
        %v4652 = vadd.f32 %v3044, %v4651
        %v4653 = vpop.f32.mrb[0].mxu0
        %v4654 = vpop.f32.mrb[0].mxu0
        %v4655 = vadd.f32 %v3049, %v4654
        %v4656 = vpop.f32.mrb[0].mxu0
        %4657 = vmatprep.mubr.bf16.mxu0 %v4114
        %4658 = vmatmul.mubr.bf16.gmra.mrb[0].mxu0 %v4113
        %v4659 = vpop.f32.mrb[0].mxu0
        %v4660 = vadd.f32 %v3054, %v4659
        %v4661 = vpop.f32.mrb[0].mxu0
        %v4662 = vpop.f32.mrb[0].mxu0
        %v4663 = vadd.f32 %v3059, %v4662
        %v4664 = vpop.f32.mrb[0].mxu0
        %4665 = vmatprep.mubr.bf16.mxu0 %v4122
        %4666 = vmatmul.mubr.bf16.gmra.mrb[0].mxu0 %v4121
        %v4667 = vpop.f32.mrb[0].mxu0
        %v4668 = vadd.f32 %v3064, %v4667
        %v4669 = vpop.f32.mrb[0].mxu0
        %v4670 = vpop.f32.mrb[0].mxu0
        %v4671 = vadd.f32 %v3069, %v4670
        %v4672 = vpop.f32.mrb[0].mxu0
        %4673 = vmatprep.mubr.bf16.mxu0 %v4130
        %4674 = vmatmul.mubr.bf16.gmra.mrb[0].mxu0 %v4129
        %v4675 = vpop.f32.mrb[0].mxu0
        %v4676 = vadd.f32 %v3074, %v4675
        %v4677 = vpop.f32.mrb[0].mxu0
        %v4678 = vpop.f32.mrb[0].mxu0
        %v4679 = vadd.f32 %v3079, %v4678
        %v4680 = vpop.f32.mrb[0].mxu0
        %4681 = vmatprep.mubr.bf16.mxu0 %v4138
        %4682 = vmatmul.mubr.bf16.gmra.mrb[0].mxu0 %v4137
        %v4683 = vpop.f32.mrb[0].mxu0
        %v4684 = vadd.f32 %v3084, %v4683
        %v4685 = vpop.f32.mrb[0].mxu0
        %v4686 = vpop.f32.mrb[0].mxu0
        %v4687 = vadd.f32 %v3089, %v4686
        %v4688 = vpop.f32.mrb[0].mxu0
        %4689 = vmatprep.mubr.bf16.mxu0 %v4146
        %4690 = vmatmul.mubr.bf16.gmra.mrb[0].mxu0 %v4145
        %v4691 = vpop.f32.mrb[0].mxu0
        %v4692 = vadd.f32 %v3094, %v4691
        %v4693 = vpop.f32.mrb[0].mxu0
        %v4694 = vpop.f32.mrb[0].mxu0
        %v4695 = vadd.f32 %v3099, %v4694
        %v4696 = vpop.f32.mrb[0].mxu0
        %4697 = vmatprep.mubr.bf16.mxu0 %v4154
        %4698 = vmatmul.mubr.bf16.gmra.mrb[0].mxu0 %v4153
        %v4699 = vpop.f32.mrb[0].mxu0
        %v4700 = vadd.f32 %v3104, %v4699
        %v4701 = vpop.f32.mrb[0].mxu0
        %v4702 = vpop.f32.mrb[0].mxu0
        %v4703 = vadd.f32 %v3109, %v4702
        %v4704 = vpop.f32.mrb[0].mxu0
        %4705 = vmatprep.mubr.bf16.mxu0 %v4162
        %4706 = vmatmul.mubr.bf16.gmra.mrb[0].mxu0 %v4161
        %v4707 = vpop.f32.mrb[0].mxu0
        %v4708 = vadd.f32 %v3114, %v4707
        %v4709 = vpop.f32.mrb[0].mxu0
        %v4710 = vpop.f32.mrb[0].mxu0
        %v4711 = vadd.f32 %v3119, %v4710
        %v4712 = vpop.f32.mrb[0].mxu0
        %4713 = vmatprep.mubr.bf16.mxu0 %v4170
        %4714 = vmatmul.mubr.bf16.gmra.mrb[0].mxu0 %v4169
        %v4715 = vpop.f32.mrb[0].mxu0
        %v4716 = vadd.f32 %v3124, %v4715
        %v4717 = vpop.f32.mrb[0].mxu0
        %v4718 = vpop.f32.mrb[0].mxu0
        %v4719 = vadd.f32 %v3129, %v4718
        %v4720 = vpop.f32.mrb[0].mxu0
        %4721 = vmatprep.mubr.bf16.mxu0 %v4178
        %4722 = vmatmul.mubr.bf16.gmra.mrb[0].mxu0 %v4177
        %v4723 = vpop.f32.mrb[0].mxu0
        %v4724 = vadd.f32 %v3134, %v4723
        %v4725 = vpop.f32.mrb[0].mxu0
        %v4726 = vpop.f32.mrb[0].mxu0
        %v4727 = vadd.f32 %v3139, %v4726
        %v4728 = vpop.f32.mrb[0].mxu0
        %4729 = vmatprep.mubr.bf16.mxu0 %v4186
        %4730 = vmatmul.mubr.bf16.gmra.mrb[0].mxu0 %v4185
        %v4731 = vpop.f32.mrb[0].mxu0
        %v4732 = vadd.f32 %v3144, %v4731
        %v4733 = vpop.f32.mrb[0].mxu0
        %v4734 = vpop.f32.mrb[0].mxu0
        %v4735 = vadd.f32 %v3149, %v4734
        %v4736 = vpop.f32.mrb[0].mxu0
        %4737 = vmatprep.mubr.bf16.mxu0 %v4194
        %4738 = vmatmul.mubr.bf16.gmra.mrb[0].mxu0 %v4193
        %v4739 = vpop.f32.mrb[0].mxu0
        %v4740 = vadd.f32 %v3154, %v4739
        %v4741 = vpop.f32.mrb[0].mxu0
        %v4742 = vpop.f32.mrb[0].mxu0
        %v4743 = vadd.f32 %v3159, %v4742
        %v4744 = vpop.f32.mrb[0].mxu0
        %4745 = vmatprep.mubr.bf16.mxu0 %v4202
        %4746 = vmatmul.mubr.bf16.gmra.mrb[0].mxu0 %v4201
        %v4747 = vpop.f32.mrb[0].mxu0
        %v4748 = vadd.f32 %v3164, %v4747
        %v4749 = vpop.f32.mrb[0].mxu0
        %v4750 = vpop.f32.mrb[0].mxu0
        %v4751 = vadd.f32 %v3169, %v4750
        %v4752 = vpop.f32.mrb[0].mxu0
        %4753 = vmatprep.mubr.bf16.mxu0 %v4210
        %4754 = vmatmul.mubr.bf16.gmra.mrb[0].mxu0 %v4209
        %v4755 = vpop.f32.mrb[0].mxu0
        %v4756 = vadd.f32 %v3174, %v4755
        %v4757 = vpop.f32.mrb[0].mxu0
        %v4758 = vpop.f32.mrb[0].mxu0
        %v4759 = vadd.f32 %v3179, %v4758
        %v4760 = vpop.f32.mrb[0].mxu0
        %4761 = vmatprep.mubr.bf16.mxu0 %v4218
        %4762 = vmatmul.mubr.bf16.gmra.mrb[0].mxu0 %v4217
        %v4763 = vpop.f32.mrb[0].mxu0
        %v4764 = vadd.f32 %v3184, %v4763
        %v4765 = vpop.f32.mrb[0].mxu0
        %v4766 = vpop.f32.mrb[0].mxu0
        %v4767 = vadd.f32 %v3189, %v4766
        %v4768 = vpop.f32.mrb[0].mxu0
        %4769 = vmatprep.mubr.bf16.mxu0 %v4226
        %4770 = vmatmul.mubr.bf16.gmra.mrb[0].mxu0 %v4225
        %v4771 = vpop.f32.mrb[0].mxu0
        %v4772 = vadd.f32 %v3194, %v4771
        %v4773 = vpop.f32.mrb[0].mxu0
        %v4774 = vpop.f32.mrb[0].mxu0
        %v4775 = vadd.f32 %v3199, %v4774
        %v4776 = vpop.f32.mrb[0].mxu0
        %4777 = vmatprep.mubr.bf16.mxu0 %v4234
        %4778 = vmatmul.mubr.bf16.gmra.mrb[0].mxu0 %v4233
        %v4779 = vpop.f32.mrb[0].mxu0
        %v4780 = vadd.f32 %v3204, %v4779
        %v4781 = vpop.f32.mrb[0].mxu0
        %v4782 = vpop.f32.mrb[0].mxu0
        %v4783 = vadd.f32 %v3209, %v4782
        %v4784 = vpop.f32.mrb[0].mxu0
        %4785 = vmatprep.mubr.bf16.mxu0 %v4242
        %4786 = vmatmul.mubr.bf16.gmra.mrb[0].mxu0 %v4241
        %v4787 = vpop.f32.mrb[0].mxu0
        %v4788 = vadd.f32 %v3214, %v4787
        %v4789 = vpop.f32.mrb[0].mxu0
        %v4790 = vpop.f32.mrb[0].mxu0
        %v4791 = vadd.f32 %v3219, %v4790
        %v4792 = vpop.f32.mrb[0].mxu0
        %4793 = vmatprep.mubr.bf16.mxu0 %v4250
        %4794 = vmatmul.mubr.bf16.gmra.mrb[0].mxu0 %v4249
        %v4795 = vpop.f32.mrb[0].mxu0
        %v4796 = vadd.f32 %v3224, %v4795
        %v4797 = vpop.f32.mrb[0].mxu0
        %v4798 = vpop.f32.mrb[0].mxu0
        %v4799 = vadd.f32 %v3229, %v4798
        %v4800 = vpop.f32.mrb[0].mxu0
        %4801 = vmatprep.mubr.bf16.mxu0 %v4258
        %4802 = vmatmul.mubr.bf16.gmra.mrb[0].mxu0 %v4257
        %v4803 = vpop.f32.mrb[0].mxu0
        %v4804 = vadd.f32 %v3234, %v4803
        %v4805 = vpop.f32.mrb[0].mxu0
        %v4806 = vpop.f32.mrb[0].mxu0
        %v4807 = vadd.f32 %v3239, %v4806
        %v4808 = vpop.f32.mrb[0].mxu0
        %4809 = vdwg.mxu0
        %4810 = vmatprep.subr.bf16.mxu0 0
        %4811 = vmatpush1.bf16.msra.mxu0 %v2809
        %4812 = vmatprep.subr.bf16.mxu0 0
        %4813 = vmatpush1.bf16.msra.mxu0 %v2810
        %4814 = vmatprep.subr.bf16.mxu0 0
        %4815 = vmatpush1.bf16.msra.mxu0 %v2811
        %4816 = vmatprep.subr.bf16.mxu0 0
        %4817 = vmatpush1.bf16.msra.mxu0 %v2812
        %4818 = vmatprep.subr.bf16.mxu0 0
        %4819 = vmatpush1.bf16.msra.mxu0 %v2813
        %4820 = vmatprep.subr.bf16.mxu0 0
        %4821 = vmatpush1.bf16.msra.mxu0 %v2814
        %4822 = vmatprep.subr.bf16.mxu0 0
        %4823 = vmatpush1.bf16.msra.mxu0 %v2815
        %4824 = vmatprep.subr.bf16.mxu0 0
        %4825 = vmatpush1.bf16.msra.mxu0 %v2816
        %4826 = vmatprep.subr.bf16.mxu0 0
        %4827 = vmatpush1.bf16.msra.mxu0 %v2817
        %4828 = vmatprep.subr.bf16.mxu0 0
        %4829 = vmatpush1.bf16.msra.mxu0 %v2818
        %4830 = vmatprep.subr.bf16.mxu0 0
        %4831 = vmatpush1.bf16.msra.mxu0 %v2819
        %4832 = vmatprep.subr.bf16.mxu0 0
        %4833 = vmatpush1.bf16.msra.mxu0 %v2820
        %4834 = vmatprep.subr.bf16.mxu0 0
        %4835 = vmatpush1.bf16.msra.mxu0 %v2821
        %4836 = vmatprep.subr.bf16.mxu0 0
        %4837 = vmatpush1.bf16.msra.mxu0 %v2822
        %4838 = vmatprep.subr.bf16.mxu0 0
        %4839 = vmatpush1.bf16.msra.mxu0 %v2823
        %4840 = vmatprep.subr.bf16.mxu0 0
        %4841 = vmatpush1.bf16.msra.mxu0 %v2824
        %4842 = vmatprep.mubr.bf16.mxu0 %v4012
        %4843 = vmatmul.mubr.bf16.gmra.mrb[0].mxu0 %v4011
        %v4844 = vpop.f32.mrb[0].mxu0
        %v4845 = vadd.f32 %v4556, %v4844
        %v4846 = vpop.f32.mrb[0].mxu0
        %v4847 = vpop.f32.mrb[0].mxu0
        %v4848 = vadd.f32 %v4559, %v4847
        %v4849 = vpop.f32.mrb[0].mxu0
        %4850 = vmatprep.mubr.bf16.mxu0 %v4020
        %4851 = vmatmul.mubr.bf16.gmra.mrb[0].mxu0 %v4019
        %v4852 = vpop.f32.mrb[0].mxu0
        %v4853 = vadd.f32 %v4564, %v4852
        %v4854 = vpop.f32.mrb[0].mxu0
        %v4855 = vpop.f32.mrb[0].mxu0
        %v4856 = vadd.f32 %v4567, %v4855
        %v4857 = vpop.f32.mrb[0].mxu0
        %4858 = vmatprep.mubr.bf16.mxu0 %v4028
        %4859 = vmatmul.mubr.bf16.gmra.mrb[0].mxu0 %v4027
        %v4860 = vpop.f32.mrb[0].mxu0
        %v4861 = vadd.f32 %v4572, %v4860
        %v4862 = vpop.f32.mrb[0].mxu0
        %v4863 = vpop.f32.mrb[0].mxu0
        %v4864 = vadd.f32 %v4575, %v4863
        %v4865 = vpop.f32.mrb[0].mxu0
        %4866 = vmatprep.mubr.bf16.mxu0 %v4036
        %4867 = vmatmul.mubr.bf16.gmra.mrb[0].mxu0 %v4035
        %v4868 = vpop.f32.mrb[0].mxu0
        %v4869 = vadd.f32 %v4580, %v4868
        %v4870 = vpop.f32.mrb[0].mxu0
        %v4871 = vpop.f32.mrb[0].mxu0
        %v4872 = vadd.f32 %v4583, %v4871
        %v4873 = vpop.f32.mrb[0].mxu0
        %4874 = vmatprep.mubr.bf16.mxu0 %v4044
        %4875 = vmatmul.mubr.bf16.gmra.mrb[0].mxu0 %v4043
        %v4876 = vpop.f32.mrb[0].mxu0
        %v4877 = vadd.f32 %v4588, %v4876
        %v4878 = vpop.f32.mrb[0].mxu0
        %v4879 = vpop.f32.mrb[0].mxu0
        %v4880 = vadd.f32 %v4591, %v4879
        %v4881 = vpop.f32.mrb[0].mxu0
        %4882 = vmatprep.mubr.bf16.mxu0 %v4052
        %4883 = vmatmul.mubr.bf16.gmra.mrb[0].mxu0 %v4051
        %v4884 = vpop.f32.mrb[0].mxu0
        %v4885 = vadd.f32 %v4596, %v4884
        %v4886 = vpop.f32.mrb[0].mxu0
        %v4887 = vpop.f32.mrb[0].mxu0
        %v4888 = vadd.f32 %v4599, %v4887
        %v4889 = vpop.f32.mrb[0].mxu0
        %4890 = vmatprep.mubr.bf16.mxu0 %v4060
        %4891 = vmatmul.mubr.bf16.gmra.mrb[0].mxu0 %v4059
        %v4892 = vpop.f32.mrb[0].mxu0
        %v4893 = vadd.f32 %v4604, %v4892
        %v4894 = vpop.f32.mrb[0].mxu0
        %v4895 = vpop.f32.mrb[0].mxu0
        %v4896 = vadd.f32 %v4607, %v4895
        %v4897 = vpop.f32.mrb[0].mxu0
        %4898 = vmatprep.mubr.bf16.mxu0 %v4068
        %4899 = vmatmul.mubr.bf16.gmra.mrb[0].mxu0 %v4067
        %v4900 = vpop.f32.mrb[0].mxu0
        %v4901 = vadd.f32 %v4612, %v4900
        %v4902 = vpop.f32.mrb[0].mxu0
        %v4903 = vpop.f32.mrb[0].mxu0
        %v4904 = vadd.f32 %v4615, %v4903
        %v4905 = vpop.f32.mrb[0].mxu0
        %4906 = vmatprep.mubr.bf16.mxu0 %v4076
        %4907 = vmatmul.mubr.bf16.gmra.mrb[0].mxu0 %v4075
        %v4908 = vpop.f32.mrb[0].mxu0
        %v4909 = vadd.f32 %v4620, %v4908
        %v4910 = vpop.f32.mrb[0].mxu0
        %v4911 = vpop.f32.mrb[0].mxu0
        %v4912 = vadd.f32 %v4623, %v4911
        %v4913 = vpop.f32.mrb[0].mxu0
        %4914 = vmatprep.mubr.bf16.mxu0 %v4084
        %4915 = vmatmul.mubr.bf16.gmra.mrb[0].mxu0 %v4083
        %v4916 = vpop.f32.mrb[0].mxu0
        %v4917 = vadd.f32 %v4628, %v4916
        %v4918 = vpop.f32.mrb[0].mxu0
        %v4919 = vpop.f32.mrb[0].mxu0
        %v4920 = vadd.f32 %v4631, %v4919
        %v4921 = vpop.f32.mrb[0].mxu0
        %4922 = vmatprep.mubr.bf16.mxu0 %v4092
        %4923 = vmatmul.mubr.bf16.gmra.mrb[0].mxu0 %v4091
        %v4924 = vpop.f32.mrb[0].mxu0
        %v4925 = vadd.f32 %v4636, %v4924
        %v4926 = vpop.f32.mrb[0].mxu0
        %v4927 = vpop.f32.mrb[0].mxu0
        %v4928 = vadd.f32 %v4639, %v4927
        %v4929 = vpop.f32.mrb[0].mxu0
        %4930 = vmatprep.mubr.bf16.mxu0 %v4100
        %4931 = vmatmul.mubr.bf16.gmra.mrb[0].mxu0 %v4099
        %v4932 = vpop.f32.mrb[0].mxu0
        %v4933 = vadd.f32 %v4644, %v4932
        %v4934 = vpop.f32.mrb[0].mxu0
        %v4935 = vpop.f32.mrb[0].mxu0
        %v4936 = vadd.f32 %v4647, %v4935
        %v4937 = vpop.f32.mrb[0].mxu0
        %4938 = vmatprep.mubr.bf16.mxu0 %v4108
        %4939 = vmatmul.mubr.bf16.gmra.mrb[0].mxu0 %v4107
        %v4940 = vpop.f32.mrb[0].mxu0
        %v4941 = vadd.f32 %v4652, %v4940
        %v4942 = vpop.f32.mrb[0].mxu0
        %v4943 = vpop.f32.mrb[0].mxu0
        %v4944 = vadd.f32 %v4655, %v4943
        %v4945 = vpop.f32.mrb[0].mxu0
        %4946 = vmatprep.mubr.bf16.mxu0 %v4116
        %4947 = vmatmul.mubr.bf16.gmra.mrb[0].mxu0 %v4115
        %v4948 = vpop.f32.mrb[0].mxu0
        %v4949 = vadd.f32 %v4660, %v4948
        %v4950 = vpop.f32.mrb[0].mxu0
        %v4951 = vpop.f32.mrb[0].mxu0
        %v4952 = vadd.f32 %v4663, %v4951
        %v4953 = vpop.f32.mrb[0].mxu0
        %4954 = vmatprep.mubr.bf16.mxu0 %v4124
        %4955 = vmatmul.mubr.bf16.gmra.mrb[0].mxu0 %v4123
        %v4956 = vpop.f32.mrb[0].mxu0
        %v4957 = vadd.f32 %v4668, %v4956
        %v4958 = vpop.f32.mrb[0].mxu0
        %v4959 = vpop.f32.mrb[0].mxu0
        %v4960 = vadd.f32 %v4671, %v4959
        %v4961 = vpop.f32.mrb[0].mxu0
        %4962 = vmatprep.mubr.bf16.mxu0 %v4132
        %4963 = vmatmul.mubr.bf16.gmra.mrb[0].mxu0 %v4131
        %v4964 = vpop.f32.mrb[0].mxu0
        %v4965 = vadd.f32 %v4676, %v4964
        %v4966 = vpop.f32.mrb[0].mxu0
        %v4967 = vpop.f32.mrb[0].mxu0
        %v4968 = vadd.f32 %v4679, %v4967
        %v4969 = vpop.f32.mrb[0].mxu0
        %4970 = vmatprep.mubr.bf16.mxu0 %v4140
        %4971 = vmatmul.mubr.bf16.gmra.mrb[0].mxu0 %v4139
        %v4972 = vpop.f32.mrb[0].mxu0
        %v4973 = vadd.f32 %v4684, %v4972
        %v4974 = vpop.f32.mrb[0].mxu0
        %v4975 = vpop.f32.mrb[0].mxu0
        %v4976 = vadd.f32 %v4687, %v4975
        %v4977 = vpop.f32.mrb[0].mxu0
        %4978 = vmatprep.mubr.bf16.mxu0 %v4148
        %4979 = vmatmul.mubr.bf16.gmra.mrb[0].mxu0 %v4147
        %v4980 = vpop.f32.mrb[0].mxu0
        %v4981 = vadd.f32 %v4692, %v4980
        %v4982 = vpop.f32.mrb[0].mxu0
        %v4983 = vpop.f32.mrb[0].mxu0
        %v4984 = vadd.f32 %v4695, %v4983
        %v4985 = vpop.f32.mrb[0].mxu0
        %4986 = vmatprep.mubr.bf16.mxu0 %v4156
        %4987 = vmatmul.mubr.bf16.gmra.mrb[0].mxu0 %v4155
        %v4988 = vpop.f32.mrb[0].mxu0
        %v4989 = vadd.f32 %v4700, %v4988
        %v4990 = vpop.f32.mrb[0].mxu0
        %v4991 = vpop.f32.mrb[0].mxu0
        %v4992 = vadd.f32 %v4703, %v4991
        %v4993 = vpop.f32.mrb[0].mxu0
        %4994 = vmatprep.mubr.bf16.mxu0 %v4164
        %4995 = vmatmul.mubr.bf16.gmra.mrb[0].mxu0 %v4163
        %v4996 = vpop.f32.mrb[0].mxu0
        %v4997 = vadd.f32 %v4708, %v4996
        %v4998 = vpop.f32.mrb[0].mxu0
        %v4999 = vpop.f32.mrb[0].mxu0
        %v5000 = vadd.f32 %v4711, %v4999
        %v5001 = vpop.f32.mrb[0].mxu0
        %5002 = vmatprep.mubr.bf16.mxu0 %v4172
        %5003 = vmatmul.mubr.bf16.gmra.mrb[0].mxu0 %v4171
        %v5004 = vpop.f32.mrb[0].mxu0
        %v5005 = vadd.f32 %v4716, %v5004
        %v5006 = vpop.f32.mrb[0].mxu0
        %v5007 = vpop.f32.mrb[0].mxu0
        %v5008 = vadd.f32 %v4719, %v5007
        %v5009 = vpop.f32.mrb[0].mxu0
        %5010 = vmatprep.mubr.bf16.mxu0 %v4180
        %5011 = vmatmul.mubr.bf16.gmra.mrb[0].mxu0 %v4179
        %v5012 = vpop.f32.mrb[0].mxu0
        %v5013 = vadd.f32 %v4724, %v5012
        %v5014 = vpop.f32.mrb[0].mxu0
        %v5015 = vpop.f32.mrb[0].mxu0
        %v5016 = vadd.f32 %v4727, %v5015
        %v5017 = vpop.f32.mrb[0].mxu0
        %5018 = vmatprep.mubr.bf16.mxu0 %v4188
        %5019 = vmatmul.mubr.bf16.gmra.mrb[0].mxu0 %v4187
        %v5020 = vpop.f32.mrb[0].mxu0
        %v5021 = vadd.f32 %v4732, %v5020
        %v5022 = vpop.f32.mrb[0].mxu0
        %v5023 = vpop.f32.mrb[0].mxu0
        %v5024 = vadd.f32 %v4735, %v5023
        %v5025 = vpop.f32.mrb[0].mxu0
        %5026 = vmatprep.mubr.bf16.mxu0 %v4196
        %5027 = vmatmul.mubr.bf16.gmra.mrb[0].mxu0 %v4195
        %v5028 = vpop.f32.mrb[0].mxu0
        %v5029 = vadd.f32 %v4740, %v5028
        %v5030 = vpop.f32.mrb[0].mxu0
        %v5031 = vpop.f32.mrb[0].mxu0
        %v5032 = vadd.f32 %v4743, %v5031
        %v5033 = vpop.f32.mrb[0].mxu0
        %5034 = vmatprep.mubr.bf16.mxu0 %v4204
        %5035 = vmatmul.mubr.bf16.gmra.mrb[0].mxu0 %v4203
        %v5036 = vpop.f32.mrb[0].mxu0
        %v5037 = vadd.f32 %v4748, %v5036
        %v5038 = vpop.f32.mrb[0].mxu0
        %v5039 = vpop.f32.mrb[0].mxu0
        %v5040 = vadd.f32 %v4751, %v5039
        %v5041 = vpop.f32.mrb[0].mxu0
        %5042 = vmatprep.mubr.bf16.mxu0 %v4212
        %5043 = vmatmul.mubr.bf16.gmra.mrb[0].mxu0 %v4211
        %v5044 = vpop.f32.mrb[0].mxu0
        %v5045 = vadd.f32 %v4756, %v5044
        %v5046 = vpop.f32.mrb[0].mxu0
        %v5047 = vpop.f32.mrb[0].mxu0
        %v5048 = vadd.f32 %v4759, %v5047
        %v5049 = vpop.f32.mrb[0].mxu0
        %5050 = vmatprep.mubr.bf16.mxu0 %v4220
        %5051 = vmatmul.mubr.bf16.gmra.mrb[0].mxu0 %v4219
        %v5052 = vpop.f32.mrb[0].mxu0
        %v5053 = vadd.f32 %v4764, %v5052
        %v5054 = vpop.f32.mrb[0].mxu0
        %v5055 = vpop.f32.mrb[0].mxu0
        %v5056 = vadd.f32 %v4767, %v5055
        %v5057 = vpop.f32.mrb[0].mxu0
        %5058 = vmatprep.mubr.bf16.mxu0 %v4228
        %5059 = vmatmul.mubr.bf16.gmra.mrb[0].mxu0 %v4227
        %v5060 = vpop.f32.mrb[0].mxu0
        %v5061 = vadd.f32 %v4772, %v5060
        %v5062 = vpop.f32.mrb[0].mxu0
        %v5063 = vpop.f32.mrb[0].mxu0
        %v5064 = vadd.f32 %v4775, %v5063
        %v5065 = vpop.f32.mrb[0].mxu0
        %5066 = vmatprep.mubr.bf16.mxu0 %v4236
        %5067 = vmatmul.mubr.bf16.gmra.mrb[0].mxu0 %v4235
        %v5068 = vpop.f32.mrb[0].mxu0
        %v5069 = vadd.f32 %v4780, %v5068
        %v5070 = vpop.f32.mrb[0].mxu0
        %v5071 = vpop.f32.mrb[0].mxu0
        %v5072 = vadd.f32 %v4783, %v5071
        %v5073 = vpop.f32.mrb[0].mxu0
        %5074 = vmatprep.mubr.bf16.mxu0 %v4244
        %5075 = vmatmul.mubr.bf16.gmra.mrb[0].mxu0 %v4243
        %v5076 = vpop.f32.mrb[0].mxu0
        %v5077 = vadd.f32 %v4788, %v5076
        %v5078 = vpop.f32.mrb[0].mxu0
        %v5079 = vpop.f32.mrb[0].mxu0
        %v5080 = vadd.f32 %v4791, %v5079
        %v5081 = vpop.f32.mrb[0].mxu0
        %5082 = vmatprep.mubr.bf16.mxu0 %v4252
        %5083 = vmatmul.mubr.bf16.gmra.mrb[0].mxu0 %v4251
        %v5084 = vpop.f32.mrb[0].mxu0
        %v5085 = vadd.f32 %v4796, %v5084
        %v5086 = vpop.f32.mrb[0].mxu0
        %v5087 = vpop.f32.mrb[0].mxu0
        %v5088 = vadd.f32 %v4799, %v5087
        %v5089 = vpop.f32.mrb[0].mxu0
        %5090 = vmatprep.mubr.bf16.mxu0 %v4260
        %5091 = vmatmul.mubr.bf16.gmra.mrb[0].mxu0 %v4259
        %v5092 = vpop.f32.mrb[0].mxu0
        %v5093 = vadd.f32 %v4804, %v5092
        %v5094 = vpop.f32.mrb[0].mxu0
        %v5095 = vpop.f32.mrb[0].mxu0
        %v5096 = vadd.f32 %v4807, %v5095
        %v5097 = vpop.f32.mrb[0].mxu0
        %5098 = vdwg.mxu0
        %5099 = vmatprep.subr.bf16.mxu0 0
        %5100 = vmatpush1.bf16.msra.mxu0 %v2825
        %5101 = vmatprep.subr.bf16.mxu0 0
        %5102 = vmatpush1.bf16.msra.mxu0 %v2826
        %5103 = vmatprep.subr.bf16.mxu0 0
        %5104 = vmatpush1.bf16.msra.mxu0 %v2827
        %5105 = vmatprep.subr.bf16.mxu0 0
        %5106 = vmatpush1.bf16.msra.mxu0 %v2828
        %5107 = vmatprep.subr.bf16.mxu0 0
        %5108 = vmatpush1.bf16.msra.mxu0 %v2829
        %5109 = vmatprep.subr.bf16.mxu0 0
        %5110 = vmatpush1.bf16.msra.mxu0 %v2830
        %5111 = vmatprep.subr.bf16.mxu0 0
        %5112 = vmatpush1.bf16.msra.mxu0 %v2831
        %5113 = vmatprep.subr.bf16.mxu0 0
        %5114 = vmatpush1.bf16.msra.mxu0 %v2832
        %5115 = vmatprep.subr.bf16.mxu0 0
        %5116 = vmatpush1.bf16.msra.mxu0 %v2833
        %5117 = vmatprep.subr.bf16.mxu0 0
        %5118 = vmatpush1.bf16.msra.mxu0 %v2834
        %5119 = vmatprep.subr.bf16.mxu0 0
        %5120 = vmatpush1.bf16.msra.mxu0 %v2835
        %5121 = vmatprep.subr.bf16.mxu0 0
        %5122 = vmatpush1.bf16.msra.mxu0 %v2836
        %5123 = vmatprep.subr.bf16.mxu0 0
        %5124 = vmatpush1.bf16.msra.mxu0 %v2837
        %5125 = vmatprep.subr.bf16.mxu0 0
        %5126 = vmatpush1.bf16.msra.mxu0 %v2838
        %5127 = vmatprep.subr.bf16.mxu0 0
        %5128 = vmatpush1.bf16.msra.mxu0 %v2839
        %5129 = vmatprep.subr.bf16.mxu0 0
        %5130 = vmatpush1.bf16.msra.mxu0 %v2840
        %5131 = vmatprep.mubr.bf16.mxu0 %v4014
        %5132 = vmatmul.mubr.bf16.gmra.mrb[0].mxu0 %v4013
        %v5133 = vpop.f32.mrb[0].mxu0
        %v5134 = vadd.f32 %v4845, %v5133
        %v5135 = vpop.f32.mrb[0].mxu0
        %v5136 = vpop.f32.mrb[0].mxu0
        %v5137 = vadd.f32 %v4848, %v5136
        %v5138 = vpop.f32.mrb[0].mxu0
        %5139 = vmatprep.mubr.bf16.mxu0 %v4022
        %5140 = vmatmul.mubr.bf16.gmra.mrb[0].mxu0 %v4021
        %v5141 = vpop.f32.mrb[0].mxu0
        %v5142 = vadd.f32 %v4853, %v5141
        %v5143 = vpop.f32.mrb[0].mxu0
        %v5144 = vpop.f32.mrb[0].mxu0
        %v5145 = vadd.f32 %v4856, %v5144
        %v5146 = vpop.f32.mrb[0].mxu0
        %5147 = vmatprep.mubr.bf16.mxu0 %v4030
        %5148 = vmatmul.mubr.bf16.gmra.mrb[0].mxu0 %v4029
        %v5149 = vpop.f32.mrb[0].mxu0
        %v5150 = vadd.f32 %v4861, %v5149
        %v5151 = vpop.f32.mrb[0].mxu0
        %v5152 = vpop.f32.mrb[0].mxu0
        %v5153 = vadd.f32 %v4864, %v5152
        %v5154 = vpop.f32.mrb[0].mxu0
        %5155 = vmatprep.mubr.bf16.mxu0 %v4038
        %5156 = vmatmul.mubr.bf16.gmra.mrb[0].mxu0 %v4037
        %v5157 = vpop.f32.mrb[0].mxu0
        %v5158 = vadd.f32 %v4869, %v5157
        %v5159 = vpop.f32.mrb[0].mxu0
        %v5160 = vpop.f32.mrb[0].mxu0
        %v5161 = vadd.f32 %v4872, %v5160
        %v5162 = vpop.f32.mrb[0].mxu0
        %5163 = vmatprep.mubr.bf16.mxu0 %v4046
        %5164 = vmatmul.mubr.bf16.gmra.mrb[0].mxu0 %v4045
        %v5165 = vpop.f32.mrb[0].mxu0
        %v5166 = vadd.f32 %v4877, %v5165
        %v5167 = vpop.f32.mrb[0].mxu0
        %v5168 = vpop.f32.mrb[0].mxu0
        %v5169 = vadd.f32 %v4880, %v5168
        %v5170 = vpop.f32.mrb[0].mxu0
        %5171 = vmatprep.mubr.bf16.mxu0 %v4054
        %5172 = vmatmul.mubr.bf16.gmra.mrb[0].mxu0 %v4053
        %v5173 = vpop.f32.mrb[0].mxu0
        %v5174 = vadd.f32 %v4885, %v5173
        %v5175 = vpop.f32.mrb[0].mxu0
        %v5176 = vpop.f32.mrb[0].mxu0
        %v5177 = vadd.f32 %v4888, %v5176
        %v5178 = vpop.f32.mrb[0].mxu0
        %5179 = vmatprep.mubr.bf16.mxu0 %v4062
        %5180 = vmatmul.mubr.bf16.gmra.mrb[0].mxu0 %v4061
        %v5181 = vpop.f32.mrb[0].mxu0
        %v5182 = vadd.f32 %v4893, %v5181
        %v5183 = vpop.f32.mrb[0].mxu0
        %v5184 = vpop.f32.mrb[0].mxu0
        %v5185 = vadd.f32 %v4896, %v5184
        %v5186 = vpop.f32.mrb[0].mxu0
        %5187 = vmatprep.mubr.bf16.mxu0 %v4070
        %5188 = vmatmul.mubr.bf16.gmra.mrb[0].mxu0 %v4069
        %v5189 = vpop.f32.mrb[0].mxu0
        %v5190 = vadd.f32 %v4901, %v5189
        %v5191 = vpop.f32.mrb[0].mxu0
        %v5192 = vpop.f32.mrb[0].mxu0
        %v5193 = vadd.f32 %v4904, %v5192
        %v5194 = vpop.f32.mrb[0].mxu0
        %5195 = vmatprep.mubr.bf16.mxu0 %v4078
        %5196 = vmatmul.mubr.bf16.gmra.mrb[0].mxu0 %v4077
        %v5197 = vpop.f32.mrb[0].mxu0
        %v5198 = vadd.f32 %v4909, %v5197
        %v5199 = vpop.f32.mrb[0].mxu0
        %v5200 = vpop.f32.mrb[0].mxu0
        %v5201 = vadd.f32 %v4912, %v5200
        %v5202 = vpop.f32.mrb[0].mxu0
        %5203 = vmatprep.mubr.bf16.mxu0 %v4086
        %5204 = vmatmul.mubr.bf16.gmra.mrb[0].mxu0 %v4085
        %v5205 = vpop.f32.mrb[0].mxu0
        %v5206 = vadd.f32 %v4917, %v5205
        %v5207 = vpop.f32.mrb[0].mxu0
        %v5208 = vpop.f32.mrb[0].mxu0
        %v5209 = vadd.f32 %v4920, %v5208
        %v5210 = vpop.f32.mrb[0].mxu0
        %5211 = vmatprep.mubr.bf16.mxu0 %v4094
        %5212 = vmatmul.mubr.bf16.gmra.mrb[0].mxu0 %v4093
        %v5213 = vpop.f32.mrb[0].mxu0
        %v5214 = vadd.f32 %v4925, %v5213
        %v5215 = vpop.f32.mrb[0].mxu0
        %v5216 = vpop.f32.mrb[0].mxu0
        %v5217 = vadd.f32 %v4928, %v5216
        %v5218 = vpop.f32.mrb[0].mxu0
        %5219 = vmatprep.mubr.bf16.mxu0 %v4102
        %5220 = vmatmul.mubr.bf16.gmra.mrb[0].mxu0 %v4101
        %v5221 = vpop.f32.mrb[0].mxu0
        %v5222 = vadd.f32 %v4933, %v5221
        %v5223 = vpop.f32.mrb[0].mxu0
        %v5224 = vpop.f32.mrb[0].mxu0
        %v5225 = vadd.f32 %v4936, %v5224
        %v5226 = vpop.f32.mrb[0].mxu0
        %5227 = vmatprep.mubr.bf16.mxu0 %v4110
        %5228 = vmatmul.mubr.bf16.gmra.mrb[0].mxu0 %v4109
        %v5229 = vpop.f32.mrb[0].mxu0
        %v5230 = vadd.f32 %v4941, %v5229
        %v5231 = vpop.f32.mrb[0].mxu0
        %v5232 = vpop.f32.mrb[0].mxu0
        %v5233 = vadd.f32 %v4944, %v5232
        %v5234 = vpop.f32.mrb[0].mxu0
        %5235 = vmatprep.mubr.bf16.mxu0 %v4118
        %5236 = vmatmul.mubr.bf16.gmra.mrb[0].mxu0 %v4117
        %v5237 = vpop.f32.mrb[0].mxu0
        %v5238 = vadd.f32 %v4949, %v5237
        %v5239 = vpop.f32.mrb[0].mxu0
        %v5240 = vpop.f32.mrb[0].mxu0
        %v5241 = vadd.f32 %v4952, %v5240
        %v5242 = vpop.f32.mrb[0].mxu0
        %5243 = vmatprep.mubr.bf16.mxu0 %v4126
        %5244 = vmatmul.mubr.bf16.gmra.mrb[0].mxu0 %v4125
        %v5245 = vpop.f32.mrb[0].mxu0
        %v5246 = vadd.f32 %v4957, %v5245
        %v5247 = vpop.f32.mrb[0].mxu0
        %v5248 = vpop.f32.mrb[0].mxu0
        %v5249 = vadd.f32 %v4960, %v5248
        %v5250 = vpop.f32.mrb[0].mxu0
        %5251 = vmatprep.mubr.bf16.mxu0 %v4134
        %5252 = vmatmul.mubr.bf16.gmra.mrb[0].mxu0 %v4133
        %v5253 = vpop.f32.mrb[0].mxu0
        %v5254 = vadd.f32 %v4965, %v5253
        %v5255 = vpop.f32.mrb[0].mxu0
        %v5256 = vpop.f32.mrb[0].mxu0
        %v5257 = vadd.f32 %v4968, %v5256
        %v5258 = vpop.f32.mrb[0].mxu0
        %5259 = vmatprep.mubr.bf16.mxu0 %v4142
        %5260 = vmatmul.mubr.bf16.gmra.mrb[0].mxu0 %v4141
        %v5261 = vpop.f32.mrb[0].mxu0
        %v5262 = vadd.f32 %v4973, %v5261
        %v5263 = vpop.f32.mrb[0].mxu0
        %v5264 = vpop.f32.mrb[0].mxu0
        %v5265 = vadd.f32 %v4976, %v5264
        %v5266 = vpop.f32.mrb[0].mxu0
        %5267 = vmatprep.mubr.bf16.mxu0 %v4150
        %5268 = vmatmul.mubr.bf16.gmra.mrb[0].mxu0 %v4149
        %v5269 = vpop.f32.mrb[0].mxu0
        %v5270 = vadd.f32 %v4981, %v5269
        %v5271 = vpop.f32.mrb[0].mxu0
        %v5272 = vpop.f32.mrb[0].mxu0
        %v5273 = vadd.f32 %v4984, %v5272
        %v5274 = vpop.f32.mrb[0].mxu0
        %5275 = vmatprep.mubr.bf16.mxu0 %v4158
        %5276 = vmatmul.mubr.bf16.gmra.mrb[0].mxu0 %v4157
        %v5277 = vpop.f32.mrb[0].mxu0
        %v5278 = vadd.f32 %v4989, %v5277
        %v5279 = vpop.f32.mrb[0].mxu0
        %v5280 = vpop.f32.mrb[0].mxu0
        %v5281 = vadd.f32 %v4992, %v5280
        %v5282 = vpop.f32.mrb[0].mxu0
        %5283 = vmatprep.mubr.bf16.mxu0 %v4166
        %5284 = vmatmul.mubr.bf16.gmra.mrb[0].mxu0 %v4165
        %v5285 = vpop.f32.mrb[0].mxu0
        %v5286 = vadd.f32 %v4997, %v5285
        %v5287 = vpop.f32.mrb[0].mxu0
        %v5288 = vpop.f32.mrb[0].mxu0
        %v5289 = vadd.f32 %v5000, %v5288
        %v5290 = vpop.f32.mrb[0].mxu0
        %5291 = vmatprep.mubr.bf16.mxu0 %v4174
        %5292 = vmatmul.mubr.bf16.gmra.mrb[0].mxu0 %v4173
        %v5293 = vpop.f32.mrb[0].mxu0
        %v5294 = vadd.f32 %v5005, %v5293
        %v5295 = vpop.f32.mrb[0].mxu0
        %v5296 = vpop.f32.mrb[0].mxu0
        %v5297 = vadd.f32 %v5008, %v5296
        %v5298 = vpop.f32.mrb[0].mxu0
        %5299 = vmatprep.mubr.bf16.mxu0 %v4182
        %5300 = vmatmul.mubr.bf16.gmra.mrb[0].mxu0 %v4181
        %v5301 = vpop.f32.mrb[0].mxu0
        %v5302 = vadd.f32 %v5013, %v5301
        %v5303 = vpop.f32.mrb[0].mxu0
        %v5304 = vpop.f32.mrb[0].mxu0
        %v5305 = vadd.f32 %v5016, %v5304
        %v5306 = vpop.f32.mrb[0].mxu0
        %5307 = vmatprep.mubr.bf16.mxu0 %v4190
        %5308 = vmatmul.mubr.bf16.gmra.mrb[0].mxu0 %v4189
        %v5309 = vpop.f32.mrb[0].mxu0
        %v5310 = vadd.f32 %v5021, %v5309
        %v5311 = vpop.f32.mrb[0].mxu0
        %v5312 = vpop.f32.mrb[0].mxu0
        %v5313 = vadd.f32 %v5024, %v5312
        %v5314 = vpop.f32.mrb[0].mxu0
        %5315 = vmatprep.mubr.bf16.mxu0 %v4198
        %5316 = vmatmul.mubr.bf16.gmra.mrb[0].mxu0 %v4197
        %v5317 = vpop.f32.mrb[0].mxu0
        %v5318 = vadd.f32 %v5029, %v5317
        %v5319 = vpop.f32.mrb[0].mxu0
        %v5320 = vpop.f32.mrb[0].mxu0
        %v5321 = vadd.f32 %v5032, %v5320
        %v5322 = vpop.f32.mrb[0].mxu0
        %5323 = vmatprep.mubr.bf16.mxu0 %v4206
        %5324 = vmatmul.mubr.bf16.gmra.mrb[0].mxu0 %v4205
        %v5325 = vpop.f32.mrb[0].mxu0
        %v5326 = vadd.f32 %v5037, %v5325
        %v5327 = vpop.f32.mrb[0].mxu0
        %v5328 = vpop.f32.mrb[0].mxu0
        %v5329 = vadd.f32 %v5040, %v5328
        %v5330 = vpop.f32.mrb[0].mxu0
        %5331 = vmatprep.mubr.bf16.mxu0 %v4214
        %5332 = vmatmul.mubr.bf16.gmra.mrb[0].mxu0 %v4213
        %v5333 = vpop.f32.mrb[0].mxu0
        %v5334 = vadd.f32 %v5045, %v5333
        %v5335 = vpop.f32.mrb[0].mxu0
        %v5336 = vpop.f32.mrb[0].mxu0
        %v5337 = vadd.f32 %v5048, %v5336
        %v5338 = vpop.f32.mrb[0].mxu0
        %5339 = vmatprep.mubr.bf16.mxu0 %v4222
        %5340 = vmatmul.mubr.bf16.gmra.mrb[0].mxu0 %v4221
        %v5341 = vpop.f32.mrb[0].mxu0
        %v5342 = vadd.f32 %v5053, %v5341
        %v5343 = vpop.f32.mrb[0].mxu0
        %v5344 = vpop.f32.mrb[0].mxu0
        %v5345 = vadd.f32 %v5056, %v5344
        %v5346 = vpop.f32.mrb[0].mxu0
        %5347 = vmatprep.mubr.bf16.mxu0 %v4230
        %5348 = vmatmul.mubr.bf16.gmra.mrb[0].mxu0 %v4229
        %v5349 = vpop.f32.mrb[0].mxu0
        %v5350 = vadd.f32 %v5061, %v5349
        %v5351 = vpop.f32.mrb[0].mxu0
        %v5352 = vpop.f32.mrb[0].mxu0
        %v5353 = vadd.f32 %v5064, %v5352
        %v5354 = vpop.f32.mrb[0].mxu0
        %5355 = vmatprep.mubr.bf16.mxu0 %v4238
        %5356 = vmatmul.mubr.bf16.gmra.mrb[0].mxu0 %v4237
        %v5357 = vpop.f32.mrb[0].mxu0
        %v5358 = vadd.f32 %v5069, %v5357
        %v5359 = vpop.f32.mrb[0].mxu0
        %v5360 = vpop.f32.mrb[0].mxu0
        %v5361 = vadd.f32 %v5072, %v5360
        %v5362 = vpop.f32.mrb[0].mxu0
        %5363 = vmatprep.mubr.bf16.mxu0 %v4246
        %5364 = vmatmul.mubr.bf16.gmra.mrb[0].mxu0 %v4245
        %v5365 = vpop.f32.mrb[0].mxu0
        %v5366 = vadd.f32 %v5077, %v5365
        %v5367 = vpop.f32.mrb[0].mxu0
        %v5368 = vpop.f32.mrb[0].mxu0
        %v5369 = vadd.f32 %v5080, %v5368
        %v5370 = vpop.f32.mrb[0].mxu0
        %5371 = vmatprep.mubr.bf16.mxu0 %v4254
        %5372 = vmatmul.mubr.bf16.gmra.mrb[0].mxu0 %v4253
        %v5373 = vpop.f32.mrb[0].mxu0
        %v5374 = vadd.f32 %v5085, %v5373
        %v5375 = vpop.f32.mrb[0].mxu0
        %v5376 = vpop.f32.mrb[0].mxu0
        %v5377 = vadd.f32 %v5088, %v5376
        %v5378 = vpop.f32.mrb[0].mxu0
        %5379 = vmatprep.mubr.bf16.mxu0 %v4262
        %5380 = vmatmul.mubr.bf16.gmra.mrb[0].mxu0 %v4261
        %v5381 = vpop.f32.mrb[0].mxu0
        %v5382 = vadd.f32 %v5093, %v5381
        %v5383 = vpop.f32.mrb[0].mxu0
        %v5384 = vpop.f32.mrb[0].mxu0
        %v5385 = vadd.f32 %v5096, %v5384
        %v5386 = vpop.f32.mrb[0].mxu0
        %5387 = vdwg.mxu0
        %5388 = vmatprep.subr.bf16.mxu0 0
        %5389 = vmatpush1.bf16.msra.mxu0 %v2841
        %5390 = vmatprep.subr.bf16.mxu0 0
        %5391 = vmatpush1.bf16.msra.mxu0 %v2842
        %5392 = vmatprep.subr.bf16.mxu0 0
        %5393 = vmatpush1.bf16.msra.mxu0 %v2843
        %5394 = vmatprep.subr.bf16.mxu0 0
        %5395 = vmatpush1.bf16.msra.mxu0 %v2844
        %5396 = vmatprep.subr.bf16.mxu0 0
        %5397 = vmatpush1.bf16.msra.mxu0 %v2845
        %5398 = vmatprep.subr.bf16.mxu0 0
        %5399 = vmatpush1.bf16.msra.mxu0 %v2846
        %5400 = vmatprep.subr.bf16.mxu0 0
        %5401 = vmatpush1.bf16.msra.mxu0 %v2847
        %5402 = vmatprep.subr.bf16.mxu0 0
        %5403 = vmatpush1.bf16.msra.mxu0 %v2848
        %5404 = vmatprep.subr.bf16.mxu0 0
        %5405 = vmatpush1.bf16.msra.mxu0 %v2849
        %5406 = vmatprep.subr.bf16.mxu0 0
        %5407 = vmatpush1.bf16.msra.mxu0 %v2850
        %5408 = vmatprep.subr.bf16.mxu0 0
        %5409 = vmatpush1.bf16.msra.mxu0 %v2851
        %5410 = vmatprep.subr.bf16.mxu0 0
        %5411 = vmatpush1.bf16.msra.mxu0 %v2852
        %5412 = vmatprep.subr.bf16.mxu0 0
        %5413 = vmatpush1.bf16.msra.mxu0 %v2853
        %5414 = vmatprep.subr.bf16.mxu0 0
        %5415 = vmatpush1.bf16.msra.mxu0 %v2854
        %5416 = vmatprep.subr.bf16.mxu0 0
        %5417 = vmatpush1.bf16.msra.mxu0 %v2855
        %5418 = vmatprep.subr.bf16.mxu0 0
        %5419 = vmatpush1.bf16.msra.mxu0 %v2856
        %5420 = vmatprep.mubr.bf16.mxu0 %v4016
        %5421 = vmatmul.mubr.bf16.gmra.mrb[0].mxu0 %v4015
        %v5422 = vpop.f32.mrb[0].mxu0
        %v5423 = vadd.f32 %v5134, %v5422
        %v5424 = vpop.f32.mrb[0].mxu0
        %v5425 = vpop.f32.mrb[0].mxu0
        %v5426 = vadd.f32 %v5137, %v5425
        %v5427 = vpop.f32.mrb[0].mxu0
        %5428 = vmatprep.mubr.bf16.mxu0 %v4024
        %5429 = vmatmul.mubr.bf16.gmra.mrb[0].mxu0 %v4023
        %v5430 = vpop.f32.mrb[0].mxu0
        %v5431 = vadd.f32 %v5142, %v5430
        %v5432 = vpop.f32.mrb[0].mxu0
        %v5433 = vpop.f32.mrb[0].mxu0
        %v5434 = vadd.f32 %v5145, %v5433
        %v5435 = vpop.f32.mrb[0].mxu0
        %5436 = vmatprep.mubr.bf16.mxu0 %v4032
        %5437 = vmatmul.mubr.bf16.gmra.mrb[0].mxu0 %v4031
        %v5438 = vpop.f32.mrb[0].mxu0
        %v5439 = vadd.f32 %v5150, %v5438
        %v5440 = vpop.f32.mrb[0].mxu0
        %v5441 = vpop.f32.mrb[0].mxu0
        %v5442 = vadd.f32 %v5153, %v5441
        %v5443 = vpop.f32.mrb[0].mxu0
        %5444 = vmatprep.mubr.bf16.mxu0 %v4040
        %5445 = vmatmul.mubr.bf16.gmra.mrb[0].mxu0 %v4039
        %v5446 = vpop.f32.mrb[0].mxu0
        %v5447 = vadd.f32 %v5158, %v5446
        %v5448 = vpop.f32.mrb[0].mxu0
        %v5449 = vpop.f32.mrb[0].mxu0
        %v5450 = vadd.f32 %v5161, %v5449
        %v5451 = vpop.f32.mrb[0].mxu0
        %5452 = vmatprep.mubr.bf16.mxu0 %v4048
        %5453 = vmatmul.mubr.bf16.gmra.mrb[0].mxu0 %v4047
        %v5454 = vpop.f32.mrb[0].mxu0
        %v5455 = vadd.f32 %v5166, %v5454
        %v5456 = vpop.f32.mrb[0].mxu0
        %v5457 = vpop.f32.mrb[0].mxu0
        %v5458 = vadd.f32 %v5169, %v5457
        %v5459 = vpop.f32.mrb[0].mxu0
        %5460 = vmatprep.mubr.bf16.mxu0 %v4056
        %5461 = vmatmul.mubr.bf16.gmra.mrb[0].mxu0 %v4055
        %v5462 = vpop.f32.mrb[0].mxu0
        %v5463 = vadd.f32 %v5174, %v5462
        %v5464 = vpop.f32.mrb[0].mxu0
        %v5465 = vpop.f32.mrb[0].mxu0
        %v5466 = vadd.f32 %v5177, %v5465
        %v5467 = vpop.f32.mrb[0].mxu0
        %5468 = vmatprep.mubr.bf16.mxu0 %v4064
        %5469 = vmatmul.mubr.bf16.gmra.mrb[0].mxu0 %v4063
        %v5470 = vpop.f32.mrb[0].mxu0
        %v5471 = vadd.f32 %v5182, %v5470
        %v5472 = vpop.f32.mrb[0].mxu0
        %v5473 = vpop.f32.mrb[0].mxu0
        %v5474 = vadd.f32 %v5185, %v5473
        %v5475 = vpop.f32.mrb[0].mxu0
        %5476 = vmatprep.mubr.bf16.mxu0 %v4072
        %5477 = vmatmul.mubr.bf16.gmra.mrb[0].mxu0 %v4071
        %v5478 = vpop.f32.mrb[0].mxu0
        %v5479 = vadd.f32 %v5190, %v5478
        %v5480 = vpop.f32.mrb[0].mxu0
        %v5481 = vpop.f32.mrb[0].mxu0
        %v5482 = vadd.f32 %v5193, %v5481
        %v5483 = vpop.f32.mrb[0].mxu0
        %5484 = vmatprep.mubr.bf16.mxu0 %v4080
        %5485 = vmatmul.mubr.bf16.gmra.mrb[0].mxu0 %v4079
        %v5486 = vpop.f32.mrb[0].mxu0
        %v5487 = vadd.f32 %v5198, %v5486
        %v5488 = vpop.f32.mrb[0].mxu0
        %v5489 = vpop.f32.mrb[0].mxu0
        %v5490 = vadd.f32 %v5201, %v5489
        %v5491 = vpop.f32.mrb[0].mxu0
        %5492 = vmatprep.mubr.bf16.mxu0 %v4088
        %5493 = vmatmul.mubr.bf16.gmra.mrb[0].mxu0 %v4087
        %v5494 = vpop.f32.mrb[0].mxu0
        %v5495 = vadd.f32 %v5206, %v5494
        %v5496 = vpop.f32.mrb[0].mxu0
        %v5497 = vpop.f32.mrb[0].mxu0
        %v5498 = vadd.f32 %v5209, %v5497
        %v5499 = vpop.f32.mrb[0].mxu0
        %5500 = vmatprep.mubr.bf16.mxu0 %v4096
        %5501 = vmatmul.mubr.bf16.gmra.mrb[0].mxu0 %v4095
        %v5502 = vpop.f32.mrb[0].mxu0
        %v5503 = vadd.f32 %v5214, %v5502
        %v5504 = vpop.f32.mrb[0].mxu0
        %v5505 = vpop.f32.mrb[0].mxu0
        %v5506 = vadd.f32 %v5217, %v5505
        %v5507 = vpop.f32.mrb[0].mxu0
        %5508 = vmatprep.mubr.bf16.mxu0 %v4104
        %5509 = vmatmul.mubr.bf16.gmra.mrb[0].mxu0 %v4103
        %v5510 = vpop.f32.mrb[0].mxu0
        %v5511 = vadd.f32 %v5222, %v5510
        %v5512 = vpop.f32.mrb[0].mxu0
        %v5513 = vpop.f32.mrb[0].mxu0
        %v5514 = vadd.f32 %v5225, %v5513
        %v5515 = vpop.f32.mrb[0].mxu0
        %5516 = vmatprep.mubr.bf16.mxu0 %v4112
        %5517 = vmatmul.mubr.bf16.gmra.mrb[0].mxu0 %v4111
        %v5518 = vpop.f32.mrb[0].mxu0
        %v5519 = vadd.f32 %v5230, %v5518
        %v5520 = vpop.f32.mrb[0].mxu0
        %v5521 = vpop.f32.mrb[0].mxu0
        %v5522 = vadd.f32 %v5233, %v5521
        %v5523 = vpop.f32.mrb[0].mxu0
        %5524 = vmatprep.mubr.bf16.mxu0 %v4120
        %5525 = vmatmul.mubr.bf16.gmra.mrb[0].mxu0 %v4119
        %v5526 = vpop.f32.mrb[0].mxu0
        %v5527 = vadd.f32 %v5238, %v5526
        %v5528 = vpop.f32.mrb[0].mxu0
        %v5529 = vpop.f32.mrb[0].mxu0
        %v5530 = vadd.f32 %v5241, %v5529
        %v5531 = vpop.f32.mrb[0].mxu0
        %5532 = vmatprep.mubr.bf16.mxu0 %v4128
        %5533 = vmatmul.mubr.bf16.gmra.mrb[0].mxu0 %v4127
        %v5534 = vpop.f32.mrb[0].mxu0
        %v5535 = vadd.f32 %v5246, %v5534
        %v5536 = vpop.f32.mrb[0].mxu0
        %v5537 = vpop.f32.mrb[0].mxu0
        %v5538 = vadd.f32 %v5249, %v5537
        %v5539 = vpop.f32.mrb[0].mxu0
        %5540 = vmatprep.mubr.bf16.mxu0 %v4136
        %5541 = vmatmul.mubr.bf16.gmra.mrb[0].mxu0 %v4135
        %v5542 = vpop.f32.mrb[0].mxu0
        %v5543 = vadd.f32 %v5254, %v5542
        %v5544 = vpop.f32.mrb[0].mxu0
        %v5545 = vpop.f32.mrb[0].mxu0
        %v5546 = vadd.f32 %v5257, %v5545
        %v5547 = vpop.f32.mrb[0].mxu0
        %5548 = vmatprep.mubr.bf16.mxu0 %v4144
        %5549 = vmatmul.mubr.bf16.gmra.mrb[0].mxu0 %v4143
        %v5550 = vpop.f32.mrb[0].mxu0
        %v5551 = vadd.f32 %v5262, %v5550
        %v5552 = vpop.f32.mrb[0].mxu0
        %v5553 = vpop.f32.mrb[0].mxu0
        %v5554 = vadd.f32 %v5265, %v5553
        %v5555 = vpop.f32.mrb[0].mxu0
        %5556 = vmatprep.mubr.bf16.mxu0 %v4152
        %5557 = vmatmul.mubr.bf16.gmra.mrb[0].mxu0 %v4151
        %v5558 = vpop.f32.mrb[0].mxu0
        %v5559 = vadd.f32 %v5270, %v5558
        %v5560 = vpop.f32.mrb[0].mxu0
        %v5561 = vpop.f32.mrb[0].mxu0
        %v5562 = vadd.f32 %v5273, %v5561
        %v5563 = vpop.f32.mrb[0].mxu0
        %5564 = vmatprep.mubr.bf16.mxu0 %v4160
        %5565 = vmatmul.mubr.bf16.gmra.mrb[0].mxu0 %v4159
        %v5566 = vpop.f32.mrb[0].mxu0
        %v5567 = vadd.f32 %v5278, %v5566
        %v5568 = vpop.f32.mrb[0].mxu0
        %v5569 = vpop.f32.mrb[0].mxu0
        %v5570 = vadd.f32 %v5281, %v5569
        %v5571 = vpop.f32.mrb[0].mxu0
        %5572 = vmatprep.mubr.bf16.mxu0 %v4168
        %5573 = vmatmul.mubr.bf16.gmra.mrb[0].mxu0 %v4167
        %v5574 = vpop.f32.mrb[0].mxu0
        %v5575 = vadd.f32 %v5286, %v5574
        %v5576 = vpop.f32.mrb[0].mxu0
        %v5577 = vpop.f32.mrb[0].mxu0
        %v5578 = vadd.f32 %v5289, %v5577
        %v5579 = vpop.f32.mrb[0].mxu0
        %5580 = vmatprep.mubr.bf16.mxu0 %v4176
        %5581 = vmatmul.mubr.bf16.gmra.mrb[0].mxu0 %v4175
        %v5582 = vpop.f32.mrb[0].mxu0
        %v5583 = vadd.f32 %v5294, %v5582
        %v5584 = vpop.f32.mrb[0].mxu0
        %v5585 = vpop.f32.mrb[0].mxu0
        %v5586 = vadd.f32 %v5297, %v5585
        %v5587 = vpop.f32.mrb[0].mxu0
        %5588 = vmatprep.mubr.bf16.mxu0 %v4184
        %5589 = vmatmul.mubr.bf16.gmra.mrb[0].mxu0 %v4183
        %v5590 = vpop.f32.mrb[0].mxu0
        %v5591 = vadd.f32 %v5302, %v5590
        %v5592 = vpop.f32.mrb[0].mxu0
        %v5593 = vpop.f32.mrb[0].mxu0
        %v5594 = vadd.f32 %v5305, %v5593
        %v5595 = vpop.f32.mrb[0].mxu0
        %5596 = vmatprep.mubr.bf16.mxu0 %v4192
        %5597 = vmatmul.mubr.bf16.gmra.mrb[0].mxu0 %v4191
        %v5598 = vpop.f32.mrb[0].mxu0
        %v5599 = vadd.f32 %v5310, %v5598
        %v5600 = vpop.f32.mrb[0].mxu0
        %v5601 = vpop.f32.mrb[0].mxu0
        %v5602 = vadd.f32 %v5313, %v5601
        %v5603 = vpop.f32.mrb[0].mxu0
        %5604 = vmatprep.mubr.bf16.mxu0 %v4200
        %5605 = vmatmul.mubr.bf16.gmra.mrb[0].mxu0 %v4199
        %v5606 = vpop.f32.mrb[0].mxu0
        %v5607 = vadd.f32 %v5318, %v5606
        %v5608 = vpop.f32.mrb[0].mxu0
        %v5609 = vpop.f32.mrb[0].mxu0
        %v5610 = vadd.f32 %v5321, %v5609
        %v5611 = vpop.f32.mrb[0].mxu0
        %5612 = vmatprep.mubr.bf16.mxu0 %v4208
        %5613 = vmatmul.mubr.bf16.gmra.mrb[0].mxu0 %v4207
        %v5614 = vpop.f32.mrb[0].mxu0
        %v5615 = vadd.f32 %v5326, %v5614
        %v5616 = vpop.f32.mrb[0].mxu0
        %v5617 = vpop.f32.mrb[0].mxu0
        %v5618 = vadd.f32 %v5329, %v5617
        %v5619 = vpop.f32.mrb[0].mxu0
        %5620 = vmatprep.mubr.bf16.mxu0 %v4216
        %5621 = vmatmul.mubr.bf16.gmra.mrb[0].mxu0 %v4215
        %v5622 = vpop.f32.mrb[0].mxu0
        %v5623 = vadd.f32 %v5334, %v5622
        %v5624 = vpop.f32.mrb[0].mxu0
        %v5625 = vpop.f32.mrb[0].mxu0
        %v5626 = vadd.f32 %v5337, %v5625
        %v5627 = vpop.f32.mrb[0].mxu0
        %5628 = vmatprep.mubr.bf16.mxu0 %v4224
        %5629 = vmatmul.mubr.bf16.gmra.mrb[0].mxu0 %v4223
        %v5630 = vpop.f32.mrb[0].mxu0
        %v5631 = vadd.f32 %v5342, %v5630
        %v5632 = vpop.f32.mrb[0].mxu0
        %v5633 = vpop.f32.mrb[0].mxu0
        %v5634 = vadd.f32 %v5345, %v5633
        %v5635 = vpop.f32.mrb[0].mxu0
        %5636 = vmatprep.mubr.bf16.mxu0 %v4232
        %5637 = vmatmul.mubr.bf16.gmra.mrb[0].mxu0 %v4231
        %v5638 = vpop.f32.mrb[0].mxu0
        %v5639 = vadd.f32 %v5350, %v5638
        %v5640 = vpop.f32.mrb[0].mxu0
        %v5641 = vpop.f32.mrb[0].mxu0
        %v5642 = vadd.f32 %v5353, %v5641
        %v5643 = vpop.f32.mrb[0].mxu0
        %5644 = vmatprep.mubr.bf16.mxu0 %v4240
        %5645 = vmatmul.mubr.bf16.gmra.mrb[0].mxu0 %v4239
        %v5646 = vpop.f32.mrb[0].mxu0
        %v5647 = vadd.f32 %v5358, %v5646
        %v5648 = vpop.f32.mrb[0].mxu0
        %v5649 = vpop.f32.mrb[0].mxu0
        %v5650 = vadd.f32 %v5361, %v5649
        %v5651 = vpop.f32.mrb[0].mxu0
        %5652 = vmatprep.mubr.bf16.mxu0 %v4248
        %5653 = vmatmul.mubr.bf16.gmra.mrb[0].mxu0 %v4247
        %v5654 = vpop.f32.mrb[0].mxu0
        %v5655 = vadd.f32 %v5366, %v5654
        %v5656 = vpop.f32.mrb[0].mxu0
        %v5657 = vpop.f32.mrb[0].mxu0
        %v5658 = vadd.f32 %v5369, %v5657
        %v5659 = vpop.f32.mrb[0].mxu0
        %5660 = vmatprep.mubr.bf16.mxu0 %v4256
        %5661 = vmatmul.mubr.bf16.gmra.mrb[0].mxu0 %v4255
        %v5662 = vpop.f32.mrb[0].mxu0
        %v5663 = vadd.f32 %v5374, %v5662
        %v5664 = vpop.f32.mrb[0].mxu0
        %v5665 = vpop.f32.mrb[0].mxu0
        %v5666 = vadd.f32 %v5377, %v5665
        %v5667 = vpop.f32.mrb[0].mxu0
        %5668 = vmatprep.mubr.bf16.mxu0 %v4264
        %5669 = vmatmul.mubr.bf16.gmra.mrb[0].mxu0 %v4263
        %v5670 = vpop.f32.mrb[0].mxu0
        %v5671 = vadd.f32 %v5382, %v5670
        %v5672 = vpop.f32.mrb[0].mxu0
        %v5673 = vpop.f32.mrb[0].mxu0
        %v5674 = vadd.f32 %v5385, %v5673
        %v5675 = vpop.f32.mrb[0].mxu0
        %5676 = vdwg.mxu0
        %v5677 = vmax.f32 %v5423, 0.0
        %v5678 = vmax.f32 %v5426, 0.0
        %v5679 = vmax.f32 %v5431, 0.0
        %v5680 = vmax.f32 %v5434, 0.0
        %v5681 = vmax.f32 %v5439, 0.0
        %v5682 = vmax.f32 %v5442, 0.0
        %v5683 = vmax.f32 %v5447, 0.0
        %v5684 = vmax.f32 %v5450, 0.0
        %v5685 = vmax.f32 %v5455, 0.0
        %v5686 = vmax.f32 %v5458, 0.0
        %v5687 = vmax.f32 %v5463, 0.0
        %v5688 = vmax.f32 %v5466, 0.0
        %v5689 = vmax.f32 %v5471, 0.0
        %v5690 = vmax.f32 %v5474, 0.0
        %v5691 = vmax.f32 %v5479, 0.0
        %v5692 = vmax.f32 %v5482, 0.0
        %v5693 = vmax.f32 %v5487, 0.0
        %v5694 = vmax.f32 %v5490, 0.0
        %v5695 = vmax.f32 %v5495, 0.0
        %v5696 = vmax.f32 %v5498, 0.0
        %v5697 = vmax.f32 %v5503, 0.0
        %v5698 = vmax.f32 %v5506, 0.0
        %v5699 = vmax.f32 %v5511, 0.0
        %v5700 = vmax.f32 %v5514, 0.0
        %v5701 = vmax.f32 %v5519, 0.0
        %v5702 = vmax.f32 %v5522, 0.0
        %v5703 = vmax.f32 %v5527, 0.0
        %v5704 = vmax.f32 %v5530, 0.0
        %v5705 = vmax.f32 %v5535, 0.0
        %v5706 = vmax.f32 %v5538, 0.0
        %v5707 = vmax.f32 %v5543, 0.0
        %v5708 = vmax.f32 %v5546, 0.0
        %v5709 = vmax.f32 %v5551, 0.0
        %v5710 = vmax.f32 %v5554, 0.0
        %v5711 = vmax.f32 %v5559, 0.0
        %v5712 = vmax.f32 %v5562, 0.0
        %v5713 = vmax.f32 %v5567, 0.0
        %v5714 = vmax.f32 %v5570, 0.0
        %v5715 = vmax.f32 %v5575, 0.0
        %v5716 = vmax.f32 %v5578, 0.0
        %v5717 = vmax.f32 %v5583, 0.0
        %v5718 = vmax.f32 %v5586, 0.0
        %v5719 = vmax.f32 %v5591, 0.0
        %v5720 = vmax.f32 %v5594, 0.0
        %v5721 = vmax.f32 %v5599, 0.0
        %v5722 = vmax.f32 %v5602, 0.0
        %v5723 = vmax.f32 %v5607, 0.0
        %v5724 = vmax.f32 %v5610, 0.0
        %v5725 = vmax.f32 %v5615, 0.0
        %v5726 = vmax.f32 %v5618, 0.0
        %v5727 = vmax.f32 %v5623, 0.0
        %v5728 = vmax.f32 %v5626, 0.0
        %v5729 = vmax.f32 %v5631, 0.0
        %v5730 = vmax.f32 %v5634, 0.0
        %v5731 = vmax.f32 %v5639, 0.0
        %v5732 = vmax.f32 %v5642, 0.0
        %v5733 = vmax.f32 %v5647, 0.0
        %v5734 = vmax.f32 %v5650, 0.0
        %v5735 = vmax.f32 %v5655, 0.0
        %v5736 = vmax.f32 %v5658, 0.0
        %v5737 = vmax.f32 %v5663, 0.0
        %v5738 = vmax.f32 %v5666, 0.0
        %v5739 = vmax.f32 %v5671, 0.0
        %v5740 = vmax.f32 %v5674, 0.0
        %v5741 = vld [vmem:[%s5] sm:$0xff]
        %v5742 = vld [vmem:[%s5 + $0x8] sm:$0xff]
        %v5743 = vld [vmem:[%s5 + $0x10] sm:$0xff]
        %v5744 = vld [vmem:[%s5 + $0x18] sm:$0xff]
        %v5745 = vld [vmem:[%s5 + $0x20] sm:$0xff]
        %v5746 = vld [vmem:[%s5 + $0x28] sm:$0xff]
        %v5747 = vld [vmem:[%s5 + $0x30] sm:$0xff]
        %v5748 = vld [vmem:[%s5 + $0x38] sm:$0xff]
        %v5749 = vld [vmem:[%s5 + $0x40] sm:$0xff]
        %v5750 = vld [vmem:[%s5 + $0x48] sm:$0xff]
        %v5751 = vld [vmem:[%s5 + $0x50] sm:$0xff]
        %v5752 = vld [vmem:[%s5 + $0x58] sm:$0xff]
        %v5753 = vld [vmem:[%s5 + $0x60] sm:$0xff]
        %v5754 = vld [vmem:[%s5 + $0x68] sm:$0xff]
        %v5755 = vld [vmem:[%s5 + $0x70] sm:$0xff]
        %v5756 = vld [vmem:[%s5 + $0x78] sm:$0xff]
        %v5757 = vld [vmem:[%s5 + $0x80] sm:$0xff]
        %v5758 = vld [vmem:[%s5 + $0x88] sm:$0xff]
        %v5759 = vld [vmem:[%s5 + $0x90] sm:$0xff]
        %v5760 = vld [vmem:[%s5 + $0x98] sm:$0xff]
        %v5761 = vld [vmem:[%s5 + $0xa0] sm:$0xff]
        %v5762 = vld [vmem:[%s5 + $0xa8] sm:$0xff]
        %v5763 = vld [vmem:[%s5 + $0xb0] sm:$0xff]
        %v5764 = vld [vmem:[%s5 + $0xb8] sm:$0xff]
        %v5765 = vld [vmem:[%s5 + $0xc0] sm:$0xff]
        %v5766 = vld [vmem:[%s5 + $0xc8] sm:$0xff]
        %v5767 = vld [vmem:[%s5 + $0xd0] sm:$0xff]
        %v5768 = vld [vmem:[%s5 + $0xd8] sm:$0xff]
        %v5769 = vld [vmem:[%s5 + $0xe0] sm:$0xff]
        %v5770 = vld [vmem:[%s5 + $0xe8] sm:$0xff]
        %v5771 = vld [vmem:[%s5 + $0xf0] sm:$0xff]
        %v5772 = vld [vmem:[%s5 + $0xf8] sm:$0xff]
        %v5773 = vld [vmem:[%s5 + $0x100] sm:$0xff]
        %v5774 = vld [vmem:[%s5 + $0x108] sm:$0xff]
        %v5775 = vld [vmem:[%s5 + $0x110] sm:$0xff]
        %v5776 = vld [vmem:[%s5 + $0x118] sm:$0xff]
        %v5777 = vld [vmem:[%s5 + $0x120] sm:$0xff]
        %v5778 = vld [vmem:[%s5 + $0x128] sm:$0xff]
        %v5779 = vld [vmem:[%s5 + $0x130] sm:$0xff]
        %v5780 = vld [vmem:[%s5 + $0x138] sm:$0xff]
        %v5781 = vld [vmem:[%s5 + $0x140] sm:$0xff]
        %v5782 = vld [vmem:[%s5 + $0x148] sm:$0xff]
        %v5783 = vld [vmem:[%s5 + $0x150] sm:$0xff]
        %v5784 = vld [vmem:[%s5 + $0x158] sm:$0xff]
        %v5785 = vld [vmem:[%s5 + $0x160] sm:$0xff]
        %v5786 = vld [vmem:[%s5 + $0x168] sm:$0xff]
        %v5787 = vld [vmem:[%s5 + $0x170] sm:$0xff]
        %v5788 = vld [vmem:[%s5 + $0x178] sm:$0xff]
        %v5789 = vld [vmem:[%s5 + $0x180] sm:$0xff]
        %v5790 = vld [vmem:[%s5 + $0x188] sm:$0xff]
        %v5791 = vld [vmem:[%s5 + $0x190] sm:$0xff]
        %v5792 = vld [vmem:[%s5 + $0x198] sm:$0xff]
        %v5793 = vld [vmem:[%s5 + $0x1a0] sm:$0xff]
        %v5794 = vld [vmem:[%s5 + $0x1a8] sm:$0xff]
        %v5795 = vld [vmem:[%s5 + $0x1b0] sm:$0xff]
        %v5796 = vld [vmem:[%s5 + $0x1b8] sm:$0xff]
        %v5797 = vld [vmem:[%s5 + $0x1c0] sm:$0xff]
        %v5798 = vld [vmem:[%s5 + $0x1c8] sm:$0xff]
        %v5799 = vld [vmem:[%s5 + $0x1d0] sm:$0xff]
        %v5800 = vld [vmem:[%s5 + $0x1d8] sm:$0xff]
        %v5801 = vld [vmem:[%s5 + $0x1e0] sm:$0xff]
        %v5802 = vld [vmem:[%s5 + $0x1e8] sm:$0xff]
        %v5803 = vld [vmem:[%s5 + $0x1f0] sm:$0xff]
        %v5804 = vld [vmem:[%s5 + $0x1f8] sm:$0xff]
        %v5805 = vpack.c.bf16 %v5678, %v5677
        %v5806 = vpack.c.bf16 %v5680, %v5679
        %v5807 = vpack.c.bf16 %v5682, %v5681
        %v5808 = vpack.c.bf16 %v5684, %v5683
        %v5809 = vpack.c.bf16 %v5686, %v5685
        %v5810 = vpack.c.bf16 %v5688, %v5687
        %v5811 = vpack.c.bf16 %v5690, %v5689
        %v5812 = vpack.c.bf16 %v5692, %v5691
        %v5813 = vpack.c.bf16 %v5694, %v5693
        %v5814 = vpack.c.bf16 %v5696, %v5695
        %v5815 = vpack.c.bf16 %v5698, %v5697
        %v5816 = vpack.c.bf16 %v5700, %v5699
        %v5817 = vpack.c.bf16 %v5702, %v5701
        %v5818 = vpack.c.bf16 %v5704, %v5703
        %v5819 = vpack.c.bf16 %v5706, %v5705
        %v5820 = vpack.c.bf16 %v5708, %v5707
        %v5821 = vpack.c.bf16 %v5710, %v5709
        %v5822 = vpack.c.bf16 %v5712, %v5711
        %v5823 = vpack.c.bf16 %v5714, %v5713
        %v5824 = vpack.c.bf16 %v5716, %v5715
        %v5825 = vpack.c.bf16 %v5718, %v5717
        %v5826 = vpack.c.bf16 %v5720, %v5719
        %v5827 = vpack.c.bf16 %v5722, %v5721
        %v5828 = vpack.c.bf16 %v5724, %v5723
        %v5829 = vpack.c.bf16 %v5726, %v5725
        %v5830 = vpack.c.bf16 %v5728, %v5727
        %v5831 = vpack.c.bf16 %v5730, %v5729
        %v5832 = vpack.c.bf16 %v5732, %v5731
        %v5833 = vpack.c.bf16 %v5734, %v5733
        %v5834 = vpack.c.bf16 %v5736, %v5735
        %v5835 = vpack.c.bf16 %v5738, %v5737
        %v5836 = vpack.c.bf16 %v5740, %v5739
        %v5837 = vld [vmem:[%s6] sm:$0xff]
        %v5838 = vld [vmem:[%s6 + $0x8] sm:$0xff]
        %v5839 = vld [vmem:[%s6 + $0x10] sm:$0xff]
        %v5840 = vld [vmem:[%s6 + $0x18] sm:$0xff]
        %v5841 = vld [vmem:[%s6 + $0x20] sm:$0xff]
        %v5842 = vld [vmem:[%s6 + $0x28] sm:$0xff]
        %v5843 = vld [vmem:[%s6 + $0x30] sm:$0xff]
        %v5844 = vld [vmem:[%s6 + $0x38] sm:$0xff]
        %v5845 = vld [vmem:[%s6 + $0x40] sm:$0xff]
        %v5846 = vld [vmem:[%s6 + $0x48] sm:$0xff]
        %v5847 = vld [vmem:[%s6 + $0x50] sm:$0xff]
        %v5848 = vld [vmem:[%s6 + $0x58] sm:$0xff]
        %v5849 = vld [vmem:[%s6 + $0x60] sm:$0xff]
        %v5850 = vld [vmem:[%s6 + $0x68] sm:$0xff]
        %v5851 = vld [vmem:[%s6 + $0x70] sm:$0xff]
        %v5852 = vld [vmem:[%s6 + $0x78] sm:$0xff]
        %v5853 = vld [vmem:[%s6 + $0x80] sm:$0xff]
        %v5854 = vld [vmem:[%s6 + $0x88] sm:$0xff]
        %v5855 = vld [vmem:[%s6 + $0x90] sm:$0xff]
        %v5856 = vld [vmem:[%s6 + $0x98] sm:$0xff]
        %v5857 = vld [vmem:[%s6 + $0xa0] sm:$0xff]
        %v5858 = vld [vmem:[%s6 + $0xa8] sm:$0xff]
        %v5859 = vld [vmem:[%s6 + $0xb0] sm:$0xff]
        %v5860 = vld [vmem:[%s6 + $0xb8] sm:$0xff]
        %v5861 = vld [vmem:[%s6 + $0xc0] sm:$0xff]
        %v5862 = vld [vmem:[%s6 + $0xc8] sm:$0xff]
        %v5863 = vld [vmem:[%s6 + $0xd0] sm:$0xff]
        %v5864 = vld [vmem:[%s6 + $0xd8] sm:$0xff]
        %v5865 = vld [vmem:[%s6 + $0xe0] sm:$0xff]
        %v5866 = vld [vmem:[%s6 + $0xe8] sm:$0xff]
        %v5867 = vld [vmem:[%s6 + $0xf0] sm:$0xff]
        %v5868 = vld [vmem:[%s6 + $0xf8] sm:$0xff]
        %5870 = vset.pattern.permute.xlu0 0
        %5871 = vperm.xlu0 %5870, %v5837
        %v5872 = vpop.permute.xlu0 %5871
        %5875 = vset.pattern.permute.xlu0 0
        %5876 = vperm.xlu0 %5875, %v5838
        %v5877 = vpop.permute.xlu0 %5876
        %5880 = vset.pattern.permute.xlu0 0
        %5881 = vperm.xlu0 %5880, %v5839
        %v5882 = vpop.permute.xlu0 %5881
        %5885 = vset.pattern.permute.xlu0 0
        %5886 = vperm.xlu0 %5885, %v5840
        %v5887 = vpop.permute.xlu0 %5886
        %5890 = vset.pattern.permute.xlu0 0
        %5891 = vperm.xlu0 %5890, %v5841
        %v5892 = vpop.permute.xlu0 %5891
        %5895 = vset.pattern.permute.xlu0 0
        %5896 = vperm.xlu0 %5895, %v5842
        %v5897 = vpop.permute.xlu0 %5896
        %5900 = vset.pattern.permute.xlu0 0
        %5901 = vperm.xlu0 %5900, %v5843
        %v5902 = vpop.permute.xlu0 %5901
        %5905 = vset.pattern.permute.xlu0 0
        %5906 = vperm.xlu0 %5905, %v5844
        %v5907 = vpop.permute.xlu0 %5906
        %5910 = vset.pattern.permute.xlu0 0
        %5911 = vperm.xlu0 %5910, %v5845
        %v5912 = vpop.permute.xlu0 %5911
        %5915 = vset.pattern.permute.xlu0 0
        %5916 = vperm.xlu0 %5915, %v5846
        %v5917 = vpop.permute.xlu0 %5916
        %5920 = vset.pattern.permute.xlu0 0
        %5921 = vperm.xlu0 %5920, %v5847
        %v5922 = vpop.permute.xlu0 %5921
        %5925 = vset.pattern.permute.xlu0 0
        %5926 = vperm.xlu0 %5925, %v5848
        %v5927 = vpop.permute.xlu0 %5926
        %5930 = vset.pattern.permute.xlu0 0
        %5931 = vperm.xlu0 %5930, %v5849
        %v5932 = vpop.permute.xlu0 %5931
        %5935 = vset.pattern.permute.xlu0 0
        %5936 = vperm.xlu0 %5935, %v5850
        %v5937 = vpop.permute.xlu0 %5936
        %5940 = vset.pattern.permute.xlu0 0
        %5941 = vperm.xlu0 %5940, %v5851
        %v5942 = vpop.permute.xlu0 %5941
        %5945 = vset.pattern.permute.xlu0 0
        %5946 = vperm.xlu0 %5945, %v5852
        %v5947 = vpop.permute.xlu0 %5946
        %5950 = vset.pattern.permute.xlu0 0
        %5951 = vperm.xlu0 %5950, %v5853
        %v5952 = vpop.permute.xlu0 %5951
        %5955 = vset.pattern.permute.xlu0 0
        %5956 = vperm.xlu0 %5955, %v5854
        %v5957 = vpop.permute.xlu0 %5956
        %5960 = vset.pattern.permute.xlu0 0
        %5961 = vperm.xlu0 %5960, %v5855
        %v5962 = vpop.permute.xlu0 %5961
        %5965 = vset.pattern.permute.xlu0 0
        %5966 = vperm.xlu0 %5965, %v5856
        %v5967 = vpop.permute.xlu0 %5966
        %5970 = vset.pattern.permute.xlu0 0
        %5971 = vperm.xlu0 %5970, %v5857
        %v5972 = vpop.permute.xlu0 %5971
        %5975 = vset.pattern.permute.xlu0 0
        %5976 = vperm.xlu0 %5975, %v5858
        %v5977 = vpop.permute.xlu0 %5976
        %5980 = vset.pattern.permute.xlu0 0
        %5981 = vperm.xlu0 %5980, %v5859
        %v5982 = vpop.permute.xlu0 %5981
        %5985 = vset.pattern.permute.xlu0 0
        %5986 = vperm.xlu0 %5985, %v5860
        %v5987 = vpop.permute.xlu0 %5986
        %5990 = vset.pattern.permute.xlu0 0
        %5991 = vperm.xlu0 %5990, %v5861
        %v5992 = vpop.permute.xlu0 %5991
        %5995 = vset.pattern.permute.xlu0 0
        %5996 = vperm.xlu0 %5995, %v5862
        %v5997 = vpop.permute.xlu0 %5996
        %6000 = vset.pattern.permute.xlu0 0
        %6001 = vperm.xlu0 %6000, %v5863
        %v6002 = vpop.permute.xlu0 %6001
        %6005 = vset.pattern.permute.xlu0 0
        %6006 = vperm.xlu0 %6005, %v5864
        %v6007 = vpop.permute.xlu0 %6006
        %6010 = vset.pattern.permute.xlu0 0
        %6011 = vperm.xlu0 %6010, %v5865
        %v6012 = vpop.permute.xlu0 %6011
        %6015 = vset.pattern.permute.xlu0 0
        %6016 = vperm.xlu0 %6015, %v5866
        %v6017 = vpop.permute.xlu0 %6016
        %6020 = vset.pattern.permute.xlu0 0
        %6021 = vperm.xlu0 %6020, %v5867
        %v6022 = vpop.permute.xlu0 %6021
        %6025 = vset.pattern.permute.xlu0 0
        %6026 = vperm.xlu0 %6025, %v5868
        %v6027 = vpop.permute.xlu0 %6026
        %v6093 = vunpack.c.l.b16 %v5741
        %v6094 = vunpack.c.h.b16 %v5741
        %v6095 = vunpack.c.l.b16 %v5742
        %v6096 = vunpack.c.h.b16 %v5742
        %v6097 = vunpack.c.l.b16 %v5743
        %v6098 = vunpack.c.h.b16 %v5743
        %v6099 = vunpack.c.l.b16 %v5744
        %v6100 = vunpack.c.h.b16 %v5744
        %v6101 = vunpack.c.l.b16 %v5745
        %v6102 = vunpack.c.h.b16 %v5745
        %v6103 = vunpack.c.l.b16 %v5746
        %v6104 = vunpack.c.h.b16 %v5746
        %v6105 = vunpack.c.l.b16 %v5747
        %v6106 = vunpack.c.h.b16 %v5747
        %v6107 = vunpack.c.l.b16 %v5748
        %v6108 = vunpack.c.h.b16 %v5748
        %v6109 = vunpack.c.l.b16 %v5749
        %v6110 = vunpack.c.h.b16 %v5749
        %v6111 = vunpack.c.l.b16 %v5750
        %v6112 = vunpack.c.h.b16 %v5750
        %v6113 = vunpack.c.l.b16 %v5751
        %v6114 = vunpack.c.h.b16 %v5751
        %v6115 = vunpack.c.l.b16 %v5752
        %v6116 = vunpack.c.h.b16 %v5752
        %v6117 = vunpack.c.l.b16 %v5753
        %v6118 = vunpack.c.h.b16 %v5753
        %v6119 = vunpack.c.l.b16 %v5754
        %v6120 = vunpack.c.h.b16 %v5754
        %v6121 = vunpack.c.l.b16 %v5755
        %v6122 = vunpack.c.h.b16 %v5755
        %v6123 = vunpack.c.l.b16 %v5756
        %v6124 = vunpack.c.h.b16 %v5756
        %v6125 = vunpack.c.l.b16 %v5757
        %v6126 = vunpack.c.h.b16 %v5757
        %v6127 = vunpack.c.l.b16 %v5758
        %v6128 = vunpack.c.h.b16 %v5758
        %v6129 = vunpack.c.l.b16 %v5759
        %v6130 = vunpack.c.h.b16 %v5759
        %v6131 = vunpack.c.l.b16 %v5760
        %v6132 = vunpack.c.h.b16 %v5760
        %v6133 = vunpack.c.l.b16 %v5761
        %v6134 = vunpack.c.h.b16 %v5761
        %v6135 = vunpack.c.l.b16 %v5762
        %v6136 = vunpack.c.h.b16 %v5762
        %v6137 = vunpack.c.l.b16 %v5763
        %v6138 = vunpack.c.h.b16 %v5763
        %v6139 = vunpack.c.l.b16 %v5764
        %v6140 = vunpack.c.h.b16 %v5764
        %v6141 = vunpack.c.l.b16 %v5765
        %v6142 = vunpack.c.h.b16 %v5765
        %v6143 = vunpack.c.l.b16 %v5766
        %v6144 = vunpack.c.h.b16 %v5766
        %v6145 = vunpack.c.l.b16 %v5767
        %v6146 = vunpack.c.h.b16 %v5767
        %v6147 = vunpack.c.l.b16 %v5768
        %v6148 = vunpack.c.h.b16 %v5768
        %v6149 = vunpack.c.l.b16 %v5769
        %v6150 = vunpack.c.h.b16 %v5769
        %v6151 = vunpack.c.l.b16 %v5770
        %v6152 = vunpack.c.h.b16 %v5770
        %v6153 = vunpack.c.l.b16 %v5771
        %v6154 = vunpack.c.h.b16 %v5771
        %v6155 = vunpack.c.l.b16 %v5772
        %v6156 = vunpack.c.h.b16 %v5772
        %v6157 = vunpack.c.l.b16 %v5773
        %v6158 = vunpack.c.h.b16 %v5773
        %v6159 = vunpack.c.l.b16 %v5774
        %v6160 = vunpack.c.h.b16 %v5774
        %v6161 = vunpack.c.l.b16 %v5775
        %v6162 = vunpack.c.h.b16 %v5775
        %v6163 = vunpack.c.l.b16 %v5776
        %v6164 = vunpack.c.h.b16 %v5776
        %v6165 = vunpack.c.l.b16 %v5777
        %v6166 = vunpack.c.h.b16 %v5777
        %v6167 = vunpack.c.l.b16 %v5778
        %v6168 = vunpack.c.h.b16 %v5778
        %v6169 = vunpack.c.l.b16 %v5779
        %v6170 = vunpack.c.h.b16 %v5779
        %v6171 = vunpack.c.l.b16 %v5780
        %v6172 = vunpack.c.h.b16 %v5780
        %v6173 = vunpack.c.l.b16 %v5781
        %v6174 = vunpack.c.h.b16 %v5781
        %v6175 = vunpack.c.l.b16 %v5782
        %v6176 = vunpack.c.h.b16 %v5782
        %v6177 = vunpack.c.l.b16 %v5783
        %v6178 = vunpack.c.h.b16 %v5783
        %v6179 = vunpack.c.l.b16 %v5784
        %v6180 = vunpack.c.h.b16 %v5784
        %v6181 = vunpack.c.l.b16 %v5785
        %v6182 = vunpack.c.h.b16 %v5785
        %v6183 = vunpack.c.l.b16 %v5786
        %v6184 = vunpack.c.h.b16 %v5786
        %v6185 = vunpack.c.l.b16 %v5787
        %v6186 = vunpack.c.h.b16 %v5787
        %v6187 = vunpack.c.l.b16 %v5788
        %v6188 = vunpack.c.h.b16 %v5788
        %v6189 = vunpack.c.l.b16 %v5789
        %v6190 = vunpack.c.h.b16 %v5789
        %v6191 = vunpack.c.l.b16 %v5790
        %v6192 = vunpack.c.h.b16 %v5790
        %v6193 = vunpack.c.l.b16 %v5791
        %v6194 = vunpack.c.h.b16 %v5791
        %v6195 = vunpack.c.l.b16 %v5792
        %v6196 = vunpack.c.h.b16 %v5792
        %v6197 = vunpack.c.l.b16 %v5793
        %v6198 = vunpack.c.h.b16 %v5793
        %v6199 = vunpack.c.l.b16 %v5794
        %v6200 = vunpack.c.h.b16 %v5794
        %v6201 = vunpack.c.l.b16 %v5795
        %v6202 = vunpack.c.h.b16 %v5795
        %v6203 = vunpack.c.l.b16 %v5796
        %v6204 = vunpack.c.h.b16 %v5796
        %v6205 = vunpack.c.l.b16 %v5797
        %v6206 = vunpack.c.h.b16 %v5797
        %v6207 = vunpack.c.l.b16 %v5798
        %v6208 = vunpack.c.h.b16 %v5798
        %v6209 = vunpack.c.l.b16 %v5799
        %v6210 = vunpack.c.h.b16 %v5799
        %v6211 = vunpack.c.l.b16 %v5800
        %v6212 = vunpack.c.h.b16 %v5800
        %v6213 = vunpack.c.l.b16 %v5801
        %v6214 = vunpack.c.h.b16 %v5801
        %v6215 = vunpack.c.l.b16 %v5802
        %v6216 = vunpack.c.h.b16 %v5802
        %v6217 = vunpack.c.l.b16 %v5803
        %v6218 = vunpack.c.h.b16 %v5803
        %v6219 = vunpack.c.l.b16 %v5804
        %v6220 = vunpack.c.h.b16 %v5804
        %v6221 = vpack.c.b16 %v6097, %v6093
        %v6222 = vpack.c.b16 %v6098, %v6094
        %v6223 = vpack.c.b16 %v6099, %v6095
        %v6224 = vpack.c.b16 %v6100, %v6096
        %v6225 = vpack.c.b16 %v6105, %v6101
        %v6226 = vpack.c.b16 %v6106, %v6102
        %v6227 = vpack.c.b16 %v6107, %v6103
        %v6228 = vpack.c.b16 %v6108, %v6104
        %v6229 = vpack.c.b16 %v6113, %v6109
        %v6230 = vpack.c.b16 %v6114, %v6110
        %v6231 = vpack.c.b16 %v6115, %v6111
        %v6232 = vpack.c.b16 %v6116, %v6112
        %v6233 = vpack.c.b16 %v6121, %v6117
        %v6234 = vpack.c.b16 %v6122, %v6118
        %v6235 = vpack.c.b16 %v6123, %v6119
        %v6236 = vpack.c.b16 %v6124, %v6120
        %v6237 = vpack.c.b16 %v6129, %v6125
        %v6238 = vpack.c.b16 %v6130, %v6126
        %v6239 = vpack.c.b16 %v6131, %v6127
        %v6240 = vpack.c.b16 %v6132, %v6128
        %v6241 = vpack.c.b16 %v6137, %v6133
        %v6242 = vpack.c.b16 %v6138, %v6134
        %v6243 = vpack.c.b16 %v6139, %v6135
        %v6244 = vpack.c.b16 %v6140, %v6136
        %v6245 = vpack.c.b16 %v6145, %v6141
        %v6246 = vpack.c.b16 %v6146, %v6142
        %v6247 = vpack.c.b16 %v6147, %v6143
        %v6248 = vpack.c.b16 %v6148, %v6144
        %v6249 = vpack.c.b16 %v6153, %v6149
        %v6250 = vpack.c.b16 %v6154, %v6150
        %v6251 = vpack.c.b16 %v6155, %v6151
        %v6252 = vpack.c.b16 %v6156, %v6152
        %v6253 = vpack.c.b16 %v6161, %v6157
        %v6254 = vpack.c.b16 %v6162, %v6158
        %v6255 = vpack.c.b16 %v6163, %v6159
        %v6256 = vpack.c.b16 %v6164, %v6160
        %v6257 = vpack.c.b16 %v6169, %v6165
        %v6258 = vpack.c.b16 %v6170, %v6166
        %v6259 = vpack.c.b16 %v6171, %v6167
        %v6260 = vpack.c.b16 %v6172, %v6168
        %v6261 = vpack.c.b16 %v6177, %v6173
        %v6262 = vpack.c.b16 %v6178, %v6174
        %v6263 = vpack.c.b16 %v6179, %v6175
        %v6264 = vpack.c.b16 %v6180, %v6176
        %v6265 = vpack.c.b16 %v6185, %v6181
        %v6266 = vpack.c.b16 %v6186, %v6182
        %v6267 = vpack.c.b16 %v6187, %v6183
        %v6268 = vpack.c.b16 %v6188, %v6184
        %v6269 = vpack.c.b16 %v6193, %v6189
        %v6270 = vpack.c.b16 %v6194, %v6190
        %v6271 = vpack.c.b16 %v6195, %v6191
        %v6272 = vpack.c.b16 %v6196, %v6192
        %v6273 = vpack.c.b16 %v6201, %v6197
        %v6274 = vpack.c.b16 %v6202, %v6198
        %v6275 = vpack.c.b16 %v6203, %v6199
        %v6276 = vpack.c.b16 %v6204, %v6200
        %v6277 = vpack.c.b16 %v6209, %v6205
        %v6278 = vpack.c.b16 %v6210, %v6206
        %v6279 = vpack.c.b16 %v6211, %v6207
        %v6280 = vpack.c.b16 %v6212, %v6208
        %v6281 = vpack.c.b16 %v6217, %v6213
        %v6282 = vpack.c.b16 %v6218, %v6214
        %v6283 = vpack.c.b16 %v6219, %v6215
        %v6284 = vpack.c.b16 %v6220, %v6216
        %6349 = vmatprep.subr.bf16.mxu0 0
        %6350 = vmatpush1.bf16.msra.mxu0 %v5805
        %6351 = vmatprep.subr.bf16.mxu0 0
        %6352 = vmatpush1.bf16.msra.mxu0 %v5806
        %6353 = vmatprep.subr.bf16.mxu0 0
        %6354 = vmatpush1.bf16.msra.mxu0 %v5807
        %6355 = vmatprep.subr.bf16.mxu0 0
        %6356 = vmatpush1.bf16.msra.mxu0 %v5808
        %6357 = vmatprep.subr.bf16.mxu0 0
        %6358 = vmatpush1.bf16.msra.mxu0 %v5809
        %6359 = vmatprep.subr.bf16.mxu0 0
        %6360 = vmatpush1.bf16.msra.mxu0 %v5810
        %6361 = vmatprep.subr.bf16.mxu0 0
        %6362 = vmatpush1.bf16.msra.mxu0 %v5811
        %6363 = vmatprep.subr.bf16.mxu0 0
        %6364 = vmatpush1.bf16.msra.mxu0 %v5812
        %6365 = vmatprep.subr.bf16.mxu0 0
        %6366 = vmatpush1.bf16.msra.mxu0 %v5813
        %6367 = vmatprep.subr.bf16.mxu0 0
        %6368 = vmatpush1.bf16.msra.mxu0 %v5814
        %6369 = vmatprep.subr.bf16.mxu0 0
        %6370 = vmatpush1.bf16.msra.mxu0 %v5815
        %6371 = vmatprep.subr.bf16.mxu0 0
        %6372 = vmatpush1.bf16.msra.mxu0 %v5816
        %6373 = vmatprep.subr.bf16.mxu0 0
        %6374 = vmatpush1.bf16.msra.mxu0 %v5817
        %6375 = vmatprep.subr.bf16.mxu0 0
        %6376 = vmatpush1.bf16.msra.mxu0 %v5818
        %6377 = vmatprep.subr.bf16.mxu0 0
        %6378 = vmatpush1.bf16.msra.mxu0 %v5819
        %6379 = vmatprep.subr.bf16.mxu0 0
        %6380 = vmatpush1.bf16.msra.mxu0 %v5820
        %6381 = vmatprep.mubr.bf16.mxu0 %v6222
        %6382 = vmatmul.mubr.bf16.gmra.mrb[0].mxu0 %v6221
        %v6383 = vpop.f32.mrb[0].mxu0
        %v6384 = vadd.f32 %v5872, %v6383
        %v6385 = vpop.f32.mrb[0].mxu0
        %v6386 = vpop.f32.mrb[0].mxu0
        %v6387 = vadd.f32 %v5877, %v6386
        %v6388 = vpop.f32.mrb[0].mxu0
        %6389 = vmatprep.mubr.bf16.mxu0 %v6226
        %6390 = vmatmul.mubr.bf16.gmra.mrb[0].mxu0 %v6225
        %v6391 = vpop.f32.mrb[0].mxu0
        %v6392 = vadd.f32 %v5882, %v6391
        %v6393 = vpop.f32.mrb[0].mxu0
        %v6394 = vpop.f32.mrb[0].mxu0
        %v6395 = vadd.f32 %v5887, %v6394
        %v6396 = vpop.f32.mrb[0].mxu0
        %6397 = vmatprep.mubr.bf16.mxu0 %v6230
        %6398 = vmatmul.mubr.bf16.gmra.mrb[0].mxu0 %v6229
        %v6399 = vpop.f32.mrb[0].mxu0
        %v6400 = vadd.f32 %v5892, %v6399
        %v6401 = vpop.f32.mrb[0].mxu0
        %v6402 = vpop.f32.mrb[0].mxu0
        %v6403 = vadd.f32 %v5897, %v6402
        %v6404 = vpop.f32.mrb[0].mxu0
        %6405 = vmatprep.mubr.bf16.mxu0 %v6234
        %6406 = vmatmul.mubr.bf16.gmra.mrb[0].mxu0 %v6233
        %v6407 = vpop.f32.mrb[0].mxu0
        %v6408 = vadd.f32 %v5902, %v6407
        %v6409 = vpop.f32.mrb[0].mxu0
        %v6410 = vpop.f32.mrb[0].mxu0
        %v6411 = vadd.f32 %v5907, %v6410
        %v6412 = vpop.f32.mrb[0].mxu0
        %6413 = vmatprep.mubr.bf16.mxu0 %v6238
        %6414 = vmatmul.mubr.bf16.gmra.mrb[0].mxu0 %v6237
        %v6415 = vpop.f32.mrb[0].mxu0
        %v6416 = vadd.f32 %v5912, %v6415
        %v6417 = vpop.f32.mrb[0].mxu0
        %v6418 = vpop.f32.mrb[0].mxu0
        %v6419 = vadd.f32 %v5917, %v6418
        %v6420 = vpop.f32.mrb[0].mxu0
        %6421 = vmatprep.mubr.bf16.mxu0 %v6242
        %6422 = vmatmul.mubr.bf16.gmra.mrb[0].mxu0 %v6241
        %v6423 = vpop.f32.mrb[0].mxu0
        %v6424 = vadd.f32 %v5922, %v6423
        %v6425 = vpop.f32.mrb[0].mxu0
        %v6426 = vpop.f32.mrb[0].mxu0
        %v6427 = vadd.f32 %v5927, %v6426
        %v6428 = vpop.f32.mrb[0].mxu0
        %6429 = vmatprep.mubr.bf16.mxu0 %v6246
        %6430 = vmatmul.mubr.bf16.gmra.mrb[0].mxu0 %v6245
        %v6431 = vpop.f32.mrb[0].mxu0
        %v6432 = vadd.f32 %v5932, %v6431
        %v6433 = vpop.f32.mrb[0].mxu0
        %v6434 = vpop.f32.mrb[0].mxu0
        %v6435 = vadd.f32 %v5937, %v6434
        %v6436 = vpop.f32.mrb[0].mxu0
        %6437 = vmatprep.mubr.bf16.mxu0 %v6250
        %6438 = vmatmul.mubr.bf16.gmra.mrb[0].mxu0 %v6249
        %v6439 = vpop.f32.mrb[0].mxu0
        %v6440 = vadd.f32 %v5942, %v6439
        %v6441 = vpop.f32.mrb[0].mxu0
        %v6442 = vpop.f32.mrb[0].mxu0
        %v6443 = vadd.f32 %v5947, %v6442
        %v6444 = vpop.f32.mrb[0].mxu0
        %6445 = vmatprep.mubr.bf16.mxu0 %v6254
        %6446 = vmatmul.mubr.bf16.gmra.mrb[0].mxu0 %v6253
        %v6447 = vpop.f32.mrb[0].mxu0
        %v6448 = vadd.f32 %v5952, %v6447
        %v6449 = vpop.f32.mrb[0].mxu0
        %v6450 = vpop.f32.mrb[0].mxu0
        %v6451 = vadd.f32 %v5957, %v6450
        %v6452 = vpop.f32.mrb[0].mxu0
        %6453 = vmatprep.mubr.bf16.mxu0 %v6258
        %6454 = vmatmul.mubr.bf16.gmra.mrb[0].mxu0 %v6257
        %v6455 = vpop.f32.mrb[0].mxu0
        %v6456 = vadd.f32 %v5962, %v6455
        %v6457 = vpop.f32.mrb[0].mxu0
        %v6458 = vpop.f32.mrb[0].mxu0
        %v6459 = vadd.f32 %v5967, %v6458
        %v6460 = vpop.f32.mrb[0].mxu0
        %6461 = vmatprep.mubr.bf16.mxu0 %v6262
        %6462 = vmatmul.mubr.bf16.gmra.mrb[0].mxu0 %v6261
        %v6463 = vpop.f32.mrb[0].mxu0
        %v6464 = vadd.f32 %v5972, %v6463
        %v6465 = vpop.f32.mrb[0].mxu0
        %v6466 = vpop.f32.mrb[0].mxu0
        %v6467 = vadd.f32 %v5977, %v6466
        %v6468 = vpop.f32.mrb[0].mxu0
        %6469 = vmatprep.mubr.bf16.mxu0 %v6266
        %6470 = vmatmul.mubr.bf16.gmra.mrb[0].mxu0 %v6265
        %v6471 = vpop.f32.mrb[0].mxu0
        %v6472 = vadd.f32 %v5982, %v6471
        %v6473 = vpop.f32.mrb[0].mxu0
        %v6474 = vpop.f32.mrb[0].mxu0
        %v6475 = vadd.f32 %v5987, %v6474
        %v6476 = vpop.f32.mrb[0].mxu0
        %6477 = vmatprep.mubr.bf16.mxu0 %v6270
        %6478 = vmatmul.mubr.bf16.gmra.mrb[0].mxu0 %v6269
        %v6479 = vpop.f32.mrb[0].mxu0
        %v6480 = vadd.f32 %v5992, %v6479
        %v6481 = vpop.f32.mrb[0].mxu0
        %v6482 = vpop.f32.mrb[0].mxu0
        %v6483 = vadd.f32 %v5997, %v6482
        %v6484 = vpop.f32.mrb[0].mxu0
        %6485 = vmatprep.mubr.bf16.mxu0 %v6274
        %6486 = vmatmul.mubr.bf16.gmra.mrb[0].mxu0 %v6273
        %v6487 = vpop.f32.mrb[0].mxu0
        %v6488 = vadd.f32 %v6002, %v6487
        %v6489 = vpop.f32.mrb[0].mxu0
        %v6490 = vpop.f32.mrb[0].mxu0
        %v6491 = vadd.f32 %v6007, %v6490
        %v6492 = vpop.f32.mrb[0].mxu0
        %6493 = vmatprep.mubr.bf16.mxu0 %v6278
        %6494 = vmatmul.mubr.bf16.gmra.mrb[0].mxu0 %v6277
        %v6495 = vpop.f32.mrb[0].mxu0
        %v6496 = vadd.f32 %v6012, %v6495
        %v6497 = vpop.f32.mrb[0].mxu0
        %v6498 = vpop.f32.mrb[0].mxu0
        %v6499 = vadd.f32 %v6017, %v6498
        %v6500 = vpop.f32.mrb[0].mxu0
        %6501 = vmatprep.mubr.bf16.mxu0 %v6282
        %6502 = vmatmul.mubr.bf16.gmra.mrb[0].mxu0 %v6281
        %v6503 = vpop.f32.mrb[0].mxu0
        %v6504 = vadd.f32 %v6022, %v6503
        %v6505 = vpop.f32.mrb[0].mxu0
        %v6506 = vpop.f32.mrb[0].mxu0
        %v6507 = vadd.f32 %v6027, %v6506
        %v6508 = vpop.f32.mrb[0].mxu0
        %6509 = vdwg.mxu0
        %6510 = vmatprep.subr.bf16.mxu0 0
        %6511 = vmatpush1.bf16.msra.mxu0 %v5821
        %6512 = vmatprep.subr.bf16.mxu0 0
        %6513 = vmatpush1.bf16.msra.mxu0 %v5822
        %6514 = vmatprep.subr.bf16.mxu0 0
        %6515 = vmatpush1.bf16.msra.mxu0 %v5823
        %6516 = vmatprep.subr.bf16.mxu0 0
        %6517 = vmatpush1.bf16.msra.mxu0 %v5824
        %6518 = vmatprep.subr.bf16.mxu0 0
        %6519 = vmatpush1.bf16.msra.mxu0 %v5825
        %6520 = vmatprep.subr.bf16.mxu0 0
        %6521 = vmatpush1.bf16.msra.mxu0 %v5826
        %6522 = vmatprep.subr.bf16.mxu0 0
        %6523 = vmatpush1.bf16.msra.mxu0 %v5827
        %6524 = vmatprep.subr.bf16.mxu0 0
        %6525 = vmatpush1.bf16.msra.mxu0 %v5828
        %6526 = vmatprep.subr.bf16.mxu0 0
        %6527 = vmatpush1.bf16.msra.mxu0 %v5829
        %6528 = vmatprep.subr.bf16.mxu0 0
        %6529 = vmatpush1.bf16.msra.mxu0 %v5830
        %6530 = vmatprep.subr.bf16.mxu0 0
        %6531 = vmatpush1.bf16.msra.mxu0 %v5831
        %6532 = vmatprep.subr.bf16.mxu0 0
        %6533 = vmatpush1.bf16.msra.mxu0 %v5832
        %6534 = vmatprep.subr.bf16.mxu0 0
        %6535 = vmatpush1.bf16.msra.mxu0 %v5833
        %6536 = vmatprep.subr.bf16.mxu0 0
        %6537 = vmatpush1.bf16.msra.mxu0 %v5834
        %6538 = vmatprep.subr.bf16.mxu0 0
        %6539 = vmatpush1.bf16.msra.mxu0 %v5835
        %6540 = vmatprep.subr.bf16.mxu0 0
        %6541 = vmatpush1.bf16.msra.mxu0 %v5836
        %6542 = vmatprep.mubr.bf16.mxu0 %v6224
        %6543 = vmatmul.mubr.bf16.gmra.mrb[0].mxu0 %v6223
        %v6544 = vpop.f32.mrb[0].mxu0
        %v6545 = vadd.f32 %v6384, %v6544
        %v6546 = vpop.f32.mrb[0].mxu0
        %v6547 = vpop.f32.mrb[0].mxu0
        %v6548 = vadd.f32 %v6387, %v6547
        %v6549 = vpop.f32.mrb[0].mxu0
        %6550 = vmatprep.mubr.bf16.mxu0 %v6228
        %6551 = vmatmul.mubr.bf16.gmra.mrb[0].mxu0 %v6227
        %v6552 = vpop.f32.mrb[0].mxu0
        %v6553 = vadd.f32 %v6392, %v6552
        %v6554 = vpop.f32.mrb[0].mxu0
        %v6555 = vpop.f32.mrb[0].mxu0
        %v6556 = vadd.f32 %v6395, %v6555
        %v6557 = vpop.f32.mrb[0].mxu0
        %6558 = vmatprep.mubr.bf16.mxu0 %v6232
        %6559 = vmatmul.mubr.bf16.gmra.mrb[0].mxu0 %v6231
        %v6560 = vpop.f32.mrb[0].mxu0
        %v6561 = vadd.f32 %v6400, %v6560
        %v6562 = vpop.f32.mrb[0].mxu0
        %v6563 = vpop.f32.mrb[0].mxu0
        %v6564 = vadd.f32 %v6403, %v6563
        %v6565 = vpop.f32.mrb[0].mxu0
        %6566 = vmatprep.mubr.bf16.mxu0 %v6236
        %6567 = vmatmul.mubr.bf16.gmra.mrb[0].mxu0 %v6235
        %v6568 = vpop.f32.mrb[0].mxu0
        %v6569 = vadd.f32 %v6408, %v6568
        %v6570 = vpop.f32.mrb[0].mxu0
        %v6571 = vpop.f32.mrb[0].mxu0
        %v6572 = vadd.f32 %v6411, %v6571
        %v6573 = vpop.f32.mrb[0].mxu0
        %6574 = vmatprep.mubr.bf16.mxu0 %v6240
        %6575 = vmatmul.mubr.bf16.gmra.mrb[0].mxu0 %v6239
        %v6576 = vpop.f32.mrb[0].mxu0
        %v6577 = vadd.f32 %v6416, %v6576
        %v6578 = vpop.f32.mrb[0].mxu0
        %v6579 = vpop.f32.mrb[0].mxu0
        %v6580 = vadd.f32 %v6419, %v6579
        %v6581 = vpop.f32.mrb[0].mxu0
        %6582 = vmatprep.mubr.bf16.mxu0 %v6244
        %6583 = vmatmul.mubr.bf16.gmra.mrb[0].mxu0 %v6243
        %v6584 = vpop.f32.mrb[0].mxu0
        %v6585 = vadd.f32 %v6424, %v6584
        %v6586 = vpop.f32.mrb[0].mxu0
        %v6587 = vpop.f32.mrb[0].mxu0
        %v6588 = vadd.f32 %v6427, %v6587
        %v6589 = vpop.f32.mrb[0].mxu0
        %6590 = vmatprep.mubr.bf16.mxu0 %v6248
        %6591 = vmatmul.mubr.bf16.gmra.mrb[0].mxu0 %v6247
        %v6592 = vpop.f32.mrb[0].mxu0
        %v6593 = vadd.f32 %v6432, %v6592
        %v6594 = vpop.f32.mrb[0].mxu0
        %v6595 = vpop.f32.mrb[0].mxu0
        %v6596 = vadd.f32 %v6435, %v6595
        %v6597 = vpop.f32.mrb[0].mxu0
        %6598 = vmatprep.mubr.bf16.mxu0 %v6252
        %6599 = vmatmul.mubr.bf16.gmra.mrb[0].mxu0 %v6251
        %v6600 = vpop.f32.mrb[0].mxu0
        %v6601 = vadd.f32 %v6440, %v6600
        %v6602 = vpop.f32.mrb[0].mxu0
        %v6603 = vpop.f32.mrb[0].mxu0
        %v6604 = vadd.f32 %v6443, %v6603
        %v6605 = vpop.f32.mrb[0].mxu0
        %6606 = vmatprep.mubr.bf16.mxu0 %v6256
        %6607 = vmatmul.mubr.bf16.gmra.mrb[0].mxu0 %v6255
        %v6608 = vpop.f32.mrb[0].mxu0
        %v6609 = vadd.f32 %v6448, %v6608
        %v6610 = vpop.f32.mrb[0].mxu0
        %v6611 = vpop.f32.mrb[0].mxu0
        %v6612 = vadd.f32 %v6451, %v6611
        %v6613 = vpop.f32.mrb[0].mxu0
        %6614 = vmatprep.mubr.bf16.mxu0 %v6260
        %6615 = vmatmul.mubr.bf16.gmra.mrb[0].mxu0 %v6259
        %v6616 = vpop.f32.mrb[0].mxu0
        %v6617 = vadd.f32 %v6456, %v6616
        %v6618 = vpop.f32.mrb[0].mxu0
        %v6619 = vpop.f32.mrb[0].mxu0
        %v6620 = vadd.f32 %v6459, %v6619
        %v6621 = vpop.f32.mrb[0].mxu0
        %6622 = vmatprep.mubr.bf16.mxu0 %v6264
        %6623 = vmatmul.mubr.bf16.gmra.mrb[0].mxu0 %v6263
        %v6624 = vpop.f32.mrb[0].mxu0
        %v6625 = vadd.f32 %v6464, %v6624
        %v6626 = vpop.f32.mrb[0].mxu0
        %v6627 = vpop.f32.mrb[0].mxu0
        %v6628 = vadd.f32 %v6467, %v6627
        %v6629 = vpop.f32.mrb[0].mxu0
        %6630 = vmatprep.mubr.bf16.mxu0 %v6268
        %6631 = vmatmul.mubr.bf16.gmra.mrb[0].mxu0 %v6267
        %v6632 = vpop.f32.mrb[0].mxu0
        %v6633 = vadd.f32 %v6472, %v6632
        %v6634 = vpop.f32.mrb[0].mxu0
        %v6635 = vpop.f32.mrb[0].mxu0
        %v6636 = vadd.f32 %v6475, %v6635
        %v6637 = vpop.f32.mrb[0].mxu0
        %6638 = vmatprep.mubr.bf16.mxu0 %v6272
        %6639 = vmatmul.mubr.bf16.gmra.mrb[0].mxu0 %v6271
        %v6640 = vpop.f32.mrb[0].mxu0
        %v6641 = vadd.f32 %v6480, %v6640
        %v6642 = vpop.f32.mrb[0].mxu0
        %v6643 = vpop.f32.mrb[0].mxu0
        %v6644 = vadd.f32 %v6483, %v6643
        %v6645 = vpop.f32.mrb[0].mxu0
        %6646 = vmatprep.mubr.bf16.mxu0 %v6276
        %6647 = vmatmul.mubr.bf16.gmra.mrb[0].mxu0 %v6275
        %v6648 = vpop.f32.mrb[0].mxu0
        %v6649 = vadd.f32 %v6488, %v6648
        %v6650 = vpop.f32.mrb[0].mxu0
        %v6651 = vpop.f32.mrb[0].mxu0
        %v6652 = vadd.f32 %v6491, %v6651
        %v6653 = vpop.f32.mrb[0].mxu0
        %6654 = vmatprep.mubr.bf16.mxu0 %v6280
        %6655 = vmatmul.mubr.bf16.gmra.mrb[0].mxu0 %v6279
        %v6656 = vpop.f32.mrb[0].mxu0
        %v6657 = vadd.f32 %v6496, %v6656
        %v6658 = vpop.f32.mrb[0].mxu0
        %v6659 = vpop.f32.mrb[0].mxu0
        %v6660 = vadd.f32 %v6499, %v6659
        %v6661 = vpop.f32.mrb[0].mxu0
        %6662 = vmatprep.mubr.bf16.mxu0 %v6284
        %6663 = vmatmul.mubr.bf16.gmra.mrb[0].mxu0 %v6283
        %v6664 = vpop.f32.mrb[0].mxu0
        %v6665 = vadd.f32 %v6504, %v6664
        %v6666 = vpop.f32.mrb[0].mxu0
        %v6667 = vpop.f32.mrb[0].mxu0
        %v6668 = vadd.f32 %v6507, %v6667
        %v6669 = vpop.f32.mrb[0].mxu0
        %6670 = vdwg.mxu0
        %v6671 = vmax.f32 %v6545, 0.0
        %v6672 = vmax.f32 %v6548, 0.0
        %v6673 = vmax.f32 %v6553, 0.0
        %v6674 = vmax.f32 %v6556, 0.0
        %v6675 = vmax.f32 %v6561, 0.0
        %v6676 = vmax.f32 %v6564, 0.0
        %v6677 = vmax.f32 %v6569, 0.0
        %v6678 = vmax.f32 %v6572, 0.0
        %v6679 = vmax.f32 %v6577, 0.0
        %v6680 = vmax.f32 %v6580, 0.0
        %v6681 = vmax.f32 %v6585, 0.0
        %v6682 = vmax.f32 %v6588, 0.0
        %v6683 = vmax.f32 %v6593, 0.0
        %v6684 = vmax.f32 %v6596, 0.0
        %v6685 = vmax.f32 %v6601, 0.0
        %v6686 = vmax.f32 %v6604, 0.0
        %v6687 = vmax.f32 %v6609, 0.0
        %v6688 = vmax.f32 %v6612, 0.0
        %v6689 = vmax.f32 %v6617, 0.0
        %v6690 = vmax.f32 %v6620, 0.0
        %v6691 = vmax.f32 %v6625, 0.0
        %v6692 = vmax.f32 %v6628, 0.0
        %v6693 = vmax.f32 %v6633, 0.0
        %v6694 = vmax.f32 %v6636, 0.0
        %v6695 = vmax.f32 %v6641, 0.0
        %v6696 = vmax.f32 %v6644, 0.0
        %v6697 = vmax.f32 %v6649, 0.0
        %v6698 = vmax.f32 %v6652, 0.0
        %v6699 = vmax.f32 %v6657, 0.0
        %v6700 = vmax.f32 %v6660, 0.0
        %v6701 = vmax.f32 %v6665, 0.0
        %v6702 = vmax.f32 %v6668, 0.0
        %v6703 = vld [vmem:[%s7] sm:$0xff]
        %v6704 = vld [vmem:[%s7 + $0x8] sm:$0xff]
        %v6705 = vld [vmem:[%s7 + $0x10] sm:$0xff]
        %v6706 = vld [vmem:[%s7 + $0x18] sm:$0xff]
        %v6707 = vld [vmem:[%s7 + $0x20] sm:$0xff]
        %v6708 = vld [vmem:[%s7 + $0x28] sm:$0xff]
        %v6709 = vld [vmem:[%s7 + $0x30] sm:$0xff]
        %v6710 = vld [vmem:[%s7 + $0x38] sm:$0xff]
        %v6711 = vpack.c.bf16 %v6672, %v6671
        %v6712 = vpack.c.bf16 %v6674, %v6673
        %v6713 = vpack.c.bf16 %v6676, %v6675
        %v6714 = vpack.c.bf16 %v6678, %v6677
        %v6715 = vpack.c.bf16 %v6680, %v6679
        %v6716 = vpack.c.bf16 %v6682, %v6681
        %v6717 = vpack.c.bf16 %v6684, %v6683
        %v6718 = vpack.c.bf16 %v6686, %v6685
        %v6719 = vpack.c.bf16 %v6688, %v6687
        %v6720 = vpack.c.bf16 %v6690, %v6689
        %v6721 = vpack.c.bf16 %v6692, %v6691
        %v6722 = vpack.c.bf16 %v6694, %v6693
        %v6723 = vpack.c.bf16 %v6696, %v6695
        %v6724 = vpack.c.bf16 %v6698, %v6697
        %v6725 = vpack.c.bf16 %v6700, %v6699
        %v6726 = vpack.c.bf16 %v6702, %v6701
        %v6727 = vld [vmem:[%s8] sm:$0xff]
        %v6728 = vld [vmem:[%s8 + $0x8] sm:$0xff]
        %v6729 = vld [vmem:[%s8 + $0x10] sm:$0xff]
        %v6730 = vld [vmem:[%s8 + $0x18] sm:$0xff]
        %v6731 = vld [vmem:[%s8 + $0x20] sm:$0xff]
        %v6732 = vld [vmem:[%s8 + $0x28] sm:$0xff]
        %v6733 = vld [vmem:[%s8 + $0x30] sm:$0xff]
        %v6734 = vld [vmem:[%s8 + $0x38] sm:$0xff]
        %6736 = vset.pattern.permute.xlu0 0
        %6737 = vperm.xlu0 %6736, %v6727
        %v6738 = vpop.permute.xlu0 %6737
        %6741 = vset.pattern.permute.xlu0 0
        %6742 = vperm.xlu0 %6741, %v6728
        %v6743 = vpop.permute.xlu0 %6742
        %6746 = vset.pattern.permute.xlu0 0
        %6747 = vperm.xlu0 %6746, %v6729
        %v6748 = vpop.permute.xlu0 %6747
        %6751 = vset.pattern.permute.xlu0 0
        %6752 = vperm.xlu0 %6751, %v6730
        %v6753 = vpop.permute.xlu0 %6752
        %6756 = vset.pattern.permute.xlu0 0
        %6757 = vperm.xlu0 %6756, %v6731
        %v6758 = vpop.permute.xlu0 %6757
        %6761 = vset.pattern.permute.xlu0 0
        %6762 = vperm.xlu0 %6761, %v6732
        %v6763 = vpop.permute.xlu0 %6762
        %6766 = vset.pattern.permute.xlu0 0
        %6767 = vperm.xlu0 %6766, %v6733
        %v6768 = vpop.permute.xlu0 %6767
        %6771 = vset.pattern.permute.xlu0 0
        %6772 = vperm.xlu0 %6771, %v6734
        %v6773 = vpop.permute.xlu0 %6772
        %v6783 = vunpack.c.l.b16 %v6703
        %v6784 = vunpack.c.h.b16 %v6703
        %v6785 = vunpack.c.l.b16 %v6704
        %v6786 = vunpack.c.h.b16 %v6704
        %v6787 = vunpack.c.l.b16 %v6705
        %v6788 = vunpack.c.h.b16 %v6705
        %v6789 = vunpack.c.l.b16 %v6706
        %v6790 = vunpack.c.h.b16 %v6706
        %v6791 = vunpack.c.l.b16 %v6707
        %v6792 = vunpack.c.h.b16 %v6707
        %v6793 = vunpack.c.l.b16 %v6708
        %v6794 = vunpack.c.h.b16 %v6708
        %v6795 = vunpack.c.l.b16 %v6709
        %v6796 = vunpack.c.h.b16 %v6709
        %v6797 = vunpack.c.l.b16 %v6710
        %v6798 = vunpack.c.h.b16 %v6710
        %v6799 = vpack.c.b16 %v6785, %v6783
        %v6800 = vpack.c.b16 %v6786, %v6784
        %v6801 = vpack.c.b16 %v6789, %v6787
        %v6802 = vpack.c.b16 %v6790, %v6788
        %v6803 = vpack.c.b16 %v6793, %v6791
        %v6804 = vpack.c.b16 %v6794, %v6792
        %v6805 = vpack.c.b16 %v6797, %v6795
        %v6806 = vpack.c.b16 %v6798, %v6796
        %6815 = vmatprep.subr.bf16.mxu0 0
        %6816 = vmatpush1.bf16.msra.mxu0 %v6711
        %6817 = vmatprep.subr.bf16.mxu0 0
        %6818 = vmatpush1.bf16.msra.mxu0 %v6712
        %6819 = vmatprep.subr.bf16.mxu0 0
        %6820 = vmatpush1.bf16.msra.mxu0 %v6713
        %6821 = vmatprep.subr.bf16.mxu0 0
        %6822 = vmatpush1.bf16.msra.mxu0 %v6714
        %6823 = vmatprep.subr.bf16.mxu0 0
        %6824 = vmatpush1.bf16.msra.mxu0 %v6715
        %6825 = vmatprep.subr.bf16.mxu0 0
        %6826 = vmatpush1.bf16.msra.mxu0 %v6716
        %6827 = vmatprep.subr.bf16.mxu0 0
        %6828 = vmatpush1.bf16.msra.mxu0 %v6717
        %6829 = vmatprep.subr.bf16.mxu0 0
        %6830 = vmatpush1.bf16.msra.mxu0 %v6718
        %6831 = vmatprep.subr.bf16.mxu0 0
        %6832 = vmatpush1.bf16.msra.mxu0 %v6719
        %6833 = vmatprep.subr.bf16.mxu0 0
        %6834 = vmatpush1.bf16.msra.mxu0 %v6720
        %6835 = vmatprep.subr.bf16.mxu0 0
        %6836 = vmatpush1.bf16.msra.mxu0 %v6721
        %6837 = vmatprep.subr.bf16.mxu0 0
        %6838 = vmatpush1.bf16.msra.mxu0 %v6722
        %6839 = vmatprep.subr.bf16.mxu0 0
        %6840 = vmatpush1.bf16.msra.mxu0 %v6723
        %6841 = vmatprep.subr.bf16.mxu0 0
        %6842 = vmatpush1.bf16.msra.mxu0 %v6724
        %6843 = vmatprep.subr.bf16.mxu0 0
        %6844 = vmatpush1.bf16.msra.mxu0 %v6725
        %6845 = vmatprep.subr.bf16.mxu0 0
        %6846 = vmatpush1.bf16.msra.mxu0 %v6726
        %6847 = vmatprep.mubr.bf16.mxu0 %v6800
        %6848 = vmatmul.mubr.bf16.gmra.mrb[0].mxu0 %v6799
        %v6849 = vpop.f32.mrb[0].mxu0
        %v6850 = vadd.f32 %v6738, %v6849
        %v6851 = vpop.f32.mrb[0].mxu0
        %v6852 = vpop.f32.mrb[0].mxu0
        %v6853 = vadd.f32 %v6743, %v6852
        %v6854 = vpop.f32.mrb[0].mxu0
        %6855 = vmatprep.mubr.bf16.mxu0 %v6802
        %6856 = vmatmul.mubr.bf16.gmra.mrb[0].mxu0 %v6801
        %v6857 = vpop.f32.mrb[0].mxu0
        %v6858 = vadd.f32 %v6748, %v6857
        %v6859 = vpop.f32.mrb[0].mxu0
        %v6860 = vpop.f32.mrb[0].mxu0
        %v6861 = vadd.f32 %v6753, %v6860
        %v6862 = vpop.f32.mrb[0].mxu0
        %6863 = vmatprep.mubr.bf16.mxu0 %v6804
        %6864 = vmatmul.mubr.bf16.gmra.mrb[0].mxu0 %v6803
        %v6865 = vpop.f32.mrb[0].mxu0
        %v6866 = vadd.f32 %v6758, %v6865
        %v6867 = vpop.f32.mrb[0].mxu0
        %v6868 = vpop.f32.mrb[0].mxu0
        %v6869 = vadd.f32 %v6763, %v6868
        %v6870 = vpop.f32.mrb[0].mxu0
        %6871 = vmatprep.mubr.bf16.mxu0 %v6806
        %6872 = vmatmul.mubr.bf16.gmra.mrb[0].mxu0 %v6805
        %v6873 = vpop.f32.mrb[0].mxu0
        %v6874 = vadd.f32 %v6768, %v6873
        %v6875 = vpop.f32.mrb[0].mxu0
        %v6876 = vpop.f32.mrb[0].mxu0
        %v6877 = vadd.f32 %v6773, %v6876
        %v6878 = vpop.f32.mrb[0].mxu0
        %6879 = vdwg.mxu0
        %v6880 = vmax.f32 %v6850, 0.0
        %v6881 = vmax.f32 %v6853, 0.0
        %v6882 = vmax.f32 %v6858, 0.0
        %v6883 = vmax.f32 %v6861, 0.0
        %v6884 = vmax.f32 %v6866, 0.0
        %v6885 = vmax.f32 %v6869, 0.0
        %v6886 = vmax.f32 %v6874, 0.0
        %v6887 = vmax.f32 %v6877, 0.0
        %v6888 = vld [vmem:[%s9] sm:$0xf]
        %v6889 = vld [vmem:[%s9 + $0x4] sm:$0xf]
        %v6890 = vld [vmem:[%s9 + $0x8] sm:$0xf]
        %v6891 = vld [vmem:[%s9 + $0xc] sm:$0xf]
        %v6892 = vld [vmem:[%s9 + $0x10] sm:$0xf]
        %v6893 = vld [vmem:[%s9 + $0x14] sm:$0xf]
        %v6894 = vld [vmem:[%s9 + $0x18] sm:$0xf]
        %v6895 = vld [vmem:[%s9 + $0x1c] sm:$0xf]
        %v6896 = vunpack.c.l.bf16 %v6888
        %v6897 = vunpack.c.l.bf16 %v6889
        %v6898 = vunpack.c.l.bf16 %v6890
        %v6899 = vunpack.c.l.bf16 %v6891
        %v6900 = vunpack.c.l.bf16 %v6892
        %v6901 = vunpack.c.l.bf16 %v6893
        %v6902 = vunpack.c.l.bf16 %v6894
        %v6903 = vunpack.c.l.bf16 %v6895
        %6905 = vset.pattern.permute.xlu0 0
        %6906 = vperm.xlu0 %6905, %v6896
        %v6907 = vpop.permute.xlu0 %6906
        %6910 = vset.pattern.permute.xlu0 0
        %6911 = vperm.xlu0 %6910, %v6897
        %v6912 = vpop.permute.xlu0 %6911
        %6915 = vset.pattern.permute.xlu0 0
        %6916 = vperm.xlu0 %6915, %v6898
        %v6917 = vpop.permute.xlu0 %6916
        %6920 = vset.pattern.permute.xlu0 0
        %6921 = vperm.xlu0 %6920, %v6899
        %v6922 = vpop.permute.xlu0 %6921
        %6925 = vset.pattern.permute.xlu0 0
        %6926 = vperm.xlu0 %6925, %v6900
        %v6927 = vpop.permute.xlu0 %6926
        %6930 = vset.pattern.permute.xlu0 0
        %6931 = vperm.xlu0 %6930, %v6901
        %v6932 = vpop.permute.xlu0 %6931
        %6935 = vset.pattern.permute.xlu0 0
        %6936 = vperm.xlu0 %6935, %v6902
        %v6937 = vpop.permute.xlu0 %6936
        %6940 = vset.pattern.permute.xlu0 0
        %6941 = vperm.xlu0 %6940, %v6903
        %v6942 = vpop.permute.xlu0 %6941
        %v6944 = vmul.f32 %v6880, %v6907
        %v6945 = vmul.f32 %v6881, %v6912
        %v6946 = vmul.f32 %v6882, %v6917
        %v6947 = vmul.f32 %v6883, %v6922
        %v6948 = vmul.f32 %v6884, %v6927
        %v6949 = vmul.f32 %v6885, %v6932
        %v6950 = vmul.f32 %v6886, %v6937
        %v6951 = vmul.f32 %v6887, %v6942
        %v6952 = vadd.f32 %v6944, %v6945
        %v6953 = vadd.f32 %v6952, %v6946
        %v6954 = vadd.f32 %v6953, %v6947
        %v6955 = vadd.f32 %v6954, %v6948
        %v6956 = vadd.f32 %v6955, %v6949
        %v6957 = vadd.f32 %v6956, %v6950
        %v6958 = vadd.f32 %v6957, %v6951
        %v6959 = vrot.slane %v6958, 4
        %v6960 = vadd.f32 %v6958, %v6959
        %v6961 = vrot.slane %v6960, 2
        %v6962 = vadd.f32 %v6960, %v6961
        %v6963 = vrot.slane %v6962, 1
        %v6964 = vadd.f32 %v6962, %v6963
        %v6965 = vld [vmem:[#allocation2] sm:$0x1]
        %6967 = vset.pattern.permute.xlu0 0
        %6968 = vperm.xlu0 %6967, %v6965
        %v6969 = vpop.permute.xlu0 %6968
        %v6971 = vlaneseq
        %v6972 = vshrl.u32 %v6971, 7
        %v6973 = vsub.s32 0, %v6972
        %v6974 = vrot.slane %v6969, %v6973
        %v6975 = vadd.f32 %v6964, %v6974
        %6976 = vst [vmem:[%s437] sm:$0x1] %v6975
        %p6977 = scmp.lt.s32.totalorder %s24, 1
        %s6978 = scalar_select %p6977, %s24, 1
        %s6979 = scalar_lea.vmem %s11, %s6978
        // Predicated region
        $region106: #{ann_forward.1} parent=100 // pred_check
          %p6980 = pneg %p278
        $region107: #{ann_forward.1} parent=100 // pred_check_branch
          %6982 = sbr.rel (%p6980) target = $region109
        $region108: #{ann_forward.1} parent=100 // pred_region
          _
        $region109: #{ann_forward.1} parent=100 // pred_fallthru
          _
      $region101: #{ann_forward.1} parent=5 // pred_fallthru
        _
      %p6983 = scmp.le.s32.totalorder 2, %s19
      // Predicated region
      $region110: #{ann_forward.1} parent=5 // pred_check
        %p6984 = pneg %p6983
      $region111: #{ann_forward.1} parent=5 // pred_check_branch
        %6986 = sbr.rel (%p6984) target = $region113
      $region112: #{ann_forward.1} parent=5 // pred_region
        %s6987 = ssub.s32 %s19, 2
        // Predicated region
        $region114: #{ann_forward.1} parent=112 // pred_check
          %p6988 = pneg %p284
        $region115: #{ann_forward.1} parent=112 // pred_check_branch
          %6990 = sbr.rel (%p6988) target = $region117
        $region116: #{ann_forward.1} parent=112 // pred_region
          %p6991 = scmp.lt.s32.totalorder %s25, 1
          %s6992 = scalar_select %p6991, %s25, 1
          %s6993 = scalar_lea.vmem %s11, %s6992
        $region117: #{ann_forward.1} parent=112 // pred_fallthru
          _
      $region113: #{ann_forward.1} parent=5 // pred_fallthru
        _
    $region6: #{ann_forward.1} parent=1 // loop_footer
      %s23 = sadd.s32 1, %s19
    $region7: #{ann_forward.1} parent=1 // loop_footer_branch
      %18 = sbr.rel target = $region3
    $region8: #{ann_forward.1} parent=1 // loop_exit
      _

</llo_original>
